<compile_context>
chip_gen: v6e
topology: v6e:2x2x1
jax: 0.10.0
libtpu: 0.0.40
codegen_flags: <defaults>
</compile_context>

<pallas_src>
import math

import jax
import jax.numpy as jnp
import numpy as np
from jax.experimental import pallas as pl
from jax.experimental.pallas import tpu as pltpu

# ---------------- config (mirrors the PyTorch config object) ----------------
VOCAB_SIZE = 32
BLOCK_SIZE = 8          # max sequence length (power of two -> bit tricks in-kernel)
N_EMBD = 32
N_HEAD = 4
N_LAYER = 2
MLP_RATIO = 4
BIAS = True
DROPOUT = 0.0

EPS = 1e-5
NEG_INF = -1e30         # additive stand-in for masked_fill(-inf); same softmax result
                        # whenever a row has >=1 unmasked key.
WPE_ROWS = 16           # sinusoid table (BLOCK_SIZE+1 = 9 rows) zero-padded to 16
WIDE_LANES = MLP_RATIO * N_EMBD     # 128
OUT_W = 128             # lane-dense output slab width: [logits(32) | att(8) | zeros(88)]


# --------------------- packed-parameter slab layout --------------------------
def _round_up(n, m=8):
    return ((n + m - 1) // m) * m


def _build_layouts():
    narrow, wide = {}, {}
    off = 0

    def addn(name, rows):
        nonlocal off
        narrow[name] = (off, rows)
        off += _round_up(rows)

    addn("emb", VOCAB_SIZE + WPE_ROWS)                 # [wte ; wpe]
    for l in range(N_LAYER):
        addn(f"ln1_w_{l}", 1); addn(f"ln1_b_{l}", 1)
        addn(f"w_ao_{l}", N_EMBD); addn(f"b_ao_{l}", 1)
        addn(f"ln2_w_{l}", 1); addn(f"ln2_b_{l}", 1)
        addn(f"w_fp_{l}", MLP_RATIO * N_EMBD); addn(f"b_fp_{l}", 1)
    addn("lnf_w", 1); addn("lnf_b", 1); addn("w_lm", N_EMBD)
    narrow_rows = off

    off = 0

    def addw(name, rows):
        nonlocal off
        wide[name] = (off, rows)
        off += _round_up(rows)

    for l in range(N_LAYER):
        addw(f"w_qkv_{l}", N_EMBD); addw(f"b_qkv_{l}", 1)
        addw(f"w_fc_{l}", N_EMBD); addw(f"b_fc_{l}", 1)
    wide_rows = off
    return narrow, narrow_rows, wide, wide_rows


NARROW, NARROW_ROWS, WIDE, WIDE_ROWS = _build_layouts()    # (512 x 32) and (160 x 128)


def _n(ref, name):
    off, rows = NARROW[name]
    return ref[off:off + rows, :]


def _w(ref, name):
    off, rows = WIDE[name]
    return ref[off:off + rows, :]


# ---------------------------- kernel helpers --------------------------------
def _layer_norm(v, w, b):
    mu = jnp.mean(v, axis=-1, keepdims=True)
    var = jnp.mean((v - mu) ** 2, axis=-1, keepdims=True)
    return (v - mu) * jax.lax.rsqrt(var + EPS) * w + b


def _softmax_last(x):
    x = x - jnp.max(x, axis=-1, keepdims=True)
    e = jnp.exp(x)
    return e / jnp.sum(e, axis=-1, keepdims=True)      # exact division (parity)


# ------------------------- fused forward kernel -----------------------------
def fused_forward_kernel(ids_ref, nslab_ref, wslab_ref, out_ref):
    BT = ids_ref.shape[0]
    T = BLOCK_SIZE
    B = BT // T
    C = N_EMBD
    H = N_HEAD
    hd = C // H
    V = VOCAB_SIZE
    K_EMB = V + WPE_ROWS
    scale = 1.0 / math.sqrt(hd)

    ids = ids_ref[...]                                           # (BT, 1) int32

    # ---- positions + fused token/position embedding (single K=48 matmul) ----
    row = jax.lax.broadcasted_iota(jnp.int32, (BT, 1), 0)
    t_idx = jnp.bitwise_and(row, T - 1)                          # position within sequence
    pos = jnp.where(ids == 0, 0, t_idx + 1)                      # (BT, 1)
    col = jax.lax.broadcasted_iota(jnp.int32, (BT, K_EMB), 1)
    emb_oh = jnp.logical_or(col == ids, col == pos + V).astype(jnp.float32)
    x = jnp.dot(emb_oh, _n(nslab_ref, "emb"),
                preferred_element_type=jnp.float32)              # (BT, C)

    # ---- additive attention bias (causal | key padding), built in-kernel ----
    kk = jax.lax.broadcasted_iota(jnp.int32, (BT, T), 1)         # key index within sequence
    rr = jax.lax.broadcasted_iota(jnp.int32, (BT, T), 0)         # flat row / flat key index
    causal2d = kk > jnp.bitwise_and(rr, T - 1)                   # (BT, T)
    # pad2d[r, k] = 1 iff key-token k of row r's sequence is padding (one tiny 0/1 matmul,
    # avoids any reshape/transpose of the id column).
    cr = jax.lax.broadcasted_iota(jnp.int32, (BT, BT), 0)
    cc = jax.lax.broadcasted_iota(jnp.int32, (BT, BT), 1)
    same_seq = ((cr - jnp.bitwise_and(cr, T - 1)) ==
                (cc - jnp.bitwise_and(cc, T - 1))).astype(jnp.float32)   # (BT, BT)
    mod_sel = (jnp.bitwise_and(rr, T - 1) == kk).astype(jnp.float32)     # (BT, T)
    pad_f = (ids == 0).astype(jnp.float32)                       # (BT, 1)
    pad2d = jnp.dot(same_seq, mod_sel * pad_f,
                    preferred_element_type=jnp.float32)          # (BT, T)
    bias3 = jnp.where(jnp.logical_or(pad2d > 0.5, causal2d),
                      NEG_INF, 0.0).reshape(B, T, T)             # (B, T, T)

    att_last = None
    for l in range(N_LAYER):                                     # static unroll over layers
        # ---------------- ln_1 + masked multi-head self-attention ----------
        ln1 = _layer_norm(x, _n(nslab_ref, f"ln1_w_{l}"), _n(nslab_ref, f"ln1_b_{l}"))
        qkv = (jnp.dot(ln1, _w(wslab_ref, f"w_qkv_{l}"),
                       preferred_element_type=jnp.float32)
               + _w(wslab_ref, f"b_qkv_{l}"))                    # (BT, 128); lanes 96:128 = 0
        q = qkv[:, 0:C].reshape(B, T, C)
        k = qkv[:, C:2 * C].reshape(B, T, C)
        v = qkv[:, 2 * C:3 * C].reshape(B, T, C)

        head_outs = []
        for h in range(H):                                       # static head unroll (tiny)
            lo = h * hd
            qh = q[:, :, lo:lo + hd]
            kh = k[:, :, lo:lo + hd]
            vh = v[:, :, lo:lo + hd]
            s = jnp.einsum('bqd,bkd->bqk', qh, kh,
                           preferred_element_type=jnp.float32) * scale + bias3
            p = _softmax_last(s)                                 # (B, T, T)
            if l == N_LAYER - 1 and h == 0:
                att_last = p                                     # att[:, :1, :, :] of reference
            head_outs.append(jnp.einsum('bqk,bkd->bqd', p, vh,
                                        preferred_element_type=jnp.float32))
        y = jnp.concatenate(head_outs, axis=-1).reshape(BT, C)   # (BT, C)
        x = x + (jnp.dot(y, _n(nslab_ref, f"w_ao_{l}"),
                         preferred_element_type=jnp.float32)
                 + _n(nslab_ref, f"b_ao_{l}"))                   # residual 1

        # ---------------- ln_2 + MLP (exact erf GELU) ----------------------
        ln2 = _layer_norm(x, _n(nslab_ref, f"ln2_w_{l}"), _n(nslab_ref, f"ln2_b_{l}"))
        h1 = (jnp.dot(ln2, _w(wslab_ref, f"w_fc_{l}"),
                      preferred_element_type=jnp.float32)
              + _w(wslab_ref, f"b_fc_{l}"))                      # (BT, 128)
        h1 = 0.5 * h1 * (1.0 + jax.lax.erf(h1 * (1.0 / math.sqrt(2.0))))
        h2 = (jnp.dot(h1, _n(nslab_ref, f"w_fp_{l}"),
                      preferred_element_type=jnp.float32)
              + _n(nslab_ref, f"b_fp_{l}"))
        x = x + h2                                               # residual 2

    # ---------------- final LayerNorm + lm_head, lane-dense packed output ---
    lnf = _layer_norm(x, _n(nslab_ref, "lnf_w"), _n(nslab_ref, "lnf_b"))
    logits = jnp.dot(lnf, _n(nslab_ref, "w_lm"),
                     preferred_element_type=jnp.float32)         # (BT, V)
    att2d = att_last.reshape(BT, T)                              # (BT, T)
    filler = jnp.zeros((BT, OUT_W - V - T), jnp.float32)
    out_ref[...] = jnp.concatenate([logits, att2d, filler], axis=-1)


# ------------------------------ wrapper --------------------------------------
def transformer_decoder_forward(packed, in_data):
    """Mirrors TransformerDecoder.forward(in_data, targets=None)."""
    B, T = in_data.shape
    assert T == BLOCK_SIZE and (T & (T - 1)) == 0

    ids_flat = in_data.reshape(B * T, 1).astype(jnp.int32)       # only non-weight input

    def _spec(a):
        return pl.BlockSpec(a.shape, lambda i: (0, 0))

    out = pl.pallas_call(
        fused_forward_kernel,
        grid=(1,),                                               # whole batch in one step
        in_specs=[_spec(ids_flat), _spec(packed["slab_n"]), _spec(packed["slab_w"])],
        out_specs=pl.BlockSpec((B * T, OUT_W), lambda i: (0, 0)),
        out_shape=jax.ShapeDtypeStruct((B * T, OUT_W), jnp.float32),
        compiler_params=pltpu.CompilerParams(dimension_semantics=("arbitrary",)),
    )(ids_flat, packed["slab_n"], packed["slab_w"])

    logits = out[:, :VOCAB_SIZE].reshape(B, T, VOCAB_SIZE)
    att_weights = out[:, VOCAB_SIZE:VOCAB_SIZE + T].reshape(B, T, T)[:, None, :, :]
    loss = None                                                  # targets=None path
    return loss, att_weights, logits


# ---------------------------- parameter init ---------------------------------
def sinusoid_table(seq_len, n_embd):
    pos = np.arange(seq_len)[:, None].astype(np.float64)
    i = np.arange(n_embd)[None, :]
    angle = pos / np.power(10000.0, 2 * (i // 2) / n_embd)
    tbl = np.where(i % 2 == 0, np.sin(angle), np.cos(angle))
    return jnp.asarray(tbl, dtype=jnp.float32)


def init_params(key):
    keys = jax.random.split(key, N_LAYER + 2)

    def lin(k, fan_in, fan_out):
        kw, kb = jax.random.split(k)
        w = jax.random.normal(kw, (fan_in, fan_out), jnp.float32) * 0.02
        b = jax.random.normal(kb, (1, fan_out), jnp.float32) * 0.02
        return w, b

    wte = jax.random.normal(keys[0], (VOCAB_SIZE, N_EMBD), jnp.float32) * 0.02
    wpe = sinusoid_table(BLOCK_SIZE + 1, N_EMBD)
    wpe = jnp.concatenate(
        [wpe, jnp.zeros((WPE_ROWS - (BLOCK_SIZE + 1), N_EMBD), jnp.float32)], axis=0)

    names = ["ln1_w", "ln1_b", "w_qkv", "b_qkv", "w_ao", "b_ao",
             "ln2_w", "ln2_b", "w_fc", "b_fc", "w_fp", "b_fp"]
    stash = {n: [] for n in names}
    for l in range(N_LAYER):
        k = jax.random.split(keys[2 + l], 4)
        w_qkv, b_qkv = lin(k[0], N_EMBD, 3 * N_EMBD)
        w_ao, b_ao = lin(k[1], N_EMBD, N_EMBD)
        w_fc, b_fc = lin(k[2], N_EMBD, MLP_RATIO * N_EMBD)
        w_fp, b_fp = lin(k[3], MLP_RATIO * N_EMBD, N_EMBD)
        vals = dict(ln1_w=jnp.ones((1, N_EMBD), jnp.float32),
                    ln1_b=jnp.zeros((1, N_EMBD), jnp.float32),
                    w_qkv=w_qkv, b_qkv=b_qkv, w_ao=w_ao, b_ao=b_ao,
                    ln2_w=jnp.ones((1, N_EMBD), jnp.float32),
                    ln2_b=jnp.zeros((1, N_EMBD), jnp.float32),
                    w_fc=w_fc, b_fc=b_fc, w_fp=w_fp, b_fp=b_fp)
        for n in names:
            stash[n].append(vals[n])

    params = {n: jnp.stack(v, axis=0) for n, v in stash.items()}   # (N_LAYER, ...)
    params.update(dict(
        wte=wte, wpe=wpe,
        lnf_w=jnp.ones((1, N_EMBD), jnp.float32),
        lnf_b=jnp.zeros((1, N_EMBD), jnp.float32),
        w_lm=jax.random.normal(keys[1], (N_EMBD, VOCAB_SIZE), jnp.float32) * 0.02))
    return params


def pack_params(params):
    """One-time host-side packing of all parameters into two contiguous DMA slabs."""
    narrow = np.zeros((NARROW_ROWS, N_EMBD), np.float32)
    wide = np.zeros((WIDE_ROWS, WIDE_LANES), np.float32)

    def put_n(name, arr):
        off, rows = NARROW[name]
        narrow[off:off + rows, :] = np.asarray(arr, np.float32).reshape(rows, N_EMBD)

    def put_w(name, arr):
        off, rows = WIDE[name]
        a = np.asarray(arr, np.float32).reshape(rows, -1)
        wide[off:off + rows, :a.shape[1]] = a          # lane-pad w_qkv/b_qkv (96) to 128

    put_n("emb", np.concatenate([np.asarray(params["wte"]),
                                 np.asarray(params["wpe"])], axis=0))
    for l in range(N_LAYER):
        put_n(f"ln1_w_{l}", params["ln1_w"][l]); put_n(f"ln1_b_{l}", params["ln1_b"][l])
        put_n(f"w_ao_{l}", params["w_ao"][l]);   put_n(f"b_ao_{l}", params["b_ao"][l])
        put_n(f"ln2_w_{l}", params["ln2_w"][l]); put_n(f"ln2_b_{l}", params["ln2_b"][l])
        put_n(f"w_fp_{l}", params["w_fp"][l]);   put_n(f"b_fp_{l}", params["b_fp"][l])
        put_w(f"w_qkv_{l}", params["w_qkv"][l]); put_w(f"b_qkv_{l}", params["b_qkv"][l])
        put_w(f"w_fc_{l}", params["w_fc"][l]);   put_w(f"b_fc_{l}", params["b_fc"][l])
    put_n("lnf_w", params["lnf_w"]); put_n("lnf_b", params["lnf_b"])
    put_n("w_lm", params["w_lm"])

    return {"slab_n": jnp.asarray(narrow), "slab_w": jnp.asarray(wide)}


# --------------------------------- main ---------------------------------------
if __name__ == "__main__":
    key = jax.random.PRNGKey(0)
    pkey, dkey = jax.random.split(key)
    params = init_params(pkey)
    packed = pack_params(params)

    B, T = 2, BLOCK_SIZE
    in_data = jax.random.randint(dkey, (B, T), 1, VOCAB_SIZE, dtype=jnp.int32)
    in_data = in_data.at[1, T - 2:].set(0)   # padding tokens at tail of sequence 1

    fwd = jax.jit(transformer_decoder_forward)
    loss, att_weights, logits = fwd(packed, in_data)
    jax.block_until_ready((att_weights, logits))

    assert att_weights.shape == (B, 1, T, T)
    assert logits.shape == (B, T, VOCAB_SIZE)
    assert bool(jnp.all(jnp.isfinite(att_weights)))
    assert bool(jnp.all(jnp.isfinite(logits)))
    assert bool(jnp.all(jnp.abs(jnp.sum(att_weights, axis=-1) - 1.0) < 1e-3))
    print("KERNEL_OK")
</pallas_src>

<mosaic_0001>
module attributes {stable_mosaic.version = 11 : i64} {
  func.func @fused_forward_kernel(%arg0: i32, %arg1: memref<16x1xi32, #tpu.memory_space<vmem>>, %arg2: memref<512x32xf32, #tpu.memory_space<vmem>>, %arg3: memref<160x128xf32, #tpu.memory_space<vmem>>, %arg4: memref<16x128xf32, #tpu.memory_space<vmem>>) attributes {dimension_semantics = [#tpu.dimension_semantics<arbitrary>], iteration_bounds = array<i64: 1>, scalar_prefetch = 0 : i64, scratch_operands = 0 : i64, tpu.core_type = #tpu.core_type<tc>, window_params = [{pipeline_mode = #tpu.pipeline_mode<synchronous>, transform_indices = @transform_0, window_bounds = array<i64: 16, 1>}, {pipeline_mode = #tpu.pipeline_mode<synchronous>, transform_indices = @transform_1, window_bounds = array<i64: 512, 32>}, {pipeline_mode = #tpu.pipeline_mode<synchronous>, transform_indices = @transform_2, window_bounds = array<i64: 160, 128>}, {pipeline_mode = #tpu.pipeline_mode<synchronous>, transform_indices = @transform_3, window_bounds = array<i64: 16, 128>}]} {
    %c0 = arith.constant 0 : index
    %c0_0 = arith.constant 0 : index
    %0 = vector.load %arg1[%c0, %c0_0] : memref<16x1xi32, #tpu.memory_space<vmem>>, vector<16x1xi32>
    %1 = tpu.iota {dimensions = array<i32: 0>} : vector<16x1xi32>
    %c7_i32 = arith.constant 7 : i32
    %2 = vector.broadcast %c7_i32 : i32 to vector<16x1xi32>
    %3 = arith.andi %1, %2 : vector<16x1xi32>
    %c0_i32 = arith.constant 0 : i32
    %4 = vector.broadcast %c0_i32 : i32 to vector<16x1xi32>
    %5 = arith.cmpi eq, %0, %4 : vector<16x1xi32>
    %c1_i32 = arith.constant 1 : i32
    %6 = vector.broadcast %c1_i32 : i32 to vector<16x1xi32>
    %7 = arith.addi %3, %6 : vector<16x1xi32>
    %c0_i32_1 = arith.constant 0 : i32
    %8 = vector.broadcast %c0_i32_1 : i32 to vector<16x1xi32>
    %9 = arith.select %5, %8, %7 : vector<16x1xi1>, vector<16x1xi32>
    %10 = tpu.iota {dimensions = array<i32: 1>} : vector<16x48xi32>
    %11 = vector.broadcast %0 : vector<16x1xi32> to vector<16x48xi32>
    %12 = arith.cmpi eq, %10, %11 : vector<16x48xi32>
    %c32_i32 = arith.constant 32 : i32
    %13 = vector.broadcast %c32_i32 : i32 to vector<16x1xi32>
    %14 = arith.addi %9, %13 : vector<16x1xi32>
    %15 = vector.broadcast %14 : vector<16x1xi32> to vector<16x48xi32>
    %16 = arith.cmpi eq, %10, %15 : vector<16x48xi32>
    %17 = arith.ori %12, %16 : vector<16x48xi1>
    %18 = arith.extui %17 : vector<16x48xi1> to vector<16x48xi32>
    %19 = arith.sitofp %18 : vector<16x48xi32> to vector<16x48xf32>
    %c0_2 = arith.constant 0 : index
    %c0_3 = arith.constant 0 : index
    %20 = vector.load %arg2[%c0_2, %c0_3] : memref<512x32xf32, #tpu.memory_space<vmem>>, vector<48x32xf32>
    %cst = arith.constant dense<0.000000e+00> : vector<16x32xf32>
    %21 = tpu.matmul %19, %20, %cst {dimension_numbers = #tpu.dot_dimension_numbers<[1], [0], [0], [1], [0, 0, 1, 1], [], []>} : vector<16x48xf32>, vector<48x32xf32>, vector<16x32xf32> -> vector<16x32xf32>
    %22 = tpu.iota {dimensions = array<i32: 1>} : vector<16x8xi32>
    %23 = tpu.iota {dimensions = array<i32: 0>} : vector<16x8xi32>
    %c7_i32_4 = arith.constant 7 : i32
    %24 = vector.broadcast %c7_i32_4 : i32 to vector<16x8xi32>
    %25 = arith.andi %23, %24 : vector<16x8xi32>
    %26 = arith.cmpi sgt, %22, %25 : vector<16x8xi32>
    %27 = tpu.iota {dimensions = array<i32: 0>} : vector<16x16xi32>
    %28 = tpu.iota {dimensions = array<i32: 1>} : vector<16x16xi32>
    %c7_i32_5 = arith.constant 7 : i32
    %29 = vector.broadcast %c7_i32_5 : i32 to vector<16x16xi32>
    %30 = arith.andi %27, %29 : vector<16x16xi32>
    %31 = arith.subi %27, %30 : vector<16x16xi32>
    %c7_i32_6 = arith.constant 7 : i32
    %32 = vector.broadcast %c7_i32_6 : i32 to vector<16x16xi32>
    %33 = arith.andi %28, %32 : vector<16x16xi32>
    %34 = arith.subi %28, %33 : vector<16x16xi32>
    %35 = arith.cmpi eq, %31, %34 : vector<16x16xi32>
    %36 = arith.extui %35 : vector<16x16xi1> to vector<16x16xi32>
    %37 = arith.sitofp %36 : vector<16x16xi32> to vector<16x16xf32>
    %c7_i32_7 = arith.constant 7 : i32
    %38 = vector.broadcast %c7_i32_7 : i32 to vector<16x8xi32>
    %39 = arith.andi %23, %38 : vector<16x8xi32>
    %40 = arith.cmpi eq, %39, %22 : vector<16x8xi32>
    %41 = arith.extui %40 : vector<16x8xi1> to vector<16x8xi32>
    %42 = arith.sitofp %41 : vector<16x8xi32> to vector<16x8xf32>
    %c0_i32_8 = arith.constant 0 : i32
    %43 = vector.broadcast %c0_i32_8 : i32 to vector<16x1xi32>
    %44 = arith.cmpi eq, %0, %43 : vector<16x1xi32>
    %45 = arith.extui %44 : vector<16x1xi1> to vector<16x1xi32>
    %46 = arith.sitofp %45 : vector<16x1xi32> to vector<16x1xf32>
    %47 = vector.broadcast %46 : vector<16x1xf32> to vector<16x8xf32>
    %48 = arith.mulf %42, %47 : vector<16x8xf32>
    %cst_9 = arith.constant dense<0.000000e+00> : vector<16x8xf32>
    %49 = tpu.matmul %37, %48, %cst_9 {dimension_numbers = #tpu.dot_dimension_numbers<[1], [0], [0], [1], [0, 0, 1, 1], [], []>} : vector<16x16xf32>, vector<16x8xf32>, vector<16x8xf32> -> vector<16x8xf32>
    %cst_10 = arith.constant 5.000000e-01 : f32
    %50 = vector.broadcast %cst_10 : f32 to vector<16x8xf32>
    %51 = arith.cmpf ogt, %49, %50 : vector<16x8xf32>
    %52 = arith.ori %51, %26 : vector<16x8xi1>
    %cst_11 = arith.constant -1.000000e+30 : f32
    %cst_12 = arith.constant 0.000000e+00 : f32
    %53 = vector.broadcast %cst_11 : f32 to vector<16x8xf32>
    %54 = vector.broadcast %cst_12 : f32 to vector<16x8xf32>
    %55 = arith.select %52, %53, %54 : vector<16x8xi1>, vector<16x8xf32>
    %56 = vector.shape_cast %55 : vector<16x8xf32> to vector<2x8x8xf32>
    %c48 = arith.constant 48 : index
    %c0_13 = arith.constant 0 : index
    %57 = vector.load %arg2[%c48, %c0_13] : memref<512x32xf32, #tpu.memory_space<vmem>>, vector<1x32xf32>
    %c56 = arith.constant 56 : index
    %c0_14 = arith.constant 0 : index
    %58 = vector.load %arg2[%c56, %c0_14] : memref<512x32xf32, #tpu.memory_space<vmem>>, vector<1x32xf32>
    %cst_15 = arith.constant dense<0.000000e+00> : vector<16xf32>
    %59 = vector.multi_reduction <add>, %21, %cst_15 [1] : vector<16x32xf32> to vector<16xf32>
    %60 = vector.shape_cast %59 : vector<16xf32> to vector<16x1xf32>
    %cst_16 = arith.constant 3.200000e+01 : f32
    %61 = vector.broadcast %cst_16 : f32 to vector<16x1xf32>
    %62 = arith.divf %60, %61 : vector<16x1xf32>
    %63 = vector.broadcast %62 : vector<16x1xf32> to vector<16x32xf32>
    %64 = arith.subf %21, %63 : vector<16x32xf32>
    %65 = arith.mulf %64, %64 : vector<16x32xf32>
    %cst_17 = arith.constant dense<0.000000e+00> : vector<16xf32>
    %66 = vector.multi_reduction <add>, %65, %cst_17 [1] : vector<16x32xf32> to vector<16xf32>
    %67 = vector.shape_cast %66 : vector<16xf32> to vector<16x1xf32>
    %cst_18 = arith.constant 3.200000e+01 : f32
    %68 = vector.broadcast %cst_18 : f32 to vector<16x1xf32>
    %69 = arith.divf %67, %68 : vector<16x1xf32>
    %70 = vector.broadcast %62 : vector<16x1xf32> to vector<16x32xf32>
    %71 = arith.subf %21, %70 : vector<16x32xf32>
    %cst_19 = arith.constant 9.99999974E-6 : f32
    %72 = vector.broadcast %cst_19 : f32 to vector<16x1xf32>
    %73 = arith.addf %69, %72 : vector<16x1xf32>
    %74 = math.rsqrt %73 : vector<16x1xf32>
    %75 = vector.broadcast %74 : vector<16x1xf32> to vector<16x32xf32>
    %76 = arith.mulf %71, %75 : vector<16x32xf32>
    %77 = vector.broadcast %57 : vector<1x32xf32> to vector<16x32xf32>
    %78 = arith.mulf %76, %77 : vector<16x32xf32>
    %79 = vector.broadcast %58 : vector<1x32xf32> to vector<16x32xf32>
    %80 = arith.addf %78, %79 : vector<16x32xf32>
    %c0_20 = arith.constant 0 : index
    %c0_21 = arith.constant 0 : index
    %81 = vector.load %arg3[%c0_20, %c0_21] : memref<160x128xf32, #tpu.memory_space<vmem>>, vector<32x128xf32>
    %cst_22 = arith.constant dense<0.000000e+00> : vector<16x128xf32>
    %82 = tpu.matmul %80, %81, %cst_22 {dimension_numbers = #tpu.dot_dimension_numbers<[1], [0], [0], [1], [0, 0, 1, 1], [], []>} : vector<16x32xf32>, vector<32x128xf32>, vector<16x128xf32> -> vector<16x128xf32>
    %c32 = arith.constant 32 : index
    %c0_23 = arith.constant 0 : index
    %83 = vector.load %arg3[%c32, %c0_23] : memref<160x128xf32, #tpu.memory_space<vmem>>, vector<1x128xf32>
    %84 = vector.broadcast %83 : vector<1x128xf32> to vector<16x128xf32>
    %85 = arith.addf %82, %84 : vector<16x128xf32>
    %86 = vector.extract_strided_slice %85 {offsets = [0, 0], sizes = [16, 32], strides = [1, 1]} : vector<16x128xf32> to vector<16x32xf32>
    %87 = vector.shape_cast %86 : vector<16x32xf32> to vector<2x8x32xf32>
    %88 = vector.extract_strided_slice %85 {offsets = [0, 32], sizes = [16, 32], strides = [1, 1]} : vector<16x128xf32> to vector<16x32xf32>
    %89 = vector.shape_cast %88 : vector<16x32xf32> to vector<2x8x32xf32>
    %90 = vector.extract_strided_slice %85 {offsets = [0, 64], sizes = [16, 32], strides = [1, 1]} : vector<16x128xf32> to vector<16x32xf32>
    %91 = vector.shape_cast %90 : vector<16x32xf32> to vector<2x8x32xf32>
    %92 = vector.extract_strided_slice %87 {offsets = [0, 0, 0], sizes = [2, 8, 8], strides = [1, 1, 1]} : vector<2x8x32xf32> to vector<2x8x8xf32>
    %93 = vector.extract_strided_slice %89 {offsets = [0, 0, 0], sizes = [2, 8, 8], strides = [1, 1, 1]} : vector<2x8x32xf32> to vector<2x8x8xf32>
    %94 = vector.extract_strided_slice %91 {offsets = [0, 0, 0], sizes = [2, 8, 8], strides = [1, 1, 1]} : vector<2x8x32xf32> to vector<2x8x8xf32>
    "tpu.trace_start"() <{level = 10 : i32, message = "bqd,bkd->bqk"}> : () -> ()
    %cst_24 = arith.constant dense<0.000000e+00> : vector<2x8x8xf32>
    %95 = tpu.matmul %92, %93, %cst_24 {dimension_numbers = #tpu.dot_dimension_numbers<[2], [2], [1], [1], [0, 0, 0, 1, 1, 1], [0], [0]>} : vector<2x8x8xf32>, vector<2x8x8xf32>, vector<2x8x8xf32> -> vector<2x8x8xf32>
    "tpu.trace_stop"() : () -> ()
    %cst_25 = arith.constant 0.353553385 : f32
    %96 = vector.broadcast %cst_25 : f32 to vector<2x8x8xf32>
    %97 = arith.mulf %95, %96 : vector<2x8x8xf32>
    %98 = arith.addf %97, %56 : vector<2x8x8xf32>
    %cst_26 = arith.constant dense<0xFF800000> : vector<2x8xf32>
    %99 = vector.multi_reduction <maximumf>, %98, %cst_26 [2] : vector<2x8x8xf32> to vector<2x8xf32>
    %100 = vector.shape_cast %99 : vector<2x8xf32> to vector<2x8x1xf32>
    %101 = vector.broadcast %100 : vector<2x8x1xf32> to vector<2x8x8xf32>
    %102 = arith.subf %98, %101 : vector<2x8x8xf32>
    %103 = math.exp %102 : vector<2x8x8xf32>
    %cst_27 = arith.constant dense<0.000000e+00> : vector<2x8xf32>
    %104 = vector.multi_reduction <add>, %103, %cst_27 [2] : vector<2x8x8xf32> to vector<2x8xf32>
    %105 = vector.shape_cast %104 : vector<2x8xf32> to vector<2x8x1xf32>
    %106 = vector.broadcast %105 : vector<2x8x1xf32> to vector<2x8x8xf32>
    %107 = arith.divf %103, %106 : vector<2x8x8xf32>
    "tpu.trace_start"() <{level = 10 : i32, message = "bqk,bkd->bqd"}> : () -> ()
    %cst_28 = arith.constant dense<0.000000e+00> : vector<2x8x8xf32>
    %108 = tpu.matmul %107, %94, %cst_28 {dimension_numbers = #tpu.dot_dimension_numbers<[2], [1], [1], [2], [0, 0, 0, 1, 1, 2], [0], [0]>} : vector<2x8x8xf32>, vector<2x8x8xf32>, vector<2x8x8xf32> -> vector<2x8x8xf32>
    "tpu.trace_stop"() : () -> ()
    %109 = vector.extract_strided_slice %87 {offsets = [0, 0, 8], sizes = [2, 8, 8], strides = [1, 1, 1]} : vector<2x8x32xf32> to vector<2x8x8xf32>
    %110 = vector.extract_strided_slice %89 {offsets = [0, 0, 8], sizes = [2, 8, 8], strides = [1, 1, 1]} : vector<2x8x32xf32> to vector<2x8x8xf32>
    %111 = vector.extract_strided_slice %91 {offsets = [0, 0, 8], sizes = [2, 8, 8], strides = [1, 1, 1]} : vector<2x8x32xf32> to vector<2x8x8xf32>
    "tpu.trace_start"() <{level = 10 : i32, message = "bqd,bkd->bqk"}> : () -> ()
    %cst_29 = arith.constant dense<0.000000e+00> : vector<2x8x8xf32>
    %112 = tpu.matmul %109, %110, %cst_29 {dimension_numbers = #tpu.dot_dimension_numbers<[2], [2], [1], [1], [0, 0, 0, 1, 1, 1], [0], [0]>} : vector<2x8x8xf32>, vector<2x8x8xf32>, vector<2x8x8xf32> -> vector<2x8x8xf32>
    "tpu.trace_stop"() : () -> ()
    %cst_30 = arith.constant 0.353553385 : f32
    %113 = vector.broadcast %cst_30 : f32 to vector<2x8x8xf32>
    %114 = arith.mulf %112, %113 : vector<2x8x8xf32>
    %115 = arith.addf %114, %56 : vector<2x8x8xf32>
    %cst_31 = arith.constant dense<0xFF800000> : vector<2x8xf32>
    %116 = vector.multi_reduction <maximumf>, %115, %cst_31 [2] : vector<2x8x8xf32> to vector<2x8xf32>
    %117 = vector.shape_cast %116 : vector<2x8xf32> to vector<2x8x1xf32>
    %118 = vector.broadcast %117 : vector<2x8x1xf32> to vector<2x8x8xf32>
    %119 = arith.subf %115, %118 : vector<2x8x8xf32>
    %120 = math.exp %119 : vector<2x8x8xf32>
    %cst_32 = arith.constant dense<0.000000e+00> : vector<2x8xf32>
    %121 = vector.multi_reduction <add>, %120, %cst_32 [2] : vector<2x8x8xf32> to vector<2x8xf32>
    %122 = vector.shape_cast %121 : vector<2x8xf32> to vector<2x8x1xf32>
    %123 = vector.broadcast %122 : vector<2x8x1xf32> to vector<2x8x8xf32>
    %124 = arith.divf %120, %123 : vector<2x8x8xf32>
    "tpu.trace_start"() <{level = 10 : i32, message = "bqk,bkd->bqd"}> : () -> ()
    %cst_33 = arith.constant dense<0.000000e+00> : vector<2x8x8xf32>
    %125 = tpu.matmul %124, %111, %cst_33 {dimension_numbers = #tpu.dot_dimension_numbers<[2], [1], [1], [2], [0, 0, 0, 1, 1, 2], [0], [0]>} : vector<2x8x8xf32>, vector<2x8x8xf32>, vector<2x8x8xf32> -> vector<2x8x8xf32>
    "tpu.trace_stop"() : () -> ()
    %126 = vector.extract_strided_slice %87 {offsets = [0, 0, 16], sizes = [2, 8, 8], strides = [1, 1, 1]} : vector<2x8x32xf32> to vector<2x8x8xf32>
    %127 = vector.extract_strided_slice %89 {offsets = [0, 0, 16], sizes = [2, 8, 8], strides = [1, 1, 1]} : vector<2x8x32xf32> to vector<2x8x8xf32>
    %128 = vector.extract_strided_slice %91 {offsets = [0, 0, 16], sizes = [2, 8, 8], strides = [1, 1, 1]} : vector<2x8x32xf32> to vector<2x8x8xf32>
    "tpu.trace_start"() <{level = 10 : i32, message = "bqd,bkd->bqk"}> : () -> ()
    %cst_34 = arith.constant dense<0.000000e+00> : vector<2x8x8xf32>
    %129 = tpu.matmul %126, %127, %cst_34 {dimension_numbers = #tpu.dot_dimension_numbers<[2], [2], [1], [1], [0, 0, 0, 1, 1, 1], [0], [0]>} : vector<2x8x8xf32>, vector<2x8x8xf32>, vector<2x8x8xf32> -> vector<2x8x8xf32>
    "tpu.trace_stop"() : () -> ()
    %cst_35 = arith.constant 0.353553385 : f32
    %130 = vector.broadcast %cst_35 : f32 to vector<2x8x8xf32>
    %131 = arith.mulf %129, %130 : vector<2x8x8xf32>
    %132 = arith.addf %131, %56 : vector<2x8x8xf32>
    %cst_36 = arith.constant dense<0xFF800000> : vector<2x8xf32>
    %133 = vector.multi_reduction <maximumf>, %132, %cst_36 [2] : vector<2x8x8xf32> to vector<2x8xf32>
    %134 = vector.shape_cast %133 : vector<2x8xf32> to vector<2x8x1xf32>
    %135 = vector.broadcast %134 : vector<2x8x1xf32> to vector<2x8x8xf32>
    %136 = arith.subf %132, %135 : vector<2x8x8xf32>
    %137 = math.exp %136 : vector<2x8x8xf32>
    %cst_37 = arith.constant dense<0.000000e+00> : vector<2x8xf32>
    %138 = vector.multi_reduction <add>, %137, %cst_37 [2] : vector<2x8x8xf32> to vector<2x8xf32>
    %139 = vector.shape_cast %138 : vector<2x8xf32> to vector<2x8x1xf32>
    %140 = vector.broadcast %139 : vector<2x8x1xf32> to vector<2x8x8xf32>
    %141 = arith.divf %137, %140 : vector<2x8x8xf32>
    "tpu.trace_start"() <{level = 10 : i32, message = "bqk,bkd->bqd"}> : () -> ()
    %cst_38 = arith.constant dense<0.000000e+00> : vector<2x8x8xf32>
    %142 = tpu.matmul %141, %128, %cst_38 {dimension_numbers = #tpu.dot_dimension_numbers<[2], [1], [1], [2], [0, 0, 0, 1, 1, 2], [0], [0]>} : vector<2x8x8xf32>, vector<2x8x8xf32>, vector<2x8x8xf32> -> vector<2x8x8xf32>
    "tpu.trace_stop"() : () -> ()
    %143 = vector.extract_strided_slice %87 {offsets = [0, 0, 24], sizes = [2, 8, 8], strides = [1, 1, 1]} : vector<2x8x32xf32> to vector<2x8x8xf32>
    %144 = vector.extract_strided_slice %89 {offsets = [0, 0, 24], sizes = [2, 8, 8], strides = [1, 1, 1]} : vector<2x8x32xf32> to vector<2x8x8xf32>
    %145 = vector.extract_strided_slice %91 {offsets = [0, 0, 24], sizes = [2, 8, 8], strides = [1, 1, 1]} : vector<2x8x32xf32> to vector<2x8x8xf32>
    "tpu.trace_start"() <{level = 10 : i32, message = "bqd,bkd->bqk"}> : () -> ()
    %cst_39 = arith.constant dense<0.000000e+00> : vector<2x8x8xf32>
    %146 = tpu.matmul %143, %144, %cst_39 {dimension_numbers = #tpu.dot_dimension_numbers<[2], [2], [1], [1], [0, 0, 0, 1, 1, 1], [0], [0]>} : vector<2x8x8xf32>, vector<2x8x8xf32>, vector<2x8x8xf32> -> vector<2x8x8xf32>
    "tpu.trace_stop"() : () -> ()
    %cst_40 = arith.constant 0.353553385 : f32
    %147 = vector.broadcast %cst_40 : f32 to vector<2x8x8xf32>
    %148 = arith.mulf %146, %147 : vector<2x8x8xf32>
    %149 = arith.addf %148, %56 : vector<2x8x8xf32>
    %cst_41 = arith.constant dense<0xFF800000> : vector<2x8xf32>
    %150 = vector.multi_reduction <maximumf>, %149, %cst_41 [2] : vector<2x8x8xf32> to vector<2x8xf32>
    %151 = vector.shape_cast %150 : vector<2x8xf32> to vector<2x8x1xf32>
    %152 = vector.broadcast %151 : vector<2x8x1xf32> to vector<2x8x8xf32>
    %153 = arith.subf %149, %152 : vector<2x8x8xf32>
    %154 = math.exp %153 : vector<2x8x8xf32>
    %cst_42 = arith.constant dense<0.000000e+00> : vector<2x8xf32>
    %155 = vector.multi_reduction <add>, %154, %cst_42 [2] : vector<2x8x8xf32> to vector<2x8xf32>
    %156 = vector.shape_cast %155 : vector<2x8xf32> to vector<2x8x1xf32>
    %157 = vector.broadcast %156 : vector<2x8x1xf32> to vector<2x8x8xf32>
    %158 = arith.divf %154, %157 : vector<2x8x8xf32>
    "tpu.trace_start"() <{level = 10 : i32, message = "bqk,bkd->bqd"}> : () -> ()
    %cst_43 = arith.constant dense<0.000000e+00> : vector<2x8x8xf32>
    %159 = tpu.matmul %158, %145, %cst_43 {dimension_numbers = #tpu.dot_dimension_numbers<[2], [1], [1], [2], [0, 0, 0, 1, 1, 2], [0], [0]>} : vector<2x8x8xf32>, vector<2x8x8xf32>, vector<2x8x8xf32> -> vector<2x8x8xf32>
    "tpu.trace_stop"() : () -> ()
    %160 = tpu.concatenate %108, %125, %142, %159 in 2 : vector<2x8x8xf32>, vector<2x8x8xf32>, vector<2x8x8xf32>, vector<2x8x8xf32> -> vector<2x8x32xf32>
    %161 = vector.shape_cast %160 : vector<2x8x32xf32> to vector<16x32xf32>
    %c64 = arith.constant 64 : index
    %c0_44 = arith.constant 0 : index
    %162 = vector.load %arg2[%c64, %c0_44] : memref<512x32xf32, #tpu.memory_space<vmem>>, vector<32x32xf32>
    %cst_45 = arith.constant dense<0.000000e+00> : vector<16x32xf32>
    %163 = tpu.matmul %161, %162, %cst_45 {dimension_numbers = #tpu.dot_dimension_numbers<[1], [0], [0], [1], [0, 0, 1, 1], [], []>} : vector<16x32xf32>, vector<32x32xf32>, vector<16x32xf32> -> vector<16x32xf32>
    %c96 = arith.constant 96 : index
    %c0_46 = arith.constant 0 : index
    %164 = vector.load %arg2[%c96, %c0_46] : memref<512x32xf32, #tpu.memory_space<vmem>>, vector<1x32xf32>
    %165 = vector.broadcast %164 : vector<1x32xf32> to vector<16x32xf32>
    %166 = arith.addf %163, %165 : vector<16x32xf32>
    %167 = arith.addf %21, %166 : vector<16x32xf32>
    %c104 = arith.constant 104 : index
    %c0_47 = arith.constant 0 : index
    %168 = vector.load %arg2[%c104, %c0_47] : memref<512x32xf32, #tpu.memory_space<vmem>>, vector<1x32xf32>
    %c112 = arith.constant 112 : index
    %c0_48 = arith.constant 0 : index
    %169 = vector.load %arg2[%c112, %c0_48] : memref<512x32xf32, #tpu.memory_space<vmem>>, vector<1x32xf32>
    %cst_49 = arith.constant dense<0.000000e+00> : vector<16xf32>
    %170 = vector.multi_reduction <add>, %167, %cst_49 [1] : vector<16x32xf32> to vector<16xf32>
    %171 = vector.shape_cast %170 : vector<16xf32> to vector<16x1xf32>
    %cst_50 = arith.constant 3.200000e+01 : f32
    %172 = vector.broadcast %cst_50 : f32 to vector<16x1xf32>
    %173 = arith.divf %171, %172 : vector<16x1xf32>
    %174 = vector.broadcast %173 : vector<16x1xf32> to vector<16x32xf32>
    %175 = arith.subf %167, %174 : vector<16x32xf32>
    %176 = arith.mulf %175, %175 : vector<16x32xf32>
    %cst_51 = arith.constant dense<0.000000e+00> : vector<16xf32>
    %177 = vector.multi_reduction <add>, %176, %cst_51 [1] : vector<16x32xf32> to vector<16xf32>
    %178 = vector.shape_cast %177 : vector<16xf32> to vector<16x1xf32>
    %cst_52 = arith.constant 3.200000e+01 : f32
    %179 = vector.broadcast %cst_52 : f32 to vector<16x1xf32>
    %180 = arith.divf %178, %179 : vector<16x1xf32>
    %181 = vector.broadcast %173 : vector<16x1xf32> to vector<16x32xf32>
    %182 = arith.subf %167, %181 : vector<16x32xf32>
    %cst_53 = arith.constant 9.99999974E-6 : f32
    %183 = vector.broadcast %cst_53 : f32 to vector<16x1xf32>
    %184 = arith.addf %180, %183 : vector<16x1xf32>
    %185 = math.rsqrt %184 : vector<16x1xf32>
    %186 = vector.broadcast %185 : vector<16x1xf32> to vector<16x32xf32>
    %187 = arith.mulf %182, %186 : vector<16x32xf32>
    %188 = vector.broadcast %168 : vector<1x32xf32> to vector<16x32xf32>
    %189 = arith.mulf %187, %188 : vector<16x32xf32>
    %190 = vector.broadcast %169 : vector<1x32xf32> to vector<16x32xf32>
    %191 = arith.addf %189, %190 : vector<16x32xf32>
    %c40 = arith.constant 40 : index
    %c0_54 = arith.constant 0 : index
    %192 = vector.load %arg3[%c40, %c0_54] : memref<160x128xf32, #tpu.memory_space<vmem>>, vector<32x128xf32>
    %cst_55 = arith.constant dense<0.000000e+00> : vector<16x128xf32>
    %193 = tpu.matmul %191, %192, %cst_55 {dimension_numbers = #tpu.dot_dimension_numbers<[1], [0], [0], [1], [0, 0, 1, 1], [], []>} : vector<16x32xf32>, vector<32x128xf32>, vector<16x128xf32> -> vector<16x128xf32>
    %c72 = arith.constant 72 : index
    %c0_56 = arith.constant 0 : index
    %194 = vector.load %arg3[%c72, %c0_56] : memref<160x128xf32, #tpu.memory_space<vmem>>, vector<1x128xf32>
    %195 = vector.broadcast %194 : vector<1x128xf32> to vector<16x128xf32>
    %196 = arith.addf %193, %195 : vector<16x128xf32>
    %cst_57 = arith.constant 5.000000e-01 : f32
    %197 = vector.broadcast %cst_57 : f32 to vector<16x128xf32>
    %198 = arith.mulf %197, %196 : vector<16x128xf32>
    %cst_58 = arith.constant 0.707106769 : f32
    %199 = vector.broadcast %cst_58 : f32 to vector<16x128xf32>
    %200 = arith.mulf %196, %199 : vector<16x128xf32>
    %201 = math.erf %200 : vector<16x128xf32>
    %cst_59 = arith.constant 1.000000e+00 : f32
    %202 = vector.broadcast %cst_59 : f32 to vector<16x128xf32>
    %203 = arith.addf %202, %201 : vector<16x128xf32>
    %204 = arith.mulf %198, %203 : vector<16x128xf32>
    %c120 = arith.constant 120 : index
    %c0_60 = arith.constant 0 : index
    %205 = vector.load %arg2[%c120, %c0_60] : memref<512x32xf32, #tpu.memory_space<vmem>>, vector<128x32xf32>
    %cst_61 = arith.constant dense<0.000000e+00> : vector<16x32xf32>
    %206 = tpu.matmul %204, %205, %cst_61 {dimension_numbers = #tpu.dot_dimension_numbers<[1], [0], [0], [1], [0, 0, 1, 1], [], []>} : vector<16x128xf32>, vector<128x32xf32>, vector<16x32xf32> -> vector<16x32xf32>
    %c248 = arith.constant 248 : index
    %c0_62 = arith.constant 0 : index
    %207 = vector.load %arg2[%c248, %c0_62] : memref<512x32xf32, #tpu.memory_space<vmem>>, vector<1x32xf32>
    %208 = vector.broadcast %207 : vector<1x32xf32> to vector<16x32xf32>
    %209 = arith.addf %206, %208 : vector<16x32xf32>
    %210 = arith.addf %167, %209 : vector<16x32xf32>
    %c256 = arith.constant 256 : index
    %c0_63 = arith.constant 0 : index
    %211 = vector.load %arg2[%c256, %c0_63] : memref<512x32xf32, #tpu.memory_space<vmem>>, vector<1x32xf32>
    %c264 = arith.constant 264 : index
    %c0_64 = arith.constant 0 : index
    %212 = vector.load %arg2[%c264, %c0_64] : memref<512x32xf32, #tpu.memory_space<vmem>>, vector<1x32xf32>
    %cst_65 = arith.constant dense<0.000000e+00> : vector<16xf32>
    %213 = vector.multi_reduction <add>, %210, %cst_65 [1] : vector<16x32xf32> to vector<16xf32>
    %214 = vector.shape_cast %213 : vector<16xf32> to vector<16x1xf32>
    %cst_66 = arith.constant 3.200000e+01 : f32
    %215 = vector.broadcast %cst_66 : f32 to vector<16x1xf32>
    %216 = arith.divf %214, %215 : vector<16x1xf32>
    %217 = vector.broadcast %216 : vector<16x1xf32> to vector<16x32xf32>
    %218 = arith.subf %210, %217 : vector<16x32xf32>
    %219 = arith.mulf %218, %218 : vector<16x32xf32>
    %cst_67 = arith.constant dense<0.000000e+00> : vector<16xf32>
    %220 = vector.multi_reduction <add>, %219, %cst_67 [1] : vector<16x32xf32> to vector<16xf32>
    %221 = vector.shape_cast %220 : vector<16xf32> to vector<16x1xf32>
    %cst_68 = arith.constant 3.200000e+01 : f32
    %222 = vector.broadcast %cst_68 : f32 to vector<16x1xf32>
    %223 = arith.divf %221, %222 : vector<16x1xf32>
    %224 = vector.broadcast %216 : vector<16x1xf32> to vector<16x32xf32>
    %225 = arith.subf %210, %224 : vector<16x32xf32>
    %cst_69 = arith.constant 9.99999974E-6 : f32
    %226 = vector.broadcast %cst_69 : f32 to vector<16x1xf32>
    %227 = arith.addf %223, %226 : vector<16x1xf32>
    %228 = math.rsqrt %227 : vector<16x1xf32>
    %229 = vector.broadcast %228 : vector<16x1xf32> to vector<16x32xf32>
    %230 = arith.mulf %225, %229 : vector<16x32xf32>
    %231 = vector.broadcast %211 : vector<1x32xf32> to vector<16x32xf32>
    %232 = arith.mulf %230, %231 : vector<16x32xf32>
    %233 = vector.broadcast %212 : vector<1x32xf32> to vector<16x32xf32>
    %234 = arith.addf %232, %233 : vector<16x32xf32>
    %c80 = arith.constant 80 : index
    %c0_70 = arith.constant 0 : index
    %235 = vector.load %arg3[%c80, %c0_70] : memref<160x128xf32, #tpu.memory_space<vmem>>, vector<32x128xf32>
    %cst_71 = arith.constant dense<0.000000e+00> : vector<16x128xf32>
    %236 = tpu.matmul %234, %235, %cst_71 {dimension_numbers = #tpu.dot_dimension_numbers<[1], [0], [0], [1], [0, 0, 1, 1], [], []>} : vector<16x32xf32>, vector<32x128xf32>, vector<16x128xf32> -> vector<16x128xf32>
    %c112_72 = arith.constant 112 : index
    %c0_73 = arith.constant 0 : index
    %237 = vector.load %arg3[%c112_72, %c0_73] : memref<160x128xf32, #tpu.memory_space<vmem>>, vector<1x128xf32>
    %238 = vector.broadcast %237 : vector<1x128xf32> to vector<16x128xf32>
    %239 = arith.addf %236, %238 : vector<16x128xf32>
    %240 = vector.extract_strided_slice %239 {offsets = [0, 0], sizes = [16, 32], strides = [1, 1]} : vector<16x128xf32> to vector<16x32xf32>
    %241 = vector.shape_cast %240 : vector<16x32xf32> to vector<2x8x32xf32>
    %242 = vector.extract_strided_slice %239 {offsets = [0, 32], sizes = [16, 32], strides = [1, 1]} : vector<16x128xf32> to vector<16x32xf32>
    %243 = vector.shape_cast %242 : vector<16x32xf32> to vector<2x8x32xf32>
    %244 = vector.extract_strided_slice %239 {offsets = [0, 64], sizes = [16, 32], strides = [1, 1]} : vector<16x128xf32> to vector<16x32xf32>
    %245 = vector.shape_cast %244 : vector<16x32xf32> to vector<2x8x32xf32>
    %246 = vector.extract_strided_slice %241 {offsets = [0, 0, 0], sizes = [2, 8, 8], strides = [1, 1, 1]} : vector<2x8x32xf32> to vector<2x8x8xf32>
    %247 = vector.extract_strided_slice %243 {offsets = [0, 0, 0], sizes = [2, 8, 8], strides = [1, 1, 1]} : vector<2x8x32xf32> to vector<2x8x8xf32>
    %248 = vector.extract_strided_slice %245 {offsets = [0, 0, 0], sizes = [2, 8, 8], strides = [1, 1, 1]} : vector<2x8x32xf32> to vector<2x8x8xf32>
    "tpu.trace_start"() <{level = 10 : i32, message = "bqd,bkd->bqk"}> : () -> ()
    %cst_74 = arith.constant dense<0.000000e+00> : vector<2x8x8xf32>
    %249 = tpu.matmul %246, %247, %cst_74 {dimension_numbers = #tpu.dot_dimension_numbers<[2], [2], [1], [1], [0, 0, 0, 1, 1, 1], [0], [0]>} : vector<2x8x8xf32>, vector<2x8x8xf32>, vector<2x8x8xf32> -> vector<2x8x8xf32>
    "tpu.trace_stop"() : () -> ()
    %cst_75 = arith.constant 0.353553385 : f32
    %250 = vector.broadcast %cst_75 : f32 to vector<2x8x8xf32>
    %251 = arith.mulf %249, %250 : vector<2x8x8xf32>
    %252 = arith.addf %251, %56 : vector<2x8x8xf32>
    %cst_76 = arith.constant dense<0xFF800000> : vector<2x8xf32>
    %253 = vector.multi_reduction <maximumf>, %252, %cst_76 [2] : vector<2x8x8xf32> to vector<2x8xf32>
    %254 = vector.shape_cast %253 : vector<2x8xf32> to vector<2x8x1xf32>
    %255 = vector.broadcast %254 : vector<2x8x1xf32> to vector<2x8x8xf32>
    %256 = arith.subf %252, %255 : vector<2x8x8xf32>
    %257 = math.exp %256 : vector<2x8x8xf32>
    %cst_77 = arith.constant dense<0.000000e+00> : vector<2x8xf32>
    %258 = vector.multi_reduction <add>, %257, %cst_77 [2] : vector<2x8x8xf32> to vector<2x8xf32>
    %259 = vector.shape_cast %258 : vector<2x8xf32> to vector<2x8x1xf32>
    %260 = vector.broadcast %259 : vector<2x8x1xf32> to vector<2x8x8xf32>
    %261 = arith.divf %257, %260 : vector<2x8x8xf32>
    "tpu.trace_start"() <{level = 10 : i32, message = "bqk,bkd->bqd"}> : () -> ()
    %cst_78 = arith.constant dense<0.000000e+00> : vector<2x8x8xf32>
    %262 = tpu.matmul %261, %248, %cst_78 {dimension_numbers = #tpu.dot_dimension_numbers<[2], [1], [1], [2], [0, 0, 0, 1, 1, 2], [0], [0]>} : vector<2x8x8xf32>, vector<2x8x8xf32>, vector<2x8x8xf32> -> vector<2x8x8xf32>
    "tpu.trace_stop"() : () -> ()
    %263 = vector.extract_strided_slice %241 {offsets = [0, 0, 8], sizes = [2, 8, 8], strides = [1, 1, 1]} : vector<2x8x32xf32> to vector<2x8x8xf32>
    %264 = vector.extract_strided_slice %243 {offsets = [0, 0, 8], sizes = [2, 8, 8], strides = [1, 1, 1]} : vector<2x8x32xf32> to vector<2x8x8xf32>
    %265 = vector.extract_strided_slice %245 {offsets = [0, 0, 8], sizes = [2, 8, 8], strides = [1, 1, 1]} : vector<2x8x32xf32> to vector<2x8x8xf32>
    "tpu.trace_start"() <{level = 10 : i32, message = "bqd,bkd->bqk"}> : () -> ()
    %cst_79 = arith.constant dense<0.000000e+00> : vector<2x8x8xf32>
    %266 = tpu.matmul %263, %264, %cst_79 {dimension_numbers = #tpu.dot_dimension_numbers<[2], [2], [1], [1], [0, 0, 0, 1, 1, 1], [0], [0]>} : vector<2x8x8xf32>, vector<2x8x8xf32>, vector<2x8x8xf32> -> vector<2x8x8xf32>
    "tpu.trace_stop"() : () -> ()
    %cst_80 = arith.constant 0.353553385 : f32
    %267 = vector.broadcast %cst_80 : f32 to vector<2x8x8xf32>
    %268 = arith.mulf %266, %267 : vector<2x8x8xf32>
    %269 = arith.addf %268, %56 : vector<2x8x8xf32>
    %cst_81 = arith.constant dense<0xFF800000> : vector<2x8xf32>
    %270 = vector.multi_reduction <maximumf>, %269, %cst_81 [2] : vector<2x8x8xf32> to vector<2x8xf32>
    %271 = vector.shape_cast %270 : vector<2x8xf32> to vector<2x8x1xf32>
    %272 = vector.broadcast %271 : vector<2x8x1xf32> to vector<2x8x8xf32>
    %273 = arith.subf %269, %272 : vector<2x8x8xf32>
    %274 = math.exp %273 : vector<2x8x8xf32>
    %cst_82 = arith.constant dense<0.000000e+00> : vector<2x8xf32>
    %275 = vector.multi_reduction <add>, %274, %cst_82 [2] : vector<2x8x8xf32> to vector<2x8xf32>
    %276 = vector.shape_cast %275 : vector<2x8xf32> to vector<2x8x1xf32>
    %277 = vector.broadcast %276 : vector<2x8x1xf32> to vector<2x8x8xf32>
    %278 = arith.divf %274, %277 : vector<2x8x8xf32>
    "tpu.trace_start"() <{level = 10 : i32, message = "bqk,bkd->bqd"}> : () -> ()
    %cst_83 = arith.constant dense<0.000000e+00> : vector<2x8x8xf32>
    %279 = tpu.matmul %278, %265, %cst_83 {dimension_numbers = #tpu.dot_dimension_numbers<[2], [1], [1], [2], [0, 0, 0, 1, 1, 2], [0], [0]>} : vector<2x8x8xf32>, vector<2x8x8xf32>, vector<2x8x8xf32> -> vector<2x8x8xf32>
    "tpu.trace_stop"() : () -> ()
    %280 = vector.extract_strided_slice %241 {offsets = [0, 0, 16], sizes = [2, 8, 8], strides = [1, 1, 1]} : vector<2x8x32xf32> to vector<2x8x8xf32>
    %281 = vector.extract_strided_slice %243 {offsets = [0, 0, 16], sizes = [2, 8, 8], strides = [1, 1, 1]} : vector<2x8x32xf32> to vector<2x8x8xf32>
    %282 = vector.extract_strided_slice %245 {offsets = [0, 0, 16], sizes = [2, 8, 8], strides = [1, 1, 1]} : vector<2x8x32xf32> to vector<2x8x8xf32>
    "tpu.trace_start"() <{level = 10 : i32, message = "bqd,bkd->bqk"}> : () -> ()
    %cst_84 = arith.constant dense<0.000000e+00> : vector<2x8x8xf32>
    %283 = tpu.matmul %280, %281, %cst_84 {dimension_numbers = #tpu.dot_dimension_numbers<[2], [2], [1], [1], [0, 0, 0, 1, 1, 1], [0], [0]>} : vector<2x8x8xf32>, vector<2x8x8xf32>, vector<2x8x8xf32> -> vector<2x8x8xf32>
    "tpu.trace_stop"() : () -> ()
    %cst_85 = arith.constant 0.353553385 : f32
    %284 = vector.broadcast %cst_85 : f32 to vector<2x8x8xf32>
    %285 = arith.mulf %283, %284 : vector<2x8x8xf32>
    %286 = arith.addf %285, %56 : vector<2x8x8xf32>
    %cst_86 = arith.constant dense<0xFF800000> : vector<2x8xf32>
    %287 = vector.multi_reduction <maximumf>, %286, %cst_86 [2] : vector<2x8x8xf32> to vector<2x8xf32>
    %288 = vector.shape_cast %287 : vector<2x8xf32> to vector<2x8x1xf32>
    %289 = vector.broadcast %288 : vector<2x8x1xf32> to vector<2x8x8xf32>
    %290 = arith.subf %286, %289 : vector<2x8x8xf32>
    %291 = math.exp %290 : vector<2x8x8xf32>
    %cst_87 = arith.constant dense<0.000000e+00> : vector<2x8xf32>
    %292 = vector.multi_reduction <add>, %291, %cst_87 [2] : vector<2x8x8xf32> to vector<2x8xf32>
    %293 = vector.shape_cast %292 : vector<2x8xf32> to vector<2x8x1xf32>
    %294 = vector.broadcast %293 : vector<2x8x1xf32> to vector<2x8x8xf32>
    %295 = arith.divf %291, %294 : vector<2x8x8xf32>
    "tpu.trace_start"() <{level = 10 : i32, message = "bqk,bkd->bqd"}> : () -> ()
    %cst_88 = arith.constant dense<0.000000e+00> : vector<2x8x8xf32>
    %296 = tpu.matmul %295, %282, %cst_88 {dimension_numbers = #tpu.dot_dimension_numbers<[2], [1], [1], [2], [0, 0, 0, 1, 1, 2], [0], [0]>} : vector<2x8x8xf32>, vector<2x8x8xf32>, vector<2x8x8xf32> -> vector<2x8x8xf32>
    "tpu.trace_stop"() : () -> ()
    %297 = vector.extract_strided_slice %241 {offsets = [0, 0, 24], sizes = [2, 8, 8], strides = [1, 1, 1]} : vector<2x8x32xf32> to vector<2x8x8xf32>
    %298 = vector.extract_strided_slice %243 {offsets = [0, 0, 24], sizes = [2, 8, 8], strides = [1, 1, 1]} : vector<2x8x32xf32> to vector<2x8x8xf32>
    %299 = vector.extract_strided_slice %245 {offsets = [0, 0, 24], sizes = [2, 8, 8], strides = [1, 1, 1]} : vector<2x8x32xf32> to vector<2x8x8xf32>
    "tpu.trace_start"() <{level = 10 : i32, message = "bqd,bkd->bqk"}> : () -> ()
    %cst_89 = arith.constant dense<0.000000e+00> : vector<2x8x8xf32>
    %300 = tpu.matmul %297, %298, %cst_89 {dimension_numbers = #tpu.dot_dimension_numbers<[2], [2], [1], [1], [0, 0, 0, 1, 1, 1], [0], [0]>} : vector<2x8x8xf32>, vector<2x8x8xf32>, vector<2x8x8xf32> -> vector<2x8x8xf32>
    "tpu.trace_stop"() : () -> ()
    %cst_90 = arith.constant 0.353553385 : f32
    %301 = vector.broadcast %cst_90 : f32 to vector<2x8x8xf32>
    %302 = arith.mulf %300, %301 : vector<2x8x8xf32>
    %303 = arith.addf %302, %56 : vector<2x8x8xf32>
    %cst_91 = arith.constant dense<0xFF800000> : vector<2x8xf32>
    %304 = vector.multi_reduction <maximumf>, %303, %cst_91 [2] : vector<2x8x8xf32> to vector<2x8xf32>
    %305 = vector.shape_cast %304 : vector<2x8xf32> to vector<2x8x1xf32>
    %306 = vector.broadcast %305 : vector<2x8x1xf32> to vector<2x8x8xf32>
    %307 = arith.subf %303, %306 : vector<2x8x8xf32>
    %308 = math.exp %307 : vector<2x8x8xf32>
    %cst_92 = arith.constant dense<0.000000e+00> : vector<2x8xf32>
    %309 = vector.multi_reduction <add>, %308, %cst_92 [2] : vector<2x8x8xf32> to vector<2x8xf32>
    %310 = vector.shape_cast %309 : vector<2x8xf32> to vector<2x8x1xf32>
    %311 = vector.broadcast %310 : vector<2x8x1xf32> to vector<2x8x8xf32>
    %312 = arith.divf %308, %311 : vector<2x8x8xf32>
    "tpu.trace_start"() <{level = 10 : i32, message = "bqk,bkd->bqd"}> : () -> ()
    %cst_93 = arith.constant dense<0.000000e+00> : vector<2x8x8xf32>
    %313 = tpu.matmul %312, %299, %cst_93 {dimension_numbers = #tpu.dot_dimension_numbers<[2], [1], [1], [2], [0, 0, 0, 1, 1, 2], [0], [0]>} : vector<2x8x8xf32>, vector<2x8x8xf32>, vector<2x8x8xf32> -> vector<2x8x8xf32>
    "tpu.trace_stop"() : () -> ()
    %314 = tpu.concatenate %262, %279, %296, %313 in 2 : vector<2x8x8xf32>, vector<2x8x8xf32>, vector<2x8x8xf32>, vector<2x8x8xf32> -> vector<2x8x32xf32>
    %315 = vector.shape_cast %314 : vector<2x8x32xf32> to vector<16x32xf32>
    %c272 = arith.constant 272 : index
    %c0_94 = arith.constant 0 : index
    %316 = vector.load %arg2[%c272, %c0_94] : memref<512x32xf32, #tpu.memory_space<vmem>>, vector<32x32xf32>
    %cst_95 = arith.constant dense<0.000000e+00> : vector<16x32xf32>
    %317 = tpu.matmul %315, %316, %cst_95 {dimension_numbers = #tpu.dot_dimension_numbers<[1], [0], [0], [1], [0, 0, 1, 1], [], []>} : vector<16x32xf32>, vector<32x32xf32>, vector<16x32xf32> -> vector<16x32xf32>
    %c304 = arith.constant 304 : index
    %c0_96 = arith.constant 0 : index
    %318 = vector.load %arg2[%c304, %c0_96] : memref<512x32xf32, #tpu.memory_space<vmem>>, vector<1x32xf32>
    %319 = vector.broadcast %318 : vector<1x32xf32> to vector<16x32xf32>
    %320 = arith.addf %317, %319 : vector<16x32xf32>
    %321 = arith.addf %210, %320 : vector<16x32xf32>
    %c312 = arith.constant 312 : index
    %c0_97 = arith.constant 0 : index
    %322 = vector.load %arg2[%c312, %c0_97] : memref<512x32xf32, #tpu.memory_space<vmem>>, vector<1x32xf32>
    %c320 = arith.constant 320 : index
    %c0_98 = arith.constant 0 : index
    %323 = vector.load %arg2[%c320, %c0_98] : memref<512x32xf32, #tpu.memory_space<vmem>>, vector<1x32xf32>
    %cst_99 = arith.constant dense<0.000000e+00> : vector<16xf32>
    %324 = vector.multi_reduction <add>, %321, %cst_99 [1] : vector<16x32xf32> to vector<16xf32>
    %325 = vector.shape_cast %324 : vector<16xf32> to vector<16x1xf32>
    %cst_100 = arith.constant 3.200000e+01 : f32
    %326 = vector.broadcast %cst_100 : f32 to vector<16x1xf32>
    %327 = arith.divf %325, %326 : vector<16x1xf32>
    %328 = vector.broadcast %327 : vector<16x1xf32> to vector<16x32xf32>
    %329 = arith.subf %321, %328 : vector<16x32xf32>
    %330 = arith.mulf %329, %329 : vector<16x32xf32>
    %cst_101 = arith.constant dense<0.000000e+00> : vector<16xf32>
    %331 = vector.multi_reduction <add>, %330, %cst_101 [1] : vector<16x32xf32> to vector<16xf32>
    %332 = vector.shape_cast %331 : vector<16xf32> to vector<16x1xf32>
    %cst_102 = arith.constant 3.200000e+01 : f32
    %333 = vector.broadcast %cst_102 : f32 to vector<16x1xf32>
    %334 = arith.divf %332, %333 : vector<16x1xf32>
    %335 = vector.broadcast %327 : vector<16x1xf32> to vector<16x32xf32>
    %336 = arith.subf %321, %335 : vector<16x32xf32>
    %cst_103 = arith.constant 9.99999974E-6 : f32
    %337 = vector.broadcast %cst_103 : f32 to vector<16x1xf32>
    %338 = arith.addf %334, %337 : vector<16x1xf32>
    %339 = math.rsqrt %338 : vector<16x1xf32>
    %340 = vector.broadcast %339 : vector<16x1xf32> to vector<16x32xf32>
    %341 = arith.mulf %336, %340 : vector<16x32xf32>
    %342 = vector.broadcast %322 : vector<1x32xf32> to vector<16x32xf32>
    %343 = arith.mulf %341, %342 : vector<16x32xf32>
    %344 = vector.broadcast %323 : vector<1x32xf32> to vector<16x32xf32>
    %345 = arith.addf %343, %344 : vector<16x32xf32>
    %c120_104 = arith.constant 120 : index
    %c0_105 = arith.constant 0 : index
    %346 = vector.load %arg3[%c120_104, %c0_105] : memref<160x128xf32, #tpu.memory_space<vmem>>, vector<32x128xf32>
    %cst_106 = arith.constant dense<0.000000e+00> : vector<16x128xf32>
    %347 = tpu.matmul %345, %346, %cst_106 {dimension_numbers = #tpu.dot_dimension_numbers<[1], [0], [0], [1], [0, 0, 1, 1], [], []>} : vector<16x32xf32>, vector<32x128xf32>, vector<16x128xf32> -> vector<16x128xf32>
    %c152 = arith.constant 152 : index
    %c0_107 = arith.constant 0 : index
    %348 = vector.load %arg3[%c152, %c0_107] : memref<160x128xf32, #tpu.memory_space<vmem>>, vector<1x128xf32>
    %349 = vector.broadcast %348 : vector<1x128xf32> to vector<16x128xf32>
    %350 = arith.addf %347, %349 : vector<16x128xf32>
    %cst_108 = arith.constant 5.000000e-01 : f32
    %351 = vector.broadcast %cst_108 : f32 to vector<16x128xf32>
    %352 = arith.mulf %351, %350 : vector<16x128xf32>
    %cst_109 = arith.constant 0.707106769 : f32
    %353 = vector.broadcast %cst_109 : f32 to vector<16x128xf32>
    %354 = arith.mulf %350, %353 : vector<16x128xf32>
    %355 = math.erf %354 : vector<16x128xf32>
    %cst_110 = arith.constant 1.000000e+00 : f32
    %356 = vector.broadcast %cst_110 : f32 to vector<16x128xf32>
    %357 = arith.addf %356, %355 : vector<16x128xf32>
    %358 = arith.mulf %352, %357 : vector<16x128xf32>
    %c328 = arith.constant 328 : index
    %c0_111 = arith.constant 0 : index
    %359 = vector.load %arg2[%c328, %c0_111] : memref<512x32xf32, #tpu.memory_space<vmem>>, vector<128x32xf32>
    %cst_112 = arith.constant dense<0.000000e+00> : vector<16x32xf32>
    %360 = tpu.matmul %358, %359, %cst_112 {dimension_numbers = #tpu.dot_dimension_numbers<[1], [0], [0], [1], [0, 0, 1, 1], [], []>} : vector<16x128xf32>, vector<128x32xf32>, vector<16x32xf32> -> vector<16x32xf32>
    %c456 = arith.constant 456 : index
    %c0_113 = arith.constant 0 : index
    %361 = vector.load %arg2[%c456, %c0_113] : memref<512x32xf32, #tpu.memory_space<vmem>>, vector<1x32xf32>
    %362 = vector.broadcast %361 : vector<1x32xf32> to vector<16x32xf32>
    %363 = arith.addf %360, %362 : vector<16x32xf32>
    %364 = arith.addf %321, %363 : vector<16x32xf32>
    %c464 = arith.constant 464 : index
    %c0_114 = arith.constant 0 : index
    %365 = vector.load %arg2[%c464, %c0_114] : memref<512x32xf32, #tpu.memory_space<vmem>>, vector<1x32xf32>
    %c472 = arith.constant 472 : index
    %c0_115 = arith.constant 0 : index
    %366 = vector.load %arg2[%c472, %c0_115] : memref<512x32xf32, #tpu.memory_space<vmem>>, vector<1x32xf32>
    %cst_116 = arith.constant dense<0.000000e+00> : vector<16xf32>
    %367 = vector.multi_reduction <add>, %364, %cst_116 [1] : vector<16x32xf32> to vector<16xf32>
    %368 = vector.shape_cast %367 : vector<16xf32> to vector<16x1xf32>
    %cst_117 = arith.constant 3.200000e+01 : f32
    %369 = vector.broadcast %cst_117 : f32 to vector<16x1xf32>
    %370 = arith.divf %368, %369 : vector<16x1xf32>
    %371 = vector.broadcast %370 : vector<16x1xf32> to vector<16x32xf32>
    %372 = arith.subf %364, %371 : vector<16x32xf32>
    %373 = arith.mulf %372, %372 : vector<16x32xf32>
    %cst_118 = arith.constant dense<0.000000e+00> : vector<16xf32>
    %374 = vector.multi_reduction <add>, %373, %cst_118 [1] : vector<16x32xf32> to vector<16xf32>
    %375 = vector.shape_cast %374 : vector<16xf32> to vector<16x1xf32>
    %cst_119 = arith.constant 3.200000e+01 : f32
    %376 = vector.broadcast %cst_119 : f32 to vector<16x1xf32>
    %377 = arith.divf %375, %376 : vector<16x1xf32>
    %378 = vector.broadcast %370 : vector<16x1xf32> to vector<16x32xf32>
    %379 = arith.subf %364, %378 : vector<16x32xf32>
    %cst_120 = arith.constant 9.99999974E-6 : f32
    %380 = vector.broadcast %cst_120 : f32 to vector<16x1xf32>
    %381 = arith.addf %377, %380 : vector<16x1xf32>
    %382 = math.rsqrt %381 : vector<16x1xf32>
    %383 = vector.broadcast %382 : vector<16x1xf32> to vector<16x32xf32>
    %384 = arith.mulf %379, %383 : vector<16x32xf32>
    %385 = vector.broadcast %365 : vector<1x32xf32> to vector<16x32xf32>
    %386 = arith.mulf %384, %385 : vector<16x32xf32>
    %387 = vector.broadcast %366 : vector<1x32xf32> to vector<16x32xf32>
    %388 = arith.addf %386, %387 : vector<16x32xf32>
    %c480 = arith.constant 480 : index
    %c0_121 = arith.constant 0 : index
    %389 = vector.load %arg2[%c480, %c0_121] : memref<512x32xf32, #tpu.memory_space<vmem>>, vector<32x32xf32>
    %cst_122 = arith.constant dense<0.000000e+00> : vector<16x32xf32>
    %390 = tpu.matmul %388, %389, %cst_122 {dimension_numbers = #tpu.dot_dimension_numbers<[1], [0], [0], [1], [0, 0, 1, 1], [], []>} : vector<16x32xf32>, vector<32x32xf32>, vector<16x32xf32> -> vector<16x32xf32>
    %391 = vector.shape_cast %261 : vector<2x8x8xf32> to vector<16x8xf32>
    %cst_123 = arith.constant 0.000000e+00 : f32
    %392 = vector.broadcast %cst_123 : f32 to vector<16x88xf32>
    %393 = tpu.concatenate %390, %391, %392 in 1 : vector<16x32xf32>, vector<16x8xf32>, vector<16x88xf32> -> vector<16x128xf32>
    %c0_124 = arith.constant 0 : index
    %c0_125 = arith.constant 0 : index
    %394 = vector.load %arg4[%c0_124, %c0_125] : memref<16x128xf32, #tpu.memory_space<vmem>>, vector<16x128xf32>
    tpu.vector_store %arg4[%c0_124, %c0_125], %393 {strides = array<i32>} : memref<16x128xf32, #tpu.memory_space<vmem>>, vector<16x128xf32>,
    return
  }
  func.func @transform_0(%arg0: i32) -> (i32, i32) {
    %c0_i32 = arith.constant 0 : i32
    %c0_i32_0 = arith.constant 0 : i32
    %c0_i32_1 = arith.constant 0 : i32
    return %c0_i32, %c0_i32_0 : i32, i32
  }
  func.func @transform_1(%arg0: i32) -> (i32, i32) {
    %c0_i32 = arith.constant 0 : i32
    %c0_i32_0 = arith.constant 0 : i32
    %c0_i32_1 = arith.constant 0 : i32
    return %c0_i32, %c0_i32_0 : i32, i32
  }
  func.func @transform_2(%arg0: i32) -> (i32, i32) {
    %c0_i32 = arith.constant 0 : i32
    %c0_i32_0 = arith.constant 0 : i32
    %c0_i32_1 = arith.constant 0 : i32
    return %c0_i32, %c0_i32_0 : i32, i32
  }
  func.func @transform_3(%arg0: i32) -> (i32, i32) {
    %c0_i32 = arith.constant 0 : i32
    %c0_i32_0 = arith.constant 0 : i32
    %c0_i32_1 = arith.constant 0 : i32
    return %c0_i32, %c0_i32_0 : i32, i32
  }
}

</mosaic_0001>

<llo_original>
// kernel: transformer_decoder_forward.1
$region0: #{transformer_decoder_forward.1}
  #allocation0 [shape = 'u32[]', space=smem, size = 0x4, offset = 0x4, fixed_abs, tag = 'smem constant byte address 0x4 - core index']
  #allocation1 [shape = 'u32[144,128]{1,0:T(1,128)}', space=vmem, size = 0x12000, scoped, tag = 'internal scratch']
  %s0 = inlined_call_operand.vmem [shape: s32[16,1], index: 0, kind: input, shape index: {}]
  %s1 = inlined_call_operand.vmem [shape: f32[512,32], index: 1, kind: input, shape index: {}]
  %s2 = inlined_call_operand.vmem [shape: f32[160,128], index: 2, kind: input, shape index: {}]
  %s3 = inlined_call_operand.vmem [shape: f32[16,128], index: 3, kind: output, shape index: {}]
  %s4 = sld [smem:[#allocation0]]
  $region22: #{transformer_decoder_forward.1} parent=0
    _
  %s6 = ssub.s32 1, %s4
  %s7 = scalar_select 0, %s6, %s4
  // Predicated region
  $region2: #{transformer_decoder_forward.1} parent=0 // pred_check
    _
  $region3: #{transformer_decoder_forward.1} parent=0 // pred_check_branch
    %9 = sbr.rel (0) target = $region5
  $region4: #{transformer_decoder_forward.1} parent=0 // pred_region
    _
  $region5: #{transformer_decoder_forward.1} parent=0 // pred_fallthru
    _
  // Predicated region
  $region6: #{transformer_decoder_forward.1} parent=0 // pred_check
    _
  $region7: #{transformer_decoder_forward.1} parent=0 // pred_check_branch
    %11 = sbr.rel (0) target = $region9
  $region8: #{transformer_decoder_forward.1} parent=0 // pred_region
    _
  $region9: #{transformer_decoder_forward.1} parent=0 // pred_fallthru
    _
  // Predicated region
  $region10: #{transformer_decoder_forward.1} parent=0 // pred_check
    _
  $region11: #{transformer_decoder_forward.1} parent=0 // pred_check_branch
    %13 = sbr.rel (0) target = $region13
  $region12: #{transformer_decoder_forward.1} parent=0 // pred_region
    _
  $region13: #{transformer_decoder_forward.1} parent=0 // pred_fallthru
    _
  %v14 = vld [vmem:[%s0] sm:$0xff]
  %v15 = vld [vmem:[%s0 + $0x8] sm:$0xff]
  %v16 = vlaneseq
  %v17 = vshrl.u32 %v16, 7
  %v18 = vadd.s32 %v17, 8
  %v19 = vand.u32 %v17, 7
  %v20 = vand.u32 %v18, 7
  %vm21 = vcmp.eq.s32.totalorder %v14, 0
  %vm22 = vcmp.eq.s32.totalorder %v15, 0
  %v23 = vadd.s32 %v19, 1
  %v24 = vadd.s32 %v20, 1
  %v25 = vsel %vm21, 0, %v23
  %v26 = vsel %vm22, 0, %v24
  %v27 = vlaneseq
  %v28 = vand.u32 %v27, 127
  %29 = vset.pattern.permute.xlu0 0
  %30 = vperm.xlu0 %29, %v14
  %v31 = vpop.permute.xlu0 %30
  %32 = vset.pattern.permute.xlu0 0
  %33 = vperm.xlu0 %32, %v15
  %v34 = vpop.permute.xlu0 %33
  %vm35 = vcmp.eq.s32.totalorder %v28, %v31
  %vm36 = vcmp.eq.s32.totalorder %v28, %v34
  %v37 = vadd.s32 %v25, 32
  %v38 = vadd.s32 %v26, 32
  %39 = vset.pattern.permute.xlu0 0
  %40 = vperm.xlu0 %39, %v37
  %v41 = vpop.permute.xlu0 %40
  %42 = vset.pattern.permute.xlu0 0
  %43 = vperm.xlu0 %42, %v38
  %v44 = vpop.permute.xlu0 %43
  %vm45 = vcmp.eq.s32.totalorder %v28, %v41
  %vm46 = vcmp.eq.s32.totalorder %v28, %v44
  %vm47 = vmor %vm35, %vm45
  %vm48 = vmor %vm36, %vm46
  %v49 = vsel %vm47, 1, 0
  %v50 = vsel %vm48, 1, 0
  %v51 = vcvt.s32.f32 %v49
  %v52 = vcvt.s32.f32 %v50
  %v53 = vld [vmem:[%s1] sm:$0xff]
  %v54 = vld [vmem:[%s1 + $0x8] sm:$0xff]
  %v55 = vld [vmem:[%s1 + $0x10] sm:$0xff]
  %v56 = vld [vmem:[%s1 + $0x18] sm:$0xff]
  %v57 = vld [vmem:[%s1 + $0x20] sm:$0xff]
  %v58 = vld [vmem:[%s1 + $0x28] sm:$0xff]
  %vm59 = vcmask 392192
  %v61 = vsel %vm59, %v51, 0
  %v64 = vsel %vm59, %v52, 0
  %66 = vmatprep.subr.mxu0 0.0
  %67 = vmatpush1.msra.mxu0 0.0
  %68 = vmatprep.subr.mxu0 0.0
  %69 = vmatpush1.msra.mxu0 0.0
  %70 = vmatprep.subr.mxu0 0.0
  %71 = vmatpush1.msra.mxu0 0.0
  %72 = vmatprep.subr.mxu0 0.0
  %73 = vmatpush1.msra.mxu0 0.0
  %74 = vmatprep.subr.mxu0 0.0
  %75 = vmatpush1.msra.mxu0 0.0
  %76 = vmatprep.subr.mxu0 0.0
  %77 = vmatpush1.msra.mxu0 0.0
  %78 = vmatprep.subr.mxu0 0.0
  %79 = vmatpush1.msra.mxu0 0.0
  %80 = vmatprep.subr.mxu0 0.0
  %81 = vmatpush1.msra.mxu0 0.0
  %82 = vmatprep.subr.mxu0 0.0
  %83 = vmatpush1.msra.mxu0 0.0
  %84 = vmatprep.subr.mxu0 0.0
  %85 = vmatpush1.msra.mxu0 0.0
  %86 = vmatprep.subr.mxu0 0.0
  %87 = vmatpush1.msra.mxu0 %v58
  %88 = vmatprep.subr.mxu0 0.0
  %89 = vmatpush1.msra.mxu0 %v57
  %90 = vmatprep.subr.mxu0 0.0
  %91 = vmatpush1.msra.mxu0 %v56
  %92 = vmatprep.subr.mxu0 0.0
  %93 = vmatpush1.msra.mxu0 %v55
  %94 = vmatprep.subr.mxu0 0.0
  %95 = vmatpush1.msra.mxu0 %v54
  %96 = vmatprep.subr.mxu0 0.0
  %97 = vmatpush1.msra.mxu0 %v53
  %98 = vmatprep.subr.mxu0 0.0
  %99 = vmatpush2.msra.mxu0 0.0
  %100 = vmatprep.subr.mxu0 0.0
  %101 = vmatpush2.msra.mxu0 0.0
  %102 = vmatprep.subr.mxu0 0.0
  %103 = vmatpush2.msra.mxu0 0.0
  %104 = vmatprep.subr.mxu0 0.0
  %105 = vmatpush2.msra.mxu0 0.0
  %106 = vmatprep.subr.mxu0 0.0
  %107 = vmatpush2.msra.mxu0 0.0
  %108 = vmatprep.subr.mxu0 0.0
  %109 = vmatpush2.msra.mxu0 0.0
  %110 = vmatprep.subr.mxu0 0.0
  %111 = vmatpush2.msra.mxu0 0.0
  %112 = vmatprep.subr.mxu0 0.0
  %113 = vmatpush2.msra.mxu0 0.0
  %114 = vmatprep.subr.mxu0 0.0
  %115 = vmatpush2.msra.mxu0 0.0
  %116 = vmatprep.subr.mxu0 0.0
  %117 = vmatpush2.msra.mxu0 0.0
  %118 = vmatprep.subr.mxu0 0.0
  %119 = vmatpush2.msra.mxu0 0.0
  %120 = vmatprep.subr.mxu0 0.0
  %121 = vmatpush2.msra.mxu0 0.0
  %122 = vmatprep.subr.mxu0 0.0
  %123 = vmatpush2.msra.mxu0 0.0
  %124 = vmatprep.subr.mxu0 0.0
  %125 = vmatpush2.msra.mxu0 0.0
  %126 = vmatprep.subr.mxu0 0.0
  %127 = vmatpush2.msra.mxu0 0.0
  %128 = vmatprep.subr.mxu0 0.0
  %129 = vmatpush2.msra.mxu0 0.0
  %130 = vmatprep.mubr.f32.mxu0 0.0
  %131 = vmatmul.mubr.f32.gmra.mxu0 %v61
  %v132 = vpop.f32.mrf.mxu0
  %v133 = vadd.f32 0.0, %v132
  %v134 = vpop.f32.mrf.mxu0
  %135 = vmatprep.mubr.f32.mxu0 0.0
  %136 = vmatmul.mubr.f32.gmra.mxu0 %v64
  %v137 = vpop.f32.mrf.mxu0
  %v138 = vadd.f32 0.0, %v137
  %v139 = vpop.f32.mrf.mxu0
  %140 = vdwg.mxu0
  %vm141 = vcmp.gt.s32.totalorder %v28, %v19
  %vm142 = vcmp.gt.s32.totalorder %v28, %v20
  %v143 = vsub.s32 %v17, %v19
  %v144 = vsub.s32 %v18, %v20
  %v145 = vand.u32 %v28, 7
  %v146 = vsub.s32 %v28, %v145
  %vm147 = vcmp.eq.s32.totalorder %v143, %v146
  %vm148 = vcmp.eq.s32.totalorder %v144, %v146
  %v149 = vsel %vm147, 1, 0
  %v150 = vsel %vm148, 1, 0
  %v151 = vcvt.s32.f32 %v149
  %v152 = vcvt.s32.f32 %v150
  %vm153 = vcmp.eq.s32.totalorder %v19, %v28
  %vm154 = vcmp.eq.s32.totalorder %v20, %v28
  %v155 = vsel %vm153, 1, 0
  %v156 = vsel %vm154, 1, 0
  %v157 = vcvt.s32.f32 %v155
  %v158 = vcvt.s32.f32 %v156
  %v159 = vsel %vm21, 1, 0
  %v160 = vsel %vm22, 1, 0
  %v161 = vcvt.s32.f32 %v159
  %v162 = vcvt.s32.f32 %v160
  %164 = vset.pattern.permute.xlu0 0
  %165 = vperm.xlu0 %164, %v161
  %v166 = vpop.permute.xlu0 %165
  %169 = vset.pattern.permute.xlu0 0
  %170 = vperm.xlu0 %169, %v162
  %v171 = vpop.permute.xlu0 %170
  %v173 = vmul.f32 %v157, %v166
  %v174 = vmul.f32 %v158, %v171
  %vm175 = vcmask 130048
  %v177 = vsel %vm175, %v151, 0
  %v180 = vsel %vm175, %v152, 0
  %182 = vmatprep.subr.mxu0 0.0
  %183 = vmatpush1.msra.mxu0 0.0
  %184 = vmatprep.subr.mxu0 0.0
  %185 = vmatpush1.msra.mxu0 0.0
  %186 = vmatprep.subr.mxu0 0.0
  %187 = vmatpush1.msra.mxu0 0.0
  %188 = vmatprep.subr.mxu0 0.0
  %189 = vmatpush1.msra.mxu0 0.0
  %190 = vmatprep.subr.mxu0 0.0
  %191 = vmatpush1.msra.mxu0 0.0
  %192 = vmatprep.subr.mxu0 0.0
  %193 = vmatpush1.msra.mxu0 0.0
  %194 = vmatprep.subr.mxu0 0.0
  %195 = vmatpush1.msra.mxu0 0.0
  %196 = vmatprep.subr.mxu0 0.0
  %197 = vmatpush1.msra.mxu0 0.0
  %198 = vmatprep.subr.mxu0 0.0
  %199 = vmatpush1.msra.mxu0 0.0
  %200 = vmatprep.subr.mxu0 0.0
  %201 = vmatpush1.msra.mxu0 0.0
  %202 = vmatprep.subr.mxu0 0.0
  %203 = vmatpush1.msra.mxu0 0.0
  %204 = vmatprep.subr.mxu0 0.0
  %205 = vmatpush1.msra.mxu0 0.0
  %206 = vmatprep.subr.mxu0 0.0
  %207 = vmatpush1.msra.mxu0 0.0
  %208 = vmatprep.subr.mxu0 0.0
  %209 = vmatpush1.msra.mxu0 0.0
  %210 = vmatprep.subr.mxu0 0.0
  %211 = vmatpush1.msra.mxu0 %v174
  %212 = vmatprep.subr.mxu0 0.0
  %213 = vmatpush1.msra.mxu0 %v173
  %214 = vmatprep.subr.mxu0 0.0
  %215 = vmatpush2.msra.mxu0 0.0
  %216 = vmatprep.subr.mxu0 0.0
  %217 = vmatpush2.msra.mxu0 0.0
  %218 = vmatprep.subr.mxu0 0.0
  %219 = vmatpush2.msra.mxu0 0.0
  %220 = vmatprep.subr.mxu0 0.0
  %221 = vmatpush2.msra.mxu0 0.0
  %222 = vmatprep.subr.mxu0 0.0
  %223 = vmatpush2.msra.mxu0 0.0
  %224 = vmatprep.subr.mxu0 0.0
  %225 = vmatpush2.msra.mxu0 0.0
  %226 = vmatprep.subr.mxu0 0.0
  %227 = vmatpush2.msra.mxu0 0.0
  %228 = vmatprep.subr.mxu0 0.0
  %229 = vmatpush2.msra.mxu0 0.0
  %230 = vmatprep.subr.mxu0 0.0
  %231 = vmatpush2.msra.mxu0 0.0
  %232 = vmatprep.subr.mxu0 0.0
  %233 = vmatpush2.msra.mxu0 0.0
  %234 = vmatprep.subr.mxu0 0.0
  %235 = vmatpush2.msra.mxu0 0.0
  %236 = vmatprep.subr.mxu0 0.0
  %237 = vmatpush2.msra.mxu0 0.0
  %238 = vmatprep.subr.mxu0 0.0
  %239 = vmatpush2.msra.mxu0 0.0
  %240 = vmatprep.subr.mxu0 0.0
  %241 = vmatpush2.msra.mxu0 0.0
  %242 = vmatprep.subr.mxu0 0.0
  %243 = vmatpush2.msra.mxu0 0.0
  %244 = vmatprep.subr.mxu0 0.0
  %245 = vmatpush2.msra.mxu0 0.0
  %246 = vmatprep.mubr.f32.mxu0 0.0
  %247 = vmatmul.mubr.f32.gmra.mxu0 %v177
  %v248 = vpop.f32.mrf.mxu0
  %v249 = vadd.f32 0.0, %v248
  %v250 = vpop.f32.mrf.mxu0
  %251 = vmatprep.mubr.f32.mxu0 0.0
  %252 = vmatmul.mubr.f32.gmra.mxu0 %v180
  %v253 = vpop.f32.mrf.mxu0
  %v254 = vadd.f32 0.0, %v253
  %v255 = vpop.f32.mrf.mxu0
  %256 = vdwg.mxu0
  %vm257 = vcmp.gt.f32.partialorder %v249, 0.5
  %vm258 = vcmp.gt.f32.partialorder %v254, 0.5
  %vm259 = vmor %vm257, %vm141
  %vm260 = vmor %vm258, %vm142
  %v261 = vsel %vm259, -1e+30, 0.0
  %v262 = vsel %vm260, -1e+30, 0.0
  %v263 = vld [vmem:[%s1 + $0x30] sm:$0x1]
  %v264 = vld [vmem:[%s1 + $0x38] sm:$0x1]
  %vm265 = vcmask 261120
  %v266 = vsel %vm265, %v133, 0.0
  %267 = vadd.xlane.f32.xlu0 %v266
  %v268 = vpop.xlane.xlu0 %267
  %v269 = vsel %vm265, %v138, 0.0
  %270 = vadd.xlane.f32.xlu0 %v269
  %v271 = vpop.xlane.xlu0 %270
  %v272 = vrcp.pop 32.0
  %v273 = vmul.f32 %v268, %v272
  %v274 = vmul.f32 %v271, %v272
  %v275 = vsub.f32 %v133, %v273
  %v276 = vsub.f32 %v138, %v274
  %v277 = vmul.f32 %v275, %v275
  %v278 = vmul.f32 %v276, %v276
  %v279 = vsel %vm265, %v277, 0.0
  %280 = vadd.xlane.f32.xlu0 %v279
  %v281 = vpop.xlane.xlu0 %280
  %v282 = vsel %vm265, %v278, 0.0
  %283 = vadd.xlane.f32.xlu0 %v282
  %v284 = vpop.xlane.xlu0 %283
  %v285 = vmul.f32 %v281, %v272
  %v286 = vmul.f32 %v284, %v272
  %v287 = vadd.f32 %v285, 1e-05
  %v288 = vadd.f32 %v286, 1e-05
  %v289 = vrsqrt.pop %v287
  %v290 = vrsqrt.pop %v288
  %v291 = vmul.f32 %v275, %v289
  %v292 = vmul.f32 %v276, %v290
  %v293 = vlaneseq
  %v294 = vshrl.u32 %v293, 7
  %v295 = vsub.s32 0, %v294
  %v296 = vrot.slane %v263, %v295
  %v297 = vmul.f32 %v291, %v296
  %v298 = vmul.f32 %v292, %v296
  %v299 = vlaneseq
  %v300 = vshrl.u32 %v299, 7
  %v301 = vsub.s32 0, %v300
  %v302 = vrot.slane %v264, %v301
  %v303 = vadd.f32 %v297, %v302
  %v304 = vadd.f32 %v298, %v302
  %v305 = vld [vmem:[%s2] sm:$0xff]
  %v306 = vld [vmem:[%s2 + $0x8] sm:$0xff]
  %v307 = vld [vmem:[%s2 + $0x10] sm:$0xff]
  %v308 = vld [vmem:[%s2 + $0x18] sm:$0xff]
  %v309 = vld [vmem:[%s2 + $0x20] sm:$0x1]
  %v310 = vlaneseq
  %v311 = vshrl.u32 %v310, 7
  %v312 = vsub.s32 0, %v311
  %v313 = vrot.slane %v309, %v312
  %v315 = vsel %vm265, %v303, 0
  %v318 = vsel %vm265, %v304, 0
  %320 = vmatprep.subr.mxu0 0.0
  %321 = vmatpush1.msra.mxu0 0.0
  %322 = vmatprep.subr.mxu0 0.0
  %323 = vmatpush1.msra.mxu0 0.0
  %324 = vmatprep.subr.mxu0 0.0
  %325 = vmatpush1.msra.mxu0 0.0
  %326 = vmatprep.subr.mxu0 0.0
  %327 = vmatpush1.msra.mxu0 0.0
  %328 = vmatprep.subr.mxu0 0.0
  %329 = vmatpush1.msra.mxu0 0.0
  %330 = vmatprep.subr.mxu0 0.0
  %331 = vmatpush1.msra.mxu0 0.0
  %332 = vmatprep.subr.mxu0 0.0
  %333 = vmatpush1.msra.mxu0 0.0
  %334 = vmatprep.subr.mxu0 0.0
  %335 = vmatpush1.msra.mxu0 0.0
  %336 = vmatprep.subr.mxu0 0.0
  %337 = vmatpush1.msra.mxu0 0.0
  %338 = vmatprep.subr.mxu0 0.0
  %339 = vmatpush1.msra.mxu0 0.0
  %340 = vmatprep.subr.mxu0 0.0
  %341 = vmatpush1.msra.mxu0 0.0
  %342 = vmatprep.subr.mxu0 0.0
  %343 = vmatpush1.msra.mxu0 0.0
  %344 = vmatprep.subr.mxu0 0.0
  %345 = vmatpush1.msra.mxu0 %v308
  %346 = vmatprep.subr.mxu0 0.0
  %347 = vmatpush1.msra.mxu0 %v307
  %348 = vmatprep.subr.mxu0 0.0
  %349 = vmatpush1.msra.mxu0 %v306
  %350 = vmatprep.subr.mxu0 0.0
  %351 = vmatpush1.msra.mxu0 %v305
  %352 = vmatprep.subr.mxu0 0.0
  %353 = vmatpush2.msra.mxu0 0.0
  %354 = vmatprep.subr.mxu0 0.0
  %355 = vmatpush2.msra.mxu0 0.0
  %356 = vmatprep.subr.mxu0 0.0
  %357 = vmatpush2.msra.mxu0 0.0
  %358 = vmatprep.subr.mxu0 0.0
  %359 = vmatpush2.msra.mxu0 0.0
  %360 = vmatprep.subr.mxu0 0.0
  %361 = vmatpush2.msra.mxu0 0.0
  %362 = vmatprep.subr.mxu0 0.0
  %363 = vmatpush2.msra.mxu0 0.0
  %364 = vmatprep.subr.mxu0 0.0
  %365 = vmatpush2.msra.mxu0 0.0
  %366 = vmatprep.subr.mxu0 0.0
  %367 = vmatpush2.msra.mxu0 0.0
  %368 = vmatprep.subr.mxu0 0.0
  %369 = vmatpush2.msra.mxu0 0.0
  %370 = vmatprep.subr.mxu0 0.0
  %371 = vmatpush2.msra.mxu0 0.0
  %372 = vmatprep.subr.mxu0 0.0
  %373 = vmatpush2.msra.mxu0 0.0
  %374 = vmatprep.subr.mxu0 0.0
  %375 = vmatpush2.msra.mxu0 0.0
  %376 = vmatprep.subr.mxu0 0.0
  %377 = vmatpush2.msra.mxu0 0.0
  %378 = vmatprep.subr.mxu0 0.0
  %379 = vmatpush2.msra.mxu0 0.0
  %380 = vmatprep.subr.mxu0 0.0
  %381 = vmatpush2.msra.mxu0 0.0
  %382 = vmatprep.subr.mxu0 0.0
  %383 = vmatpush2.msra.mxu0 0.0
  %384 = vmatprep.mubr.f32.mxu0 0.0
  %385 = vmatmul.mubr.f32.gmra.mxu0 %v315
  %v386 = vpop.f32.mrf.mxu0
  %v387 = vadd.f32 %v313, %v386
  %v388 = vpop.f32.mrf.mxu0
  %389 = vmatprep.mubr.f32.mxu0 0.0
  %390 = vmatmul.mubr.f32.gmra.mxu0 %v318
  %v391 = vpop.f32.mrf.mxu0
  %v392 = vadd.f32 %v313, %v391
  %v393 = vpop.f32.mrf.mxu0
  %394 = vdwg.mxu0
  %396 = vrot.lane.b32.xlu0 %v387, 96
  %v397 = vpop.permute.xlu0 %396
  %vm398 = vcmask 64512
  %v399 = vsel %vm398, %v387, 0
  %v401 = vsel %vm398, %v397, 0
  %403 = vmatprep.subr.mxu0 0.0
  %404 = vmatpush1.xpose.msra.mxu0 0.0
  %405 = vmatprep.subr.mxu0 0.0
  %406 = vmatpush1.xpose.msra.mxu0 0.0
  %407 = vmatprep.subr.mxu0 0.0
  %408 = vmatpush1.xpose.msra.mxu0 0.0
  %409 = vmatprep.subr.mxu0 0.0
  %410 = vmatpush1.xpose.msra.mxu0 0.0
  %411 = vmatprep.subr.mxu0 0.0
  %412 = vmatpush1.xpose.msra.mxu0 0.0
  %413 = vmatprep.subr.mxu0 0.0
  %414 = vmatpush1.xpose.msra.mxu0 0.0
  %415 = vmatprep.subr.mxu0 0.0
  %416 = vmatpush1.xpose.msra.mxu0 0.0
  %417 = vmatprep.subr.mxu0 0.0
  %418 = vmatpush1.xpose.msra.mxu0 0.0
  %419 = vmatprep.subr.mxu0 0.0
  %420 = vmatpush1.xpose.msra.mxu0 0.0
  %421 = vmatprep.subr.mxu0 0.0
  %422 = vmatpush1.xpose.msra.mxu0 0.0
  %423 = vmatprep.subr.mxu0 0.0
  %424 = vmatpush1.xpose.msra.mxu0 0.0
  %425 = vmatprep.subr.mxu0 0.0
  %426 = vmatpush1.xpose.msra.mxu0 0.0
  %427 = vmatprep.subr.mxu0 0.0
  %428 = vmatpush1.xpose.msra.mxu0 0.0
  %429 = vmatprep.subr.mxu0 0.0
  %430 = vmatpush1.xpose.msra.mxu0 0.0
  %431 = vmatprep.subr.mxu0 0.0
  %432 = vmatpush1.xpose.msra.mxu0 0.0
  %433 = vmatprep.subr.mxu0 0.0
  %434 = vmatpush1.xpose.msra.mxu0 %v401
  %435 = vmatprep.subr.mxu0 0.0
  %436 = vmatpush2.xpose.msra.mxu0 0.0
  %437 = vmatprep.subr.mxu0 0.0
  %438 = vmatpush2.xpose.msra.mxu0 0.0
  %439 = vmatprep.subr.mxu0 0.0
  %440 = vmatpush2.xpose.msra.mxu0 0.0
  %441 = vmatprep.subr.mxu0 0.0
  %442 = vmatpush2.xpose.msra.mxu0 0.0
  %443 = vmatprep.subr.mxu0 0.0
  %444 = vmatpush2.xpose.msra.mxu0 0.0
  %445 = vmatprep.subr.mxu0 0.0
  %446 = vmatpush2.xpose.msra.mxu0 0.0
  %447 = vmatprep.subr.mxu0 0.0
  %448 = vmatpush2.xpose.msra.mxu0 0.0
  %449 = vmatprep.subr.mxu0 0.0
  %450 = vmatpush2.xpose.msra.mxu0 0.0
  %451 = vmatprep.subr.mxu0 0.0
  %452 = vmatpush2.xpose.msra.mxu0 0.0
  %453 = vmatprep.subr.mxu0 0.0
  %454 = vmatpush2.xpose.msra.mxu0 0.0
  %455 = vmatprep.subr.mxu0 0.0
  %456 = vmatpush2.xpose.msra.mxu0 0.0
  %457 = vmatprep.subr.mxu0 0.0
  %458 = vmatpush2.xpose.msra.mxu0 0.0
  %459 = vmatprep.subr.mxu0 0.0
  %460 = vmatpush2.xpose.msra.mxu0 0.0
  %461 = vmatprep.subr.mxu0 0.0
  %462 = vmatpush2.xpose.msra.mxu0 0.0
  %463 = vmatprep.subr.mxu0 0.0
  %464 = vmatpush2.xpose.msra.mxu0 0.0
  %465 = vmatprep.subr.mxu0 0.0
  %466 = vmatpush2.xpose.msra.mxu0 0.0
  %467 = vmatprep.mubr.f32.mxu0 0.0
  %468 = vmatmul.mubr.f32.gmra.mxu0 %v399
  %v469 = vpop.f32.mrf.mxu0
  %v470 = vadd.f32 0.0, %v469
  %v471 = vpop.f32.mrf.mxu0
  %472 = vdwg.mxu0
  %474 = vrot.lane.b32.xlu0 %v392, 96
  %v475 = vpop.permute.xlu0 %474
  %v476 = vsel %vm398, %v392, 0
  %v478 = vsel %vm398, %v475, 0
  %480 = vmatprep.subr.mxu0 0.0
  %481 = vmatpush1.xpose.msra.mxu0 0.0
  %482 = vmatprep.subr.mxu0 0.0
  %483 = vmatpush1.xpose.msra.mxu0 0.0
  %484 = vmatprep.subr.mxu0 0.0
  %485 = vmatpush1.xpose.msra.mxu0 0.0
  %486 = vmatprep.subr.mxu0 0.0
  %487 = vmatpush1.xpose.msra.mxu0 0.0
  %488 = vmatprep.subr.mxu0 0.0
  %489 = vmatpush1.xpose.msra.mxu0 0.0
  %490 = vmatprep.subr.mxu0 0.0
  %491 = vmatpush1.xpose.msra.mxu0 0.0
  %492 = vmatprep.subr.mxu0 0.0
  %493 = vmatpush1.xpose.msra.mxu0 0.0
  %494 = vmatprep.subr.mxu0 0.0
  %495 = vmatpush1.xpose.msra.mxu0 0.0
  %496 = vmatprep.subr.mxu0 0.0
  %497 = vmatpush1.xpose.msra.mxu0 0.0
  %498 = vmatprep.subr.mxu0 0.0
  %499 = vmatpush1.xpose.msra.mxu0 0.0
  %500 = vmatprep.subr.mxu0 0.0
  %501 = vmatpush1.xpose.msra.mxu0 0.0
  %502 = vmatprep.subr.mxu0 0.0
  %503 = vmatpush1.xpose.msra.mxu0 0.0
  %504 = vmatprep.subr.mxu0 0.0
  %505 = vmatpush1.xpose.msra.mxu0 0.0
  %506 = vmatprep.subr.mxu0 0.0
  %507 = vmatpush1.xpose.msra.mxu0 0.0
  %508 = vmatprep.subr.mxu0 0.0
  %509 = vmatpush1.xpose.msra.mxu0 0.0
  %510 = vmatprep.subr.mxu0 0.0
  %511 = vmatpush1.xpose.msra.mxu0 %v478
  %512 = vmatprep.subr.mxu0 0.0
  %513 = vmatpush2.xpose.msra.mxu0 0.0
  %514 = vmatprep.subr.mxu0 0.0
  %515 = vmatpush2.xpose.msra.mxu0 0.0
  %516 = vmatprep.subr.mxu0 0.0
  %517 = vmatpush2.xpose.msra.mxu0 0.0
  %518 = vmatprep.subr.mxu0 0.0
  %519 = vmatpush2.xpose.msra.mxu0 0.0
  %520 = vmatprep.subr.mxu0 0.0
  %521 = vmatpush2.xpose.msra.mxu0 0.0
  %522 = vmatprep.subr.mxu0 0.0
  %523 = vmatpush2.xpose.msra.mxu0 0.0
  %524 = vmatprep.subr.mxu0 0.0
  %525 = vmatpush2.xpose.msra.mxu0 0.0
  %526 = vmatprep.subr.mxu0 0.0
  %527 = vmatpush2.xpose.msra.mxu0 0.0
  %528 = vmatprep.subr.mxu0 0.0
  %529 = vmatpush2.xpose.msra.mxu0 0.0
  %530 = vmatprep.subr.mxu0 0.0
  %531 = vmatpush2.xpose.msra.mxu0 0.0
  %532 = vmatprep.subr.mxu0 0.0
  %533 = vmatpush2.xpose.msra.mxu0 0.0
  %534 = vmatprep.subr.mxu0 0.0
  %535 = vmatpush2.xpose.msra.mxu0 0.0
  %536 = vmatprep.subr.mxu0 0.0
  %537 = vmatpush2.xpose.msra.mxu0 0.0
  %538 = vmatprep.subr.mxu0 0.0
  %539 = vmatpush2.xpose.msra.mxu0 0.0
  %540 = vmatprep.subr.mxu0 0.0
  %541 = vmatpush2.xpose.msra.mxu0 0.0
  %542 = vmatprep.subr.mxu0 0.0
  %543 = vmatpush2.xpose.msra.mxu0 0.0
  %544 = vmatprep.mubr.f32.mxu0 0.0
  %545 = vmatmul.mubr.f32.gmra.mxu0 %v476
  %v546 = vpop.f32.mrf.mxu0
  %v547 = vadd.f32 0.0, %v546
  %v548 = vpop.f32.mrf.mxu0
  %549 = vdwg.mxu0
  %v550 = vmul.f32 %v470, 0.35355338
  %v551 = vmul.f32 %v547, 0.35355338
  %v552 = vadd.f32 %v550, %v261
  %v553 = vadd.f32 %v551, %v262
  %v554 = vsel %vm398, %v552, -inf
  %555 = vmax.xlane.f32.xlu0 %v554
  %v556 = vpop.xlane.xlu0 %555
  %v557 = vsel %vm398, %v553, -inf
  %558 = vmax.xlane.f32.xlu0 %v557
  %v559 = vpop.xlane.xlu0 %558
  %v560 = vsub.f32 %v552, %v556
  %v561 = vsub.f32 %v553, %v559
  %v562 = vmul.f32 %v560, 1.442695
  %v563 = vpow.pop %v562
  %v564 = vmul.f32 %v561, 1.442695
  %v565 = vpow.pop %v564
  %v566 = vsel %vm398, %v563, 0.0
  %567 = vadd.xlane.f32.xlu0 %v566
  %v568 = vpop.xlane.xlu0 %567
  %v569 = vsel %vm398, %v565, 0.0
  %570 = vadd.xlane.f32.xlu0 %v569
  %v571 = vpop.xlane.xlu0 %570
  %v572 = vrcp.pop %v568
  %v573 = vmul.f32 %v563, %v572
  %v574 = vrcp.pop %v571
  %v575 = vmul.f32 %v565, %v574
  %576 = vrot.lane.b32.xlu0 %v387, 64
  %v577 = vpop.permute.xlu0 %576
  %v580 = vsel %vm398, %v573, 0
  %582 = vmatprep.subr.mxu0 0.0
  %583 = vmatpush1.msra.mxu0 0.0
  %584 = vmatprep.subr.mxu0 0.0
  %585 = vmatpush1.msra.mxu0 0.0
  %586 = vmatprep.subr.mxu0 0.0
  %587 = vmatpush1.msra.mxu0 0.0
  %588 = vmatprep.subr.mxu0 0.0
  %589 = vmatpush1.msra.mxu0 0.0
  %590 = vmatprep.subr.mxu0 0.0
  %591 = vmatpush1.msra.mxu0 0.0
  %592 = vmatprep.subr.mxu0 0.0
  %593 = vmatpush1.msra.mxu0 0.0
  %594 = vmatprep.subr.mxu0 0.0
  %595 = vmatpush1.msra.mxu0 0.0
  %596 = vmatprep.subr.mxu0 0.0
  %597 = vmatpush1.msra.mxu0 0.0
  %598 = vmatprep.subr.mxu0 0.0
  %599 = vmatpush1.msra.mxu0 0.0
  %600 = vmatprep.subr.mxu0 0.0
  %601 = vmatpush1.msra.mxu0 0.0
  %602 = vmatprep.subr.mxu0 0.0
  %603 = vmatpush1.msra.mxu0 0.0
  %604 = vmatprep.subr.mxu0 0.0
  %605 = vmatpush1.msra.mxu0 0.0
  %606 = vmatprep.subr.mxu0 0.0
  %607 = vmatpush1.msra.mxu0 0.0
  %608 = vmatprep.subr.mxu0 0.0
  %609 = vmatpush1.msra.mxu0 0.0
  %610 = vmatprep.subr.mxu0 0.0
  %611 = vmatpush1.msra.mxu0 0.0
  %612 = vmatprep.subr.mxu0 0.0
  %613 = vmatpush1.msra.mxu0 %v577
  %614 = vmatprep.subr.mxu0 0.0
  %615 = vmatpush2.msra.mxu0 0.0
  %616 = vmatprep.subr.mxu0 0.0
  %617 = vmatpush2.msra.mxu0 0.0
  %618 = vmatprep.subr.mxu0 0.0
  %619 = vmatpush2.msra.mxu0 0.0
  %620 = vmatprep.subr.mxu0 0.0
  %621 = vmatpush2.msra.mxu0 0.0
  %622 = vmatprep.subr.mxu0 0.0
  %623 = vmatpush2.msra.mxu0 0.0
  %624 = vmatprep.subr.mxu0 0.0
  %625 = vmatpush2.msra.mxu0 0.0
  %626 = vmatprep.subr.mxu0 0.0
  %627 = vmatpush2.msra.mxu0 0.0
  %628 = vmatprep.subr.mxu0 0.0
  %629 = vmatpush2.msra.mxu0 0.0
  %630 = vmatprep.subr.mxu0 0.0
  %631 = vmatpush2.msra.mxu0 0.0
  %632 = vmatprep.subr.mxu0 0.0
  %633 = vmatpush2.msra.mxu0 0.0
  %634 = vmatprep.subr.mxu0 0.0
  %635 = vmatpush2.msra.mxu0 0.0
  %636 = vmatprep.subr.mxu0 0.0
  %637 = vmatpush2.msra.mxu0 0.0
  %638 = vmatprep.subr.mxu0 0.0
  %639 = vmatpush2.msra.mxu0 0.0
  %640 = vmatprep.subr.mxu0 0.0
  %641 = vmatpush2.msra.mxu0 0.0
  %642 = vmatprep.subr.mxu0 0.0
  %643 = vmatpush2.msra.mxu0 0.0
  %644 = vmatprep.subr.mxu0 0.0
  %645 = vmatpush2.msra.mxu0 0.0
  %646 = vmatprep.mubr.f32.mxu0 0.0
  %647 = vmatmul.mubr.f32.gmra.mxu0 %v580
  %v648 = vpop.f32.mrf.mxu0
  %v649 = vadd.f32 0.0, %v648
  %v650 = vpop.f32.mrf.mxu0
  %651 = vdwg.mxu0
  %652 = vrot.lane.b32.xlu0 %v392, 64
  %v653 = vpop.permute.xlu0 %652
  %v656 = vsel %vm398, %v575, 0
  %658 = vmatprep.subr.mxu0 0.0
  %659 = vmatpush1.msra.mxu0 0.0
  %660 = vmatprep.subr.mxu0 0.0
  %661 = vmatpush1.msra.mxu0 0.0
  %662 = vmatprep.subr.mxu0 0.0
  %663 = vmatpush1.msra.mxu0 0.0
  %664 = vmatprep.subr.mxu0 0.0
  %665 = vmatpush1.msra.mxu0 0.0
  %666 = vmatprep.subr.mxu0 0.0
  %667 = vmatpush1.msra.mxu0 0.0
  %668 = vmatprep.subr.mxu0 0.0
  %669 = vmatpush1.msra.mxu0 0.0
  %670 = vmatprep.subr.mxu0 0.0
  %671 = vmatpush1.msra.mxu0 0.0
  %672 = vmatprep.subr.mxu0 0.0
  %673 = vmatpush1.msra.mxu0 0.0
  %674 = vmatprep.subr.mxu0 0.0
  %675 = vmatpush1.msra.mxu0 0.0
  %676 = vmatprep.subr.mxu0 0.0
  %677 = vmatpush1.msra.mxu0 0.0
  %678 = vmatprep.subr.mxu0 0.0
  %679 = vmatpush1.msra.mxu0 0.0
  %680 = vmatprep.subr.mxu0 0.0
  %681 = vmatpush1.msra.mxu0 0.0
  %682 = vmatprep.subr.mxu0 0.0
  %683 = vmatpush1.msra.mxu0 0.0
  %684 = vmatprep.subr.mxu0 0.0
  %685 = vmatpush1.msra.mxu0 0.0
  %686 = vmatprep.subr.mxu0 0.0
  %687 = vmatpush1.msra.mxu0 0.0
  %688 = vmatprep.subr.mxu0 0.0
  %689 = vmatpush1.msra.mxu0 %v653
  %690 = vmatprep.subr.mxu0 0.0
  %691 = vmatpush2.msra.mxu0 0.0
  %692 = vmatprep.subr.mxu0 0.0
  %693 = vmatpush2.msra.mxu0 0.0
  %694 = vmatprep.subr.mxu0 0.0
  %695 = vmatpush2.msra.mxu0 0.0
  %696 = vmatprep.subr.mxu0 0.0
  %697 = vmatpush2.msra.mxu0 0.0
  %698 = vmatprep.subr.mxu0 0.0
  %699 = vmatpush2.msra.mxu0 0.0
  %700 = vmatprep.subr.mxu0 0.0
  %701 = vmatpush2.msra.mxu0 0.0
  %702 = vmatprep.subr.mxu0 0.0
  %703 = vmatpush2.msra.mxu0 0.0
  %704 = vmatprep.subr.mxu0 0.0
  %705 = vmatpush2.msra.mxu0 0.0
  %706 = vmatprep.subr.mxu0 0.0
  %707 = vmatpush2.msra.mxu0 0.0
  %708 = vmatprep.subr.mxu0 0.0
  %709 = vmatpush2.msra.mxu0 0.0
  %710 = vmatprep.subr.mxu0 0.0
  %711 = vmatpush2.msra.mxu0 0.0
  %712 = vmatprep.subr.mxu0 0.0
  %713 = vmatpush2.msra.mxu0 0.0
  %714 = vmatprep.subr.mxu0 0.0
  %715 = vmatpush2.msra.mxu0 0.0
  %716 = vmatprep.subr.mxu0 0.0
  %717 = vmatpush2.msra.mxu0 0.0
  %718 = vmatprep.subr.mxu0 0.0
  %719 = vmatpush2.msra.mxu0 0.0
  %720 = vmatprep.subr.mxu0 0.0
  %721 = vmatpush2.msra.mxu0 0.0
  %722 = vmatprep.mubr.f32.mxu0 0.0
  %723 = vmatmul.mubr.f32.gmra.mxu0 %v656
  %v724 = vpop.f32.mrf.mxu0
  %v725 = vadd.f32 0.0, %v724
  %v726 = vpop.f32.mrf.mxu0
  %727 = vdwg.mxu0
  %728 = vrot.lane.b32.xlu0 %v387, 120
  %v729 = vpop.permute.xlu0 %728
  %730 = vrot.lane.b32.xlu0 %v387, 88
  %v731 = vpop.permute.xlu0 %730
  %v732 = vsel %vm398, %v729, 0
  %v734 = vsel %vm398, %v731, 0
  %736 = vmatprep.subr.mxu0 0.0
  %737 = vmatpush1.xpose.msra.mxu0 0.0
  %738 = vmatprep.subr.mxu0 0.0
  %739 = vmatpush1.xpose.msra.mxu0 0.0
  %740 = vmatprep.subr.mxu0 0.0
  %741 = vmatpush1.xpose.msra.mxu0 0.0
  %742 = vmatprep.subr.mxu0 0.0
  %743 = vmatpush1.xpose.msra.mxu0 0.0
  %744 = vmatprep.subr.mxu0 0.0
  %745 = vmatpush1.xpose.msra.mxu0 0.0
  %746 = vmatprep.subr.mxu0 0.0
  %747 = vmatpush1.xpose.msra.mxu0 0.0
  %748 = vmatprep.subr.mxu0 0.0
  %749 = vmatpush1.xpose.msra.mxu0 0.0
  %750 = vmatprep.subr.mxu0 0.0
  %751 = vmatpush1.xpose.msra.mxu0 0.0
  %752 = vmatprep.subr.mxu0 0.0
  %753 = vmatpush1.xpose.msra.mxu0 0.0
  %754 = vmatprep.subr.mxu0 0.0
  %755 = vmatpush1.xpose.msra.mxu0 0.0
  %756 = vmatprep.subr.mxu0 0.0
  %757 = vmatpush1.xpose.msra.mxu0 0.0
  %758 = vmatprep.subr.mxu0 0.0
  %759 = vmatpush1.xpose.msra.mxu0 0.0
  %760 = vmatprep.subr.mxu0 0.0
  %761 = vmatpush1.xpose.msra.mxu0 0.0
  %762 = vmatprep.subr.mxu0 0.0
  %763 = vmatpush1.xpose.msra.mxu0 0.0
  %764 = vmatprep.subr.mxu0 0.0
  %765 = vmatpush1.xpose.msra.mxu0 0.0
  %766 = vmatprep.subr.mxu0 0.0
  %767 = vmatpush1.xpose.msra.mxu0 %v734
  %768 = vmatprep.subr.mxu0 0.0
  %769 = vmatpush2.xpose.msra.mxu0 0.0
  %770 = vmatprep.subr.mxu0 0.0
  %771 = vmatpush2.xpose.msra.mxu0 0.0
  %772 = vmatprep.subr.mxu0 0.0
  %773 = vmatpush2.xpose.msra.mxu0 0.0
  %774 = vmatprep.subr.mxu0 0.0
  %775 = vmatpush2.xpose.msra.mxu0 0.0
  %776 = vmatprep.subr.mxu0 0.0
  %777 = vmatpush2.xpose.msra.mxu0 0.0
  %778 = vmatprep.subr.mxu0 0.0
  %779 = vmatpush2.xpose.msra.mxu0 0.0
  %780 = vmatprep.subr.mxu0 0.0
  %781 = vmatpush2.xpose.msra.mxu0 0.0
  %782 = vmatprep.subr.mxu0 0.0
  %783 = vmatpush2.xpose.msra.mxu0 0.0
  %784 = vmatprep.subr.mxu0 0.0
  %785 = vmatpush2.xpose.msra.mxu0 0.0
  %786 = vmatprep.subr.mxu0 0.0
  %787 = vmatpush2.xpose.msra.mxu0 0.0
  %788 = vmatprep.subr.mxu0 0.0
  %789 = vmatpush2.xpose.msra.mxu0 0.0
  %790 = vmatprep.subr.mxu0 0.0
  %791 = vmatpush2.xpose.msra.mxu0 0.0
  %792 = vmatprep.subr.mxu0 0.0
  %793 = vmatpush2.xpose.msra.mxu0 0.0
  %794 = vmatprep.subr.mxu0 0.0
  %795 = vmatpush2.xpose.msra.mxu0 0.0
  %796 = vmatprep.subr.mxu0 0.0
  %797 = vmatpush2.xpose.msra.mxu0 0.0
  %798 = vmatprep.subr.mxu0 0.0
  %799 = vmatpush2.xpose.msra.mxu0 0.0
  %800 = vmatprep.mubr.f32.mxu0 0.0
  %801 = vmatmul.mubr.f32.gmra.mxu0 %v732
  %v802 = vpop.f32.mrf.mxu0
  %v803 = vadd.f32 0.0, %v802
  %v804 = vpop.f32.mrf.mxu0
  %805 = vdwg.mxu0
  %806 = vrot.lane.b32.xlu0 %v392, 120
  %v807 = vpop.permute.xlu0 %806
  %808 = vrot.lane.b32.xlu0 %v392, 88
  %v809 = vpop.permute.xlu0 %808
  %v810 = vsel %vm398, %v807, 0
  %v812 = vsel %vm398, %v809, 0
  %814 = vmatprep.subr.mxu0 0.0
  %815 = vmatpush1.xpose.msra.mxu0 0.0
  %816 = vmatprep.subr.mxu0 0.0
  %817 = vmatpush1.xpose.msra.mxu0 0.0
  %818 = vmatprep.subr.mxu0 0.0
  %819 = vmatpush1.xpose.msra.mxu0 0.0
  %820 = vmatprep.subr.mxu0 0.0
  %821 = vmatpush1.xpose.msra.mxu0 0.0
  %822 = vmatprep.subr.mxu0 0.0
  %823 = vmatpush1.xpose.msra.mxu0 0.0
  %824 = vmatprep.subr.mxu0 0.0
  %825 = vmatpush1.xpose.msra.mxu0 0.0
  %826 = vmatprep.subr.mxu0 0.0
  %827 = vmatpush1.xpose.msra.mxu0 0.0
  %828 = vmatprep.subr.mxu0 0.0
  %829 = vmatpush1.xpose.msra.mxu0 0.0
  %830 = vmatprep.subr.mxu0 0.0
  %831 = vmatpush1.xpose.msra.mxu0 0.0
  %832 = vmatprep.subr.mxu0 0.0
  %833 = vmatpush1.xpose.msra.mxu0 0.0
  %834 = vmatprep.subr.mxu0 0.0
  %835 = vmatpush1.xpose.msra.mxu0 0.0
  %836 = vmatprep.subr.mxu0 0.0
  %837 = vmatpush1.xpose.msra.mxu0 0.0
  %838 = vmatprep.subr.mxu0 0.0
  %839 = vmatpush1.xpose.msra.mxu0 0.0
  %840 = vmatprep.subr.mxu0 0.0
  %841 = vmatpush1.xpose.msra.mxu0 0.0
  %842 = vmatprep.subr.mxu0 0.0
  %843 = vmatpush1.xpose.msra.mxu0 0.0
  %844 = vmatprep.subr.mxu0 0.0
  %845 = vmatpush1.xpose.msra.mxu0 %v812
  %846 = vmatprep.subr.mxu0 0.0
  %847 = vmatpush2.xpose.msra.mxu0 0.0
  %848 = vmatprep.subr.mxu0 0.0
  %849 = vmatpush2.xpose.msra.mxu0 0.0
  %850 = vmatprep.subr.mxu0 0.0
  %851 = vmatpush2.xpose.msra.mxu0 0.0
  %852 = vmatprep.subr.mxu0 0.0
  %853 = vmatpush2.xpose.msra.mxu0 0.0
  %854 = vmatprep.subr.mxu0 0.0
  %855 = vmatpush2.xpose.msra.mxu0 0.0
  %856 = vmatprep.subr.mxu0 0.0
  %857 = vmatpush2.xpose.msra.mxu0 0.0
  %858 = vmatprep.subr.mxu0 0.0
  %859 = vmatpush2.xpose.msra.mxu0 0.0
  %860 = vmatprep.subr.mxu0 0.0
  %861 = vmatpush2.xpose.msra.mxu0 0.0
  %862 = vmatprep.subr.mxu0 0.0
  %863 = vmatpush2.xpose.msra.mxu0 0.0
  %864 = vmatprep.subr.mxu0 0.0
  %865 = vmatpush2.xpose.msra.mxu0 0.0
  %866 = vmatprep.subr.mxu0 0.0
  %867 = vmatpush2.xpose.msra.mxu0 0.0
  %868 = vmatprep.subr.mxu0 0.0
  %869 = vmatpush2.xpose.msra.mxu0 0.0
  %870 = vmatprep.subr.mxu0 0.0
  %871 = vmatpush2.xpose.msra.mxu0 0.0
  %872 = vmatprep.subr.mxu0 0.0
  %873 = vmatpush2.xpose.msra.mxu0 0.0
  %874 = vmatprep.subr.mxu0 0.0
  %875 = vmatpush2.xpose.msra.mxu0 0.0
  %876 = vmatprep.subr.mxu0 0.0
  %877 = vmatpush2.xpose.msra.mxu0 0.0
  %878 = vmatprep.mubr.f32.mxu0 0.0
  %879 = vmatmul.mubr.f32.gmra.mxu0 %v810
  %v880 = vpop.f32.mrf.mxu0
  %v881 = vadd.f32 0.0, %v880
  %v882 = vpop.f32.mrf.mxu0
  %883 = vdwg.mxu0
  %v884 = vmul.f32 %v803, 0.35355338
  %v885 = vmul.f32 %v881, 0.35355338
  %v886 = vadd.f32 %v884, %v261
  %v887 = vadd.f32 %v885, %v262
  %v888 = vsel %vm398, %v886, -inf
  %889 = vmax.xlane.f32.xlu0 %v888
  %v890 = vpop.xlane.xlu0 %889
  %v891 = vsel %vm398, %v887, -inf
  %892 = vmax.xlane.f32.xlu0 %v891
  %v893 = vpop.xlane.xlu0 %892
  %v894 = vsub.f32 %v886, %v890
  %v895 = vsub.f32 %v887, %v893
  %v896 = vmul.f32 %v894, 1.442695
  %v897 = vpow.pop %v896
  %v898 = vmul.f32 %v895, 1.442695
  %v899 = vpow.pop %v898
  %v900 = vsel %vm398, %v897, 0.0
  %901 = vadd.xlane.f32.xlu0 %v900
  %v902 = vpop.xlane.xlu0 %901
  %v903 = vsel %vm398, %v899, 0.0
  %904 = vadd.xlane.f32.xlu0 %v903
  %v905 = vpop.xlane.xlu0 %904
  %v906 = vrcp.pop %v902
  %v907 = vmul.f32 %v897, %v906
  %v908 = vrcp.pop %v905
  %v909 = vmul.f32 %v899, %v908
  %910 = vrot.lane.b32.xlu0 %v387, 56
  %v911 = vpop.permute.xlu0 %910
  %v914 = vsel %vm398, %v907, 0
  %916 = vmatprep.subr.mxu0 0.0
  %917 = vmatpush1.msra.mxu0 0.0
  %918 = vmatprep.subr.mxu0 0.0
  %919 = vmatpush1.msra.mxu0 0.0
  %920 = vmatprep.subr.mxu0 0.0
  %921 = vmatpush1.msra.mxu0 0.0
  %922 = vmatprep.subr.mxu0 0.0
  %923 = vmatpush1.msra.mxu0 0.0
  %924 = vmatprep.subr.mxu0 0.0
  %925 = vmatpush1.msra.mxu0 0.0
  %926 = vmatprep.subr.mxu0 0.0
  %927 = vmatpush1.msra.mxu0 0.0
  %928 = vmatprep.subr.mxu0 0.0
  %929 = vmatpush1.msra.mxu0 0.0
  %930 = vmatprep.subr.mxu0 0.0
  %931 = vmatpush1.msra.mxu0 0.0
  %932 = vmatprep.subr.mxu0 0.0
  %933 = vmatpush1.msra.mxu0 0.0
  %934 = vmatprep.subr.mxu0 0.0
  %935 = vmatpush1.msra.mxu0 0.0
  %936 = vmatprep.subr.mxu0 0.0
  %937 = vmatpush1.msra.mxu0 0.0
  %938 = vmatprep.subr.mxu0 0.0
  %939 = vmatpush1.msra.mxu0 0.0
  %940 = vmatprep.subr.mxu0 0.0
  %941 = vmatpush1.msra.mxu0 0.0
  %942 = vmatprep.subr.mxu0 0.0
  %943 = vmatpush1.msra.mxu0 0.0
  %944 = vmatprep.subr.mxu0 0.0
  %945 = vmatpush1.msra.mxu0 0.0
  %946 = vmatprep.subr.mxu0 0.0
  %947 = vmatpush1.msra.mxu0 %v911
  %948 = vmatprep.subr.mxu0 0.0
  %949 = vmatpush2.msra.mxu0 0.0
  %950 = vmatprep.subr.mxu0 0.0
  %951 = vmatpush2.msra.mxu0 0.0
  %952 = vmatprep.subr.mxu0 0.0
  %953 = vmatpush2.msra.mxu0 0.0
  %954 = vmatprep.subr.mxu0 0.0
  %955 = vmatpush2.msra.mxu0 0.0
  %956 = vmatprep.subr.mxu0 0.0
  %957 = vmatpush2.msra.mxu0 0.0
  %958 = vmatprep.subr.mxu0 0.0
  %959 = vmatpush2.msra.mxu0 0.0
  %960 = vmatprep.subr.mxu0 0.0
  %961 = vmatpush2.msra.mxu0 0.0
  %962 = vmatprep.subr.mxu0 0.0
  %963 = vmatpush2.msra.mxu0 0.0
  %964 = vmatprep.subr.mxu0 0.0
  %965 = vmatpush2.msra.mxu0 0.0
  %966 = vmatprep.subr.mxu0 0.0
  %967 = vmatpush2.msra.mxu0 0.0
  %968 = vmatprep.subr.mxu0 0.0
  %969 = vmatpush2.msra.mxu0 0.0
  %970 = vmatprep.subr.mxu0 0.0
  %971 = vmatpush2.msra.mxu0 0.0
  %972 = vmatprep.subr.mxu0 0.0
  %973 = vmatpush2.msra.mxu0 0.0
  %974 = vmatprep.subr.mxu0 0.0
  %975 = vmatpush2.msra.mxu0 0.0
  %976 = vmatprep.subr.mxu0 0.0
  %977 = vmatpush2.msra.mxu0 0.0
  %978 = vmatprep.subr.mxu0 0.0
  %979 = vmatpush2.msra.mxu0 0.0
  %980 = vmatprep.mubr.f32.mxu0 0.0
  %981 = vmatmul.mubr.f32.gmra.mxu0 %v914
  %v982 = vpop.f32.mrf.mxu0
  %v983 = vadd.f32 0.0, %v982
  %v984 = vpop.f32.mrf.mxu0
  %985 = vdwg.mxu0
  %986 = vrot.lane.b32.xlu0 %v392, 56
  %v987 = vpop.permute.xlu0 %986
  %v990 = vsel %vm398, %v909, 0
  %992 = vmatprep.subr.mxu0 0.0
  %993 = vmatpush1.msra.mxu0 0.0
  %994 = vmatprep.subr.mxu0 0.0
  %995 = vmatpush1.msra.mxu0 0.0
  %996 = vmatprep.subr.mxu0 0.0
  %997 = vmatpush1.msra.mxu0 0.0
  %998 = vmatprep.subr.mxu0 0.0
  %999 = vmatpush1.msra.mxu0 0.0
  %1000 = vmatprep.subr.mxu0 0.0
  %1001 = vmatpush1.msra.mxu0 0.0
  %1002 = vmatprep.subr.mxu0 0.0
  %1003 = vmatpush1.msra.mxu0 0.0
  %1004 = vmatprep.subr.mxu0 0.0
  %1005 = vmatpush1.msra.mxu0 0.0
  %1006 = vmatprep.subr.mxu0 0.0
  %1007 = vmatpush1.msra.mxu0 0.0
  %1008 = vmatprep.subr.mxu0 0.0
  %1009 = vmatpush1.msra.mxu0 0.0
  %1010 = vmatprep.subr.mxu0 0.0
  %1011 = vmatpush1.msra.mxu0 0.0
  %1012 = vmatprep.subr.mxu0 0.0
  %1013 = vmatpush1.msra.mxu0 0.0
  %1014 = vmatprep.subr.mxu0 0.0
  %1015 = vmatpush1.msra.mxu0 0.0
  %1016 = vmatprep.subr.mxu0 0.0
  %1017 = vmatpush1.msra.mxu0 0.0
  %1018 = vmatprep.subr.mxu0 0.0
  %1019 = vmatpush1.msra.mxu0 0.0
  %1020 = vmatprep.subr.mxu0 0.0
  %1021 = vmatpush1.msra.mxu0 0.0
  %1022 = vmatprep.subr.mxu0 0.0
  %1023 = vmatpush1.msra.mxu0 %v987
  %1024 = vmatprep.subr.mxu0 0.0
  %1025 = vmatpush2.msra.mxu0 0.0
  %1026 = vmatprep.subr.mxu0 0.0
  %1027 = vmatpush2.msra.mxu0 0.0
  %1028 = vmatprep.subr.mxu0 0.0
  %1029 = vmatpush2.msra.mxu0 0.0
  %1030 = vmatprep.subr.mxu0 0.0
  %1031 = vmatpush2.msra.mxu0 0.0
  %1032 = vmatprep.subr.mxu0 0.0
  %1033 = vmatpush2.msra.mxu0 0.0
  %1034 = vmatprep.subr.mxu0 0.0
  %1035 = vmatpush2.msra.mxu0 0.0
  %1036 = vmatprep.subr.mxu0 0.0
  %1037 = vmatpush2.msra.mxu0 0.0
  %1038 = vmatprep.subr.mxu0 0.0
  %1039 = vmatpush2.msra.mxu0 0.0
  %1040 = vmatprep.subr.mxu0 0.0
  %1041 = vmatpush2.msra.mxu0 0.0
  %1042 = vmatprep.subr.mxu0 0.0
  %1043 = vmatpush2.msra.mxu0 0.0
  %1044 = vmatprep.subr.mxu0 0.0
  %1045 = vmatpush2.msra.mxu0 0.0
  %1046 = vmatprep.subr.mxu0 0.0
  %1047 = vmatpush2.msra.mxu0 0.0
  %1048 = vmatprep.subr.mxu0 0.0
  %1049 = vmatpush2.msra.mxu0 0.0
  %1050 = vmatprep.subr.mxu0 0.0
  %1051 = vmatpush2.msra.mxu0 0.0
  %1052 = vmatprep.subr.mxu0 0.0
  %1053 = vmatpush2.msra.mxu0 0.0
  %1054 = vmatprep.subr.mxu0 0.0
  %1055 = vmatpush2.msra.mxu0 0.0
  %1056 = vmatprep.mubr.f32.mxu0 0.0
  %1057 = vmatmul.mubr.f32.gmra.mxu0 %v990
  %v1058 = vpop.f32.mrf.mxu0
  %v1059 = vadd.f32 0.0, %v1058
  %v1060 = vpop.f32.mrf.mxu0
  %1061 = vdwg.mxu0
  %1062 = vrot.lane.b32.xlu0 %v387, 112
  %v1063 = vpop.permute.xlu0 %1062
  %1064 = vrot.lane.b32.xlu0 %v387, 80
  %v1065 = vpop.permute.xlu0 %1064
  %v1066 = vsel %vm398, %v1063, 0
  %v1068 = vsel %vm398, %v1065, 0
  %1070 = vmatprep.subr.mxu0 0.0
  %1071 = vmatpush1.xpose.msra.mxu0 0.0
  %1072 = vmatprep.subr.mxu0 0.0
  %1073 = vmatpush1.xpose.msra.mxu0 0.0
  %1074 = vmatprep.subr.mxu0 0.0
  %1075 = vmatpush1.xpose.msra.mxu0 0.0
  %1076 = vmatprep.subr.mxu0 0.0
  %1077 = vmatpush1.xpose.msra.mxu0 0.0
  %1078 = vmatprep.subr.mxu0 0.0
  %1079 = vmatpush1.xpose.msra.mxu0 0.0
  %1080 = vmatprep.subr.mxu0 0.0
  %1081 = vmatpush1.xpose.msra.mxu0 0.0
  %1082 = vmatprep.subr.mxu0 0.0
  %1083 = vmatpush1.xpose.msra.mxu0 0.0
  %1084 = vmatprep.subr.mxu0 0.0
  %1085 = vmatpush1.xpose.msra.mxu0 0.0
  %1086 = vmatprep.subr.mxu0 0.0
  %1087 = vmatpush1.xpose.msra.mxu0 0.0
  %1088 = vmatprep.subr.mxu0 0.0
  %1089 = vmatpush1.xpose.msra.mxu0 0.0
  %1090 = vmatprep.subr.mxu0 0.0
  %1091 = vmatpush1.xpose.msra.mxu0 0.0
  %1092 = vmatprep.subr.mxu0 0.0
  %1093 = vmatpush1.xpose.msra.mxu0 0.0
  %1094 = vmatprep.subr.mxu0 0.0
  %1095 = vmatpush1.xpose.msra.mxu0 0.0
  %1096 = vmatprep.subr.mxu0 0.0
  %1097 = vmatpush1.xpose.msra.mxu0 0.0
  %1098 = vmatprep.subr.mxu0 0.0
  %1099 = vmatpush1.xpose.msra.mxu0 0.0
  %1100 = vmatprep.subr.mxu0 0.0
  %1101 = vmatpush1.xpose.msra.mxu0 %v1068
  %1102 = vmatprep.subr.mxu0 0.0
  %1103 = vmatpush2.xpose.msra.mxu0 0.0
  %1104 = vmatprep.subr.mxu0 0.0
  %1105 = vmatpush2.xpose.msra.mxu0 0.0
  %1106 = vmatprep.subr.mxu0 0.0
  %1107 = vmatpush2.xpose.msra.mxu0 0.0
  %1108 = vmatprep.subr.mxu0 0.0
  %1109 = vmatpush2.xpose.msra.mxu0 0.0
  %1110 = vmatprep.subr.mxu0 0.0
  %1111 = vmatpush2.xpose.msra.mxu0 0.0
  %1112 = vmatprep.subr.mxu0 0.0
  %1113 = vmatpush2.xpose.msra.mxu0 0.0
  %1114 = vmatprep.subr.mxu0 0.0
  %1115 = vmatpush2.xpose.msra.mxu0 0.0
  %1116 = vmatprep.subr.mxu0 0.0
  %1117 = vmatpush2.xpose.msra.mxu0 0.0
  %1118 = vmatprep.subr.mxu0 0.0
  %1119 = vmatpush2.xpose.msra.mxu0 0.0
  %1120 = vmatprep.subr.mxu0 0.0
  %1121 = vmatpush2.xpose.msra.mxu0 0.0
  %1122 = vmatprep.subr.mxu0 0.0
  %1123 = vmatpush2.xpose.msra.mxu0 0.0
  %1124 = vmatprep.subr.mxu0 0.0
  %1125 = vmatpush2.xpose.msra.mxu0 0.0
  %1126 = vmatprep.subr.mxu0 0.0
  %1127 = vmatpush2.xpose.msra.mxu0 0.0
  %1128 = vmatprep.subr.mxu0 0.0
  %1129 = vmatpush2.xpose.msra.mxu0 0.0
  %1130 = vmatprep.subr.mxu0 0.0
  %1131 = vmatpush2.xpose.msra.mxu0 0.0
  %1132 = vmatprep.subr.mxu0 0.0
  %1133 = vmatpush2.xpose.msra.mxu0 0.0
  %1134 = vmatprep.mubr.f32.mxu0 0.0
  %1135 = vmatmul.mubr.f32.gmra.mxu0 %v1066
  %v1136 = vpop.f32.mrf.mxu0
  %v1137 = vadd.f32 0.0, %v1136
  %v1138 = vpop.f32.mrf.mxu0
  %1139 = vdwg.mxu0
  %1140 = vrot.lane.b32.xlu0 %v392, 112
  %v1141 = vpop.permute.xlu0 %1140
  %1142 = vrot.lane.b32.xlu0 %v392, 80
  %v1143 = vpop.permute.xlu0 %1142
  %v1144 = vsel %vm398, %v1141, 0
  %v1146 = vsel %vm398, %v1143, 0
  %1148 = vmatprep.subr.mxu0 0.0
  %1149 = vmatpush1.xpose.msra.mxu0 0.0
  %1150 = vmatprep.subr.mxu0 0.0
  %1151 = vmatpush1.xpose.msra.mxu0 0.0
  %1152 = vmatprep.subr.mxu0 0.0
  %1153 = vmatpush1.xpose.msra.mxu0 0.0
  %1154 = vmatprep.subr.mxu0 0.0
  %1155 = vmatpush1.xpose.msra.mxu0 0.0
  %1156 = vmatprep.subr.mxu0 0.0
  %1157 = vmatpush1.xpose.msra.mxu0 0.0
  %1158 = vmatprep.subr.mxu0 0.0
  %1159 = vmatpush1.xpose.msra.mxu0 0.0
  %1160 = vmatprep.subr.mxu0 0.0
  %1161 = vmatpush1.xpose.msra.mxu0 0.0
  %1162 = vmatprep.subr.mxu0 0.0
  %1163 = vmatpush1.xpose.msra.mxu0 0.0
  %1164 = vmatprep.subr.mxu0 0.0
  %1165 = vmatpush1.xpose.msra.mxu0 0.0
  %1166 = vmatprep.subr.mxu0 0.0
  %1167 = vmatpush1.xpose.msra.mxu0 0.0
  %1168 = vmatprep.subr.mxu0 0.0
  %1169 = vmatpush1.xpose.msra.mxu0 0.0
  %1170 = vmatprep.subr.mxu0 0.0
  %1171 = vmatpush1.xpose.msra.mxu0 0.0
  %1172 = vmatprep.subr.mxu0 0.0
  %1173 = vmatpush1.xpose.msra.mxu0 0.0
  %1174 = vmatprep.subr.mxu0 0.0
  %1175 = vmatpush1.xpose.msra.mxu0 0.0
  %1176 = vmatprep.subr.mxu0 0.0
  %1177 = vmatpush1.xpose.msra.mxu0 0.0
  %1178 = vmatprep.subr.mxu0 0.0
  %1179 = vmatpush1.xpose.msra.mxu0 %v1146
  %1180 = vmatprep.subr.mxu0 0.0
  %1181 = vmatpush2.xpose.msra.mxu0 0.0
  %1182 = vmatprep.subr.mxu0 0.0
  %1183 = vmatpush2.xpose.msra.mxu0 0.0
  %1184 = vmatprep.subr.mxu0 0.0
  %1185 = vmatpush2.xpose.msra.mxu0 0.0
  %1186 = vmatprep.subr.mxu0 0.0
  %1187 = vmatpush2.xpose.msra.mxu0 0.0
  %1188 = vmatprep.subr.mxu0 0.0
  %1189 = vmatpush2.xpose.msra.mxu0 0.0
  %1190 = vmatprep.subr.mxu0 0.0
  %1191 = vmatpush2.xpose.msra.mxu0 0.0
  %1192 = vmatprep.subr.mxu0 0.0
  %1193 = vmatpush2.xpose.msra.mxu0 0.0
  %1194 = vmatprep.subr.mxu0 0.0
  %1195 = vmatpush2.xpose.msra.mxu0 0.0
  %1196 = vmatprep.subr.mxu0 0.0
  %1197 = vmatpush2.xpose.msra.mxu0 0.0
  %1198 = vmatprep.subr.mxu0 0.0
  %1199 = vmatpush2.xpose.msra.mxu0 0.0
  %1200 = vmatprep.subr.mxu0 0.0
  %1201 = vmatpush2.xpose.msra.mxu0 0.0
  %1202 = vmatprep.subr.mxu0 0.0
  %1203 = vmatpush2.xpose.msra.mxu0 0.0
  %1204 = vmatprep.subr.mxu0 0.0
  %1205 = vmatpush2.xpose.msra.mxu0 0.0
  %1206 = vmatprep.subr.mxu0 0.0
  %1207 = vmatpush2.xpose.msra.mxu0 0.0
  %1208 = vmatprep.subr.mxu0 0.0
  %1209 = vmatpush2.xpose.msra.mxu0 0.0
  %1210 = vmatprep.subr.mxu0 0.0
  %1211 = vmatpush2.xpose.msra.mxu0 0.0
  %1212 = vmatprep.mubr.f32.mxu0 0.0
  %1213 = vmatmul.mubr.f32.gmra.mxu0 %v1144
  %v1214 = vpop.f32.mrf.mxu0
  %v1215 = vadd.f32 0.0, %v1214
  %v1216 = vpop.f32.mrf.mxu0
  %1217 = vdwg.mxu0
  %v1218 = vmul.f32 %v1137, 0.35355338
  %v1219 = vmul.f32 %v1215, 0.35355338
  %v1220 = vadd.f32 %v1218, %v261
  %v1221 = vadd.f32 %v1219, %v262
  %v1222 = vsel %vm398, %v1220, -inf
  %1223 = vmax.xlane.f32.xlu0 %v1222
  %v1224 = vpop.xlane.xlu0 %1223
  %v1225 = vsel %vm398, %v1221, -inf
  %1226 = vmax.xlane.f32.xlu0 %v1225
  %v1227 = vpop.xlane.xlu0 %1226
  %v1228 = vsub.f32 %v1220, %v1224
  %v1229 = vsub.f32 %v1221, %v1227
  %v1230 = vmul.f32 %v1228, 1.442695
  %v1231 = vpow.pop %v1230
  %v1232 = vmul.f32 %v1229, 1.442695
  %v1233 = vpow.pop %v1232
  %v1234 = vsel %vm398, %v1231, 0.0
  %1235 = vadd.xlane.f32.xlu0 %v1234
  %v1236 = vpop.xlane.xlu0 %1235
  %v1237 = vsel %vm398, %v1233, 0.0
  %1238 = vadd.xlane.f32.xlu0 %v1237
  %v1239 = vpop.xlane.xlu0 %1238
  %v1240 = vrcp.pop %v1236
  %v1241 = vmul.f32 %v1231, %v1240
  %v1242 = vrcp.pop %v1239
  %v1243 = vmul.f32 %v1233, %v1242
  %1244 = vrot.lane.b32.xlu0 %v387, 48
  %v1245 = vpop.permute.xlu0 %1244
  %v1248 = vsel %vm398, %v1241, 0
  %1250 = vmatprep.subr.mxu0 0.0
  %1251 = vmatpush1.msra.mxu0 0.0
  %1252 = vmatprep.subr.mxu0 0.0
  %1253 = vmatpush1.msra.mxu0 0.0
  %1254 = vmatprep.subr.mxu0 0.0
  %1255 = vmatpush1.msra.mxu0 0.0
  %1256 = vmatprep.subr.mxu0 0.0
  %1257 = vmatpush1.msra.mxu0 0.0
  %1258 = vmatprep.subr.mxu0 0.0
  %1259 = vmatpush1.msra.mxu0 0.0
  %1260 = vmatprep.subr.mxu0 0.0
  %1261 = vmatpush1.msra.mxu0 0.0
  %1262 = vmatprep.subr.mxu0 0.0
  %1263 = vmatpush1.msra.mxu0 0.0
  %1264 = vmatprep.subr.mxu0 0.0
  %1265 = vmatpush1.msra.mxu0 0.0
  %1266 = vmatprep.subr.mxu0 0.0
  %1267 = vmatpush1.msra.mxu0 0.0
  %1268 = vmatprep.subr.mxu0 0.0
  %1269 = vmatpush1.msra.mxu0 0.0
  %1270 = vmatprep.subr.mxu0 0.0
  %1271 = vmatpush1.msra.mxu0 0.0
  %1272 = vmatprep.subr.mxu0 0.0
  %1273 = vmatpush1.msra.mxu0 0.0
  %1274 = vmatprep.subr.mxu0 0.0
  %1275 = vmatpush1.msra.mxu0 0.0
  %1276 = vmatprep.subr.mxu0 0.0
  %1277 = vmatpush1.msra.mxu0 0.0
  %1278 = vmatprep.subr.mxu0 0.0
  %1279 = vmatpush1.msra.mxu0 0.0
  %1280 = vmatprep.subr.mxu0 0.0
  %1281 = vmatpush1.msra.mxu0 %v1245
  %1282 = vmatprep.subr.mxu0 0.0
  %1283 = vmatpush2.msra.mxu0 0.0
  %1284 = vmatprep.subr.mxu0 0.0
  %1285 = vmatpush2.msra.mxu0 0.0
  %1286 = vmatprep.subr.mxu0 0.0
  %1287 = vmatpush2.msra.mxu0 0.0
  %1288 = vmatprep.subr.mxu0 0.0
  %1289 = vmatpush2.msra.mxu0 0.0
  %1290 = vmatprep.subr.mxu0 0.0
  %1291 = vmatpush2.msra.mxu0 0.0
  %1292 = vmatprep.subr.mxu0 0.0
  %1293 = vmatpush2.msra.mxu0 0.0
  %1294 = vmatprep.subr.mxu0 0.0
  %1295 = vmatpush2.msra.mxu0 0.0
  %1296 = vmatprep.subr.mxu0 0.0
  %1297 = vmatpush2.msra.mxu0 0.0
  %1298 = vmatprep.subr.mxu0 0.0
  %1299 = vmatpush2.msra.mxu0 0.0
  %1300 = vmatprep.subr.mxu0 0.0
  %1301 = vmatpush2.msra.mxu0 0.0
  %1302 = vmatprep.subr.mxu0 0.0
  %1303 = vmatpush2.msra.mxu0 0.0
  %1304 = vmatprep.subr.mxu0 0.0
  %1305 = vmatpush2.msra.mxu0 0.0
  %1306 = vmatprep.subr.mxu0 0.0
  %1307 = vmatpush2.msra.mxu0 0.0
  %1308 = vmatprep.subr.mxu0 0.0
  %1309 = vmatpush2.msra.mxu0 0.0
  %1310 = vmatprep.subr.mxu0 0.0
  %1311 = vmatpush2.msra.mxu0 0.0
  %1312 = vmatprep.subr.mxu0 0.0
  %1313 = vmatpush2.msra.mxu0 0.0
  %1314 = vmatprep.mubr.f32.mxu0 0.0
  %1315 = vmatmul.mubr.f32.gmra.mxu0 %v1248
  %v1316 = vpop.f32.mrf.mxu0
  %v1317 = vadd.f32 0.0, %v1316
  %v1318 = vpop.f32.mrf.mxu0
  %1319 = vdwg.mxu0
  %1320 = vrot.lane.b32.xlu0 %v392, 48
  %v1321 = vpop.permute.xlu0 %1320
  %v1324 = vsel %vm398, %v1243, 0
  %1326 = vmatprep.subr.mxu0 0.0
  %1327 = vmatpush1.msra.mxu0 0.0
  %1328 = vmatprep.subr.mxu0 0.0
  %1329 = vmatpush1.msra.mxu0 0.0
  %1330 = vmatprep.subr.mxu0 0.0
  %1331 = vmatpush1.msra.mxu0 0.0
  %1332 = vmatprep.subr.mxu0 0.0
  %1333 = vmatpush1.msra.mxu0 0.0
  %1334 = vmatprep.subr.mxu0 0.0
  %1335 = vmatpush1.msra.mxu0 0.0
  %1336 = vmatprep.subr.mxu0 0.0
  %1337 = vmatpush1.msra.mxu0 0.0
  %1338 = vmatprep.subr.mxu0 0.0
  %1339 = vmatpush1.msra.mxu0 0.0
  %1340 = vmatprep.subr.mxu0 0.0
  %1341 = vmatpush1.msra.mxu0 0.0
  %1342 = vmatprep.subr.mxu0 0.0
  %1343 = vmatpush1.msra.mxu0 0.0
  %1344 = vmatprep.subr.mxu0 0.0
  %1345 = vmatpush1.msra.mxu0 0.0
  %1346 = vmatprep.subr.mxu0 0.0
  %1347 = vmatpush1.msra.mxu0 0.0
  %1348 = vmatprep.subr.mxu0 0.0
  %1349 = vmatpush1.msra.mxu0 0.0
  %1350 = vmatprep.subr.mxu0 0.0
  %1351 = vmatpush1.msra.mxu0 0.0
  %1352 = vmatprep.subr.mxu0 0.0
  %1353 = vmatpush1.msra.mxu0 0.0
  %1354 = vmatprep.subr.mxu0 0.0
  %1355 = vmatpush1.msra.mxu0 0.0
  %1356 = vmatprep.subr.mxu0 0.0
  %1357 = vmatpush1.msra.mxu0 %v1321
  %1358 = vmatprep.subr.mxu0 0.0
  %1359 = vmatpush2.msra.mxu0 0.0
  %1360 = vmatprep.subr.mxu0 0.0
  %1361 = vmatpush2.msra.mxu0 0.0
  %1362 = vmatprep.subr.mxu0 0.0
  %1363 = vmatpush2.msra.mxu0 0.0
  %1364 = vmatprep.subr.mxu0 0.0
  %1365 = vmatpush2.msra.mxu0 0.0
  %1366 = vmatprep.subr.mxu0 0.0
  %1367 = vmatpush2.msra.mxu0 0.0
  %1368 = vmatprep.subr.mxu0 0.0
  %1369 = vmatpush2.msra.mxu0 0.0
  %1370 = vmatprep.subr.mxu0 0.0
  %1371 = vmatpush2.msra.mxu0 0.0
  %1372 = vmatprep.subr.mxu0 0.0
  %1373 = vmatpush2.msra.mxu0 0.0
  %1374 = vmatprep.subr.mxu0 0.0
  %1375 = vmatpush2.msra.mxu0 0.0
  %1376 = vmatprep.subr.mxu0 0.0
  %1377 = vmatpush2.msra.mxu0 0.0
  %1378 = vmatprep.subr.mxu0 0.0
  %1379 = vmatpush2.msra.mxu0 0.0
  %1380 = vmatprep.subr.mxu0 0.0
  %1381 = vmatpush2.msra.mxu0 0.0
  %1382 = vmatprep.subr.mxu0 0.0
  %1383 = vmatpush2.msra.mxu0 0.0
  %1384 = vmatprep.subr.mxu0 0.0
  %1385 = vmatpush2.msra.mxu0 0.0
  %1386 = vmatprep.subr.mxu0 0.0
  %1387 = vmatpush2.msra.mxu0 0.0
  %1388 = vmatprep.subr.mxu0 0.0
  %1389 = vmatpush2.msra.mxu0 0.0
  %1390 = vmatprep.mubr.f32.mxu0 0.0
  %1391 = vmatmul.mubr.f32.gmra.mxu0 %v1324
  %v1392 = vpop.f32.mrf.mxu0
  %v1393 = vadd.f32 0.0, %v1392
  %v1394 = vpop.f32.mrf.mxu0
  %1395 = vdwg.mxu0
  %1396 = vrot.lane.b32.xlu0 %v387, 104
  %v1397 = vpop.permute.xlu0 %1396
  %1398 = vrot.lane.b32.xlu0 %v387, 72
  %v1399 = vpop.permute.xlu0 %1398
  %v1400 = vsel %vm398, %v1397, 0
  %v1402 = vsel %vm398, %v1399, 0
  %1404 = vmatprep.subr.mxu0 0.0
  %1405 = vmatpush1.xpose.msra.mxu0 0.0
  %1406 = vmatprep.subr.mxu0 0.0
  %1407 = vmatpush1.xpose.msra.mxu0 0.0
  %1408 = vmatprep.subr.mxu0 0.0
  %1409 = vmatpush1.xpose.msra.mxu0 0.0
  %1410 = vmatprep.subr.mxu0 0.0
  %1411 = vmatpush1.xpose.msra.mxu0 0.0
  %1412 = vmatprep.subr.mxu0 0.0
  %1413 = vmatpush1.xpose.msra.mxu0 0.0
  %1414 = vmatprep.subr.mxu0 0.0
  %1415 = vmatpush1.xpose.msra.mxu0 0.0
  %1416 = vmatprep.subr.mxu0 0.0
  %1417 = vmatpush1.xpose.msra.mxu0 0.0
  %1418 = vmatprep.subr.mxu0 0.0
  %1419 = vmatpush1.xpose.msra.mxu0 0.0
  %1420 = vmatprep.subr.mxu0 0.0
  %1421 = vmatpush1.xpose.msra.mxu0 0.0
  %1422 = vmatprep.subr.mxu0 0.0
  %1423 = vmatpush1.xpose.msra.mxu0 0.0
  %1424 = vmatprep.subr.mxu0 0.0
  %1425 = vmatpush1.xpose.msra.mxu0 0.0
  %1426 = vmatprep.subr.mxu0 0.0
  %1427 = vmatpush1.xpose.msra.mxu0 0.0
  %1428 = vmatprep.subr.mxu0 0.0
  %1429 = vmatpush1.xpose.msra.mxu0 0.0
  %1430 = vmatprep.subr.mxu0 0.0
  %1431 = vmatpush1.xpose.msra.mxu0 0.0
  %1432 = vmatprep.subr.mxu0 0.0
  %1433 = vmatpush1.xpose.msra.mxu0 0.0
  %1434 = vmatprep.subr.mxu0 0.0
  %1435 = vmatpush1.xpose.msra.mxu0 %v1402
  %1436 = vmatprep.subr.mxu0 0.0
  %1437 = vmatpush2.xpose.msra.mxu0 0.0
  %1438 = vmatprep.subr.mxu0 0.0
  %1439 = vmatpush2.xpose.msra.mxu0 0.0
  %1440 = vmatprep.subr.mxu0 0.0
  %1441 = vmatpush2.xpose.msra.mxu0 0.0
  %1442 = vmatprep.subr.mxu0 0.0
  %1443 = vmatpush2.xpose.msra.mxu0 0.0
  %1444 = vmatprep.subr.mxu0 0.0
  %1445 = vmatpush2.xpose.msra.mxu0 0.0
  %1446 = vmatprep.subr.mxu0 0.0
  %1447 = vmatpush2.xpose.msra.mxu0 0.0
  %1448 = vmatprep.subr.mxu0 0.0
  %1449 = vmatpush2.xpose.msra.mxu0 0.0
  %1450 = vmatprep.subr.mxu0 0.0
  %1451 = vmatpush2.xpose.msra.mxu0 0.0
  %1452 = vmatprep.subr.mxu0 0.0
  %1453 = vmatpush2.xpose.msra.mxu0 0.0
  %1454 = vmatprep.subr.mxu0 0.0
  %1455 = vmatpush2.xpose.msra.mxu0 0.0
  %1456 = vmatprep.subr.mxu0 0.0
  %1457 = vmatpush2.xpose.msra.mxu0 0.0
  %1458 = vmatprep.subr.mxu0 0.0
  %1459 = vmatpush2.xpose.msra.mxu0 0.0
  %1460 = vmatprep.subr.mxu0 0.0
  %1461 = vmatpush2.xpose.msra.mxu0 0.0
  %1462 = vmatprep.subr.mxu0 0.0
  %1463 = vmatpush2.xpose.msra.mxu0 0.0
  %1464 = vmatprep.subr.mxu0 0.0
  %1465 = vmatpush2.xpose.msra.mxu0 0.0
  %1466 = vmatprep.subr.mxu0 0.0
  %1467 = vmatpush2.xpose.msra.mxu0 0.0
  %1468 = vmatprep.mubr.f32.mxu0 0.0
  %1469 = vmatmul.mubr.f32.gmra.mxu0 %v1400
  %v1470 = vpop.f32.mrf.mxu0
  %v1471 = vadd.f32 0.0, %v1470
  %v1472 = vpop.f32.mrf.mxu0
  %1473 = vdwg.mxu0
  %1474 = vrot.lane.b32.xlu0 %v392, 104
  %v1475 = vpop.permute.xlu0 %1474
  %1476 = vrot.lane.b32.xlu0 %v392, 72
  %v1477 = vpop.permute.xlu0 %1476
  %v1478 = vsel %vm398, %v1475, 0
  %v1480 = vsel %vm398, %v1477, 0
  %1482 = vmatprep.subr.mxu0 0.0
  %1483 = vmatpush1.xpose.msra.mxu0 0.0
  %1484 = vmatprep.subr.mxu0 0.0
  %1485 = vmatpush1.xpose.msra.mxu0 0.0
  %1486 = vmatprep.subr.mxu0 0.0
  %1487 = vmatpush1.xpose.msra.mxu0 0.0
  %1488 = vmatprep.subr.mxu0 0.0
  %1489 = vmatpush1.xpose.msra.mxu0 0.0
  %1490 = vmatprep.subr.mxu0 0.0
  %1491 = vmatpush1.xpose.msra.mxu0 0.0
  %1492 = vmatprep.subr.mxu0 0.0
  %1493 = vmatpush1.xpose.msra.mxu0 0.0
  %1494 = vmatprep.subr.mxu0 0.0
  %1495 = vmatpush1.xpose.msra.mxu0 0.0
  %1496 = vmatprep.subr.mxu0 0.0
  %1497 = vmatpush1.xpose.msra.mxu0 0.0
  %1498 = vmatprep.subr.mxu0 0.0
  %1499 = vmatpush1.xpose.msra.mxu0 0.0
  %1500 = vmatprep.subr.mxu0 0.0
  %1501 = vmatpush1.xpose.msra.mxu0 0.0
  %1502 = vmatprep.subr.mxu0 0.0
  %1503 = vmatpush1.xpose.msra.mxu0 0.0
  %1504 = vmatprep.subr.mxu0 0.0
  %1505 = vmatpush1.xpose.msra.mxu0 0.0
  %1506 = vmatprep.subr.mxu0 0.0
  %1507 = vmatpush1.xpose.msra.mxu0 0.0
  %1508 = vmatprep.subr.mxu0 0.0
  %1509 = vmatpush1.xpose.msra.mxu0 0.0
  %1510 = vmatprep.subr.mxu0 0.0
  %1511 = vmatpush1.xpose.msra.mxu0 0.0
  %1512 = vmatprep.subr.mxu0 0.0
  %1513 = vmatpush1.xpose.msra.mxu0 %v1480
  %1514 = vmatprep.subr.mxu0 0.0
  %1515 = vmatpush2.xpose.msra.mxu0 0.0
  %1516 = vmatprep.subr.mxu0 0.0
  %1517 = vmatpush2.xpose.msra.mxu0 0.0
  %1518 = vmatprep.subr.mxu0 0.0
  %1519 = vmatpush2.xpose.msra.mxu0 0.0
  %1520 = vmatprep.subr.mxu0 0.0
  %1521 = vmatpush2.xpose.msra.mxu0 0.0
  %1522 = vmatprep.subr.mxu0 0.0
  %1523 = vmatpush2.xpose.msra.mxu0 0.0
  %1524 = vmatprep.subr.mxu0 0.0
  %1525 = vmatpush2.xpose.msra.mxu0 0.0
  %1526 = vmatprep.subr.mxu0 0.0
  %1527 = vmatpush2.xpose.msra.mxu0 0.0
  %1528 = vmatprep.subr.mxu0 0.0
  %1529 = vmatpush2.xpose.msra.mxu0 0.0
  %1530 = vmatprep.subr.mxu0 0.0
  %1531 = vmatpush2.xpose.msra.mxu0 0.0
  %1532 = vmatprep.subr.mxu0 0.0
  %1533 = vmatpush2.xpose.msra.mxu0 0.0
  %1534 = vmatprep.subr.mxu0 0.0
  %1535 = vmatpush2.xpose.msra.mxu0 0.0
  %1536 = vmatprep.subr.mxu0 0.0
  %1537 = vmatpush2.xpose.msra.mxu0 0.0
  %1538 = vmatprep.subr.mxu0 0.0
  %1539 = vmatpush2.xpose.msra.mxu0 0.0
  %1540 = vmatprep.subr.mxu0 0.0
  %1541 = vmatpush2.xpose.msra.mxu0 0.0
  %1542 = vmatprep.subr.mxu0 0.0
  %1543 = vmatpush2.xpose.msra.mxu0 0.0
  %1544 = vmatprep.subr.mxu0 0.0
  %1545 = vmatpush2.xpose.msra.mxu0 0.0
  %1546 = vmatprep.mubr.f32.mxu0 0.0
  %1547 = vmatmul.mubr.f32.gmra.mxu0 %v1478
  %v1548 = vpop.f32.mrf.mxu0
  %v1549 = vadd.f32 0.0, %v1548
  %v1550 = vpop.f32.mrf.mxu0
  %1551 = vdwg.mxu0
  %v1552 = vmul.f32 %v1471, 0.35355338
  %v1553 = vmul.f32 %v1549, 0.35355338
  %v1554 = vadd.f32 %v1552, %v261
  %v1555 = vadd.f32 %v1553, %v262
  %v1556 = vsel %vm398, %v1554, -inf
  %1557 = vmax.xlane.f32.xlu0 %v1556
  %v1558 = vpop.xlane.xlu0 %1557
  %v1559 = vsel %vm398, %v1555, -inf
  %1560 = vmax.xlane.f32.xlu0 %v1559
  %v1561 = vpop.xlane.xlu0 %1560
  %v1562 = vsub.f32 %v1554, %v1558
  %v1563 = vsub.f32 %v1555, %v1561
  %v1564 = vmul.f32 %v1562, 1.442695
  %v1565 = vpow.pop %v1564
  %v1566 = vmul.f32 %v1563, 1.442695
  %v1567 = vpow.pop %v1566
  %v1568 = vsel %vm398, %v1565, 0.0
  %1569 = vadd.xlane.f32.xlu0 %v1568
  %v1570 = vpop.xlane.xlu0 %1569
  %v1571 = vsel %vm398, %v1567, 0.0
  %1572 = vadd.xlane.f32.xlu0 %v1571
  %v1573 = vpop.xlane.xlu0 %1572
  %v1574 = vrcp.pop %v1570
  %v1575 = vmul.f32 %v1565, %v1574
  %v1576 = vrcp.pop %v1573
  %v1577 = vmul.f32 %v1567, %v1576
  %1578 = vrot.lane.b32.xlu0 %v387, 40
  %v1579 = vpop.permute.xlu0 %1578
  %v1582 = vsel %vm398, %v1575, 0
  %1584 = vmatprep.subr.mxu0 0.0
  %1585 = vmatpush1.msra.mxu0 0.0
  %1586 = vmatprep.subr.mxu0 0.0
  %1587 = vmatpush1.msra.mxu0 0.0
  %1588 = vmatprep.subr.mxu0 0.0
  %1589 = vmatpush1.msra.mxu0 0.0
  %1590 = vmatprep.subr.mxu0 0.0
  %1591 = vmatpush1.msra.mxu0 0.0
  %1592 = vmatprep.subr.mxu0 0.0
  %1593 = vmatpush1.msra.mxu0 0.0
  %1594 = vmatprep.subr.mxu0 0.0
  %1595 = vmatpush1.msra.mxu0 0.0
  %1596 = vmatprep.subr.mxu0 0.0
  %1597 = vmatpush1.msra.mxu0 0.0
  %1598 = vmatprep.subr.mxu0 0.0
  %1599 = vmatpush1.msra.mxu0 0.0
  %1600 = vmatprep.subr.mxu0 0.0
  %1601 = vmatpush1.msra.mxu0 0.0
  %1602 = vmatprep.subr.mxu0 0.0
  %1603 = vmatpush1.msra.mxu0 0.0
  %1604 = vmatprep.subr.mxu0 0.0
  %1605 = vmatpush1.msra.mxu0 0.0
  %1606 = vmatprep.subr.mxu0 0.0
  %1607 = vmatpush1.msra.mxu0 0.0
  %1608 = vmatprep.subr.mxu0 0.0
  %1609 = vmatpush1.msra.mxu0 0.0
  %1610 = vmatprep.subr.mxu0 0.0
  %1611 = vmatpush1.msra.mxu0 0.0
  %1612 = vmatprep.subr.mxu0 0.0
  %1613 = vmatpush1.msra.mxu0 0.0
  %1614 = vmatprep.subr.mxu0 0.0
  %1615 = vmatpush1.msra.mxu0 %v1579
  %1616 = vmatprep.subr.mxu0 0.0
  %1617 = vmatpush2.msra.mxu0 0.0
  %1618 = vmatprep.subr.mxu0 0.0
  %1619 = vmatpush2.msra.mxu0 0.0
  %1620 = vmatprep.subr.mxu0 0.0
  %1621 = vmatpush2.msra.mxu0 0.0
  %1622 = vmatprep.subr.mxu0 0.0
  %1623 = vmatpush2.msra.mxu0 0.0
  %1624 = vmatprep.subr.mxu0 0.0
  %1625 = vmatpush2.msra.mxu0 0.0
  %1626 = vmatprep.subr.mxu0 0.0
  %1627 = vmatpush2.msra.mxu0 0.0
  %1628 = vmatprep.subr.mxu0 0.0
  %1629 = vmatpush2.msra.mxu0 0.0
  %1630 = vmatprep.subr.mxu0 0.0
  %1631 = vmatpush2.msra.mxu0 0.0
  %1632 = vmatprep.subr.mxu0 0.0
  %1633 = vmatpush2.msra.mxu0 0.0
  %1634 = vmatprep.subr.mxu0 0.0
  %1635 = vmatpush2.msra.mxu0 0.0
  %1636 = vmatprep.subr.mxu0 0.0
  %1637 = vmatpush2.msra.mxu0 0.0
  %1638 = vmatprep.subr.mxu0 0.0
  %1639 = vmatpush2.msra.mxu0 0.0
  %1640 = vmatprep.subr.mxu0 0.0
  %1641 = vmatpush2.msra.mxu0 0.0
  %1642 = vmatprep.subr.mxu0 0.0
  %1643 = vmatpush2.msra.mxu0 0.0
  %1644 = vmatprep.subr.mxu0 0.0
  %1645 = vmatpush2.msra.mxu0 0.0
  %1646 = vmatprep.subr.mxu0 0.0
  %1647 = vmatpush2.msra.mxu0 0.0
  %1648 = vmatprep.mubr.f32.mxu0 0.0
  %1649 = vmatmul.mubr.f32.gmra.mxu0 %v1582
  %v1650 = vpop.f32.mrf.mxu0
  %v1651 = vadd.f32 0.0, %v1650
  %v1652 = vpop.f32.mrf.mxu0
  %1653 = vdwg.mxu0
  %1654 = vrot.lane.b32.xlu0 %v392, 40
  %v1655 = vpop.permute.xlu0 %1654
  %v1658 = vsel %vm398, %v1577, 0
  %1660 = vmatprep.subr.mxu0 0.0
  %1661 = vmatpush1.msra.mxu0 0.0
  %1662 = vmatprep.subr.mxu0 0.0
  %1663 = vmatpush1.msra.mxu0 0.0
  %1664 = vmatprep.subr.mxu0 0.0
  %1665 = vmatpush1.msra.mxu0 0.0
  %1666 = vmatprep.subr.mxu0 0.0
  %1667 = vmatpush1.msra.mxu0 0.0
  %1668 = vmatprep.subr.mxu0 0.0
  %1669 = vmatpush1.msra.mxu0 0.0
  %1670 = vmatprep.subr.mxu0 0.0
  %1671 = vmatpush1.msra.mxu0 0.0
  %1672 = vmatprep.subr.mxu0 0.0
  %1673 = vmatpush1.msra.mxu0 0.0
  %1674 = vmatprep.subr.mxu0 0.0
  %1675 = vmatpush1.msra.mxu0 0.0
  %1676 = vmatprep.subr.mxu0 0.0
  %1677 = vmatpush1.msra.mxu0 0.0
  %1678 = vmatprep.subr.mxu0 0.0
  %1679 = vmatpush1.msra.mxu0 0.0
  %1680 = vmatprep.subr.mxu0 0.0
  %1681 = vmatpush1.msra.mxu0 0.0
  %1682 = vmatprep.subr.mxu0 0.0
  %1683 = vmatpush1.msra.mxu0 0.0
  %1684 = vmatprep.subr.mxu0 0.0
  %1685 = vmatpush1.msra.mxu0 0.0
  %1686 = vmatprep.subr.mxu0 0.0
  %1687 = vmatpush1.msra.mxu0 0.0
  %1688 = vmatprep.subr.mxu0 0.0
  %1689 = vmatpush1.msra.mxu0 0.0
  %1690 = vmatprep.subr.mxu0 0.0
  %1691 = vmatpush1.msra.mxu0 %v1655
  %1692 = vmatprep.subr.mxu0 0.0
  %1693 = vmatpush2.msra.mxu0 0.0
  %1694 = vmatprep.subr.mxu0 0.0
  %1695 = vmatpush2.msra.mxu0 0.0
  %1696 = vmatprep.subr.mxu0 0.0
  %1697 = vmatpush2.msra.mxu0 0.0
  %1698 = vmatprep.subr.mxu0 0.0
  %1699 = vmatpush2.msra.mxu0 0.0
  %1700 = vmatprep.subr.mxu0 0.0
  %1701 = vmatpush2.msra.mxu0 0.0
  %1702 = vmatprep.subr.mxu0 0.0
  %1703 = vmatpush2.msra.mxu0 0.0
  %1704 = vmatprep.subr.mxu0 0.0
  %1705 = vmatpush2.msra.mxu0 0.0
  %1706 = vmatprep.subr.mxu0 0.0
  %1707 = vmatpush2.msra.mxu0 0.0
  %1708 = vmatprep.subr.mxu0 0.0
  %1709 = vmatpush2.msra.mxu0 0.0
  %1710 = vmatprep.subr.mxu0 0.0
  %1711 = vmatpush2.msra.mxu0 0.0
  %1712 = vmatprep.subr.mxu0 0.0
  %1713 = vmatpush2.msra.mxu0 0.0
  %1714 = vmatprep.subr.mxu0 0.0
  %1715 = vmatpush2.msra.mxu0 0.0
  %1716 = vmatprep.subr.mxu0 0.0
  %1717 = vmatpush2.msra.mxu0 0.0
  %1718 = vmatprep.subr.mxu0 0.0
  %1719 = vmatpush2.msra.mxu0 0.0
  %1720 = vmatprep.subr.mxu0 0.0
  %1721 = vmatpush2.msra.mxu0 0.0
  %1722 = vmatprep.subr.mxu0 0.0
  %1723 = vmatpush2.msra.mxu0 0.0
  %1724 = vmatprep.mubr.f32.mxu0 0.0
  %1725 = vmatmul.mubr.f32.gmra.mxu0 %v1658
  %v1726 = vpop.f32.mrf.mxu0
  %v1727 = vadd.f32 0.0, %v1726
  %v1728 = vpop.f32.mrf.mxu0
  %1729 = vdwg.mxu0
  %1732 = vrot.lane.b32.xlu0 %v983, 8
  %v1733 = vpop.permute.xlu0 %1732
  %1734 = vrot.lane.b32.xlu0 %v1059, 8
  %v1735 = vpop.permute.xlu0 %1734
  %1740 = vrot.lane.b32.xlu0 %v1317, 16
  %v1741 = vpop.permute.xlu0 %1740
  %1742 = vrot.lane.b32.xlu0 %v1393, 16
  %v1743 = vpop.permute.xlu0 %1742
  %1748 = vrot.lane.b32.xlu0 %v1651, 24
  %v1749 = vpop.permute.xlu0 %1748
  %1750 = vrot.lane.b32.xlu0 %v1727, 24
  %v1751 = vpop.permute.xlu0 %1750
  %v1754 = vsel %vm398, %v649, %v1733
  %v1755 = vsel %vm398, %v725, %v1735
  %v1756 = vsel %vm175, %v1754, %v1741
  %v1757 = vsel %vm175, %v1755, %v1743
  %vm1758 = vcmask 195584
  %v1759 = vsel %vm1758, %v1756, %v1749
  %v1760 = vsel %vm1758, %v1757, %v1751
  %v1761 = vld [vmem:[%s1 + $0x40] sm:$0xff]
  %v1762 = vld [vmem:[%s1 + $0x48] sm:$0xff]
  %v1763 = vld [vmem:[%s1 + $0x50] sm:$0xff]
  %v1764 = vld [vmem:[%s1 + $0x58] sm:$0xff]
  %v1765 = vld [vmem:[%s1 + $0x60] sm:$0x1]
  %v1766 = vlaneseq
  %v1767 = vshrl.u32 %v1766, 7
  %v1768 = vsub.s32 0, %v1767
  %v1769 = vrot.slane %v1765, %v1768
  %v1771 = vsel %vm265, %v1759, 0
  %v1774 = vsel %vm265, %v1760, 0
  %1776 = vmatprep.subr.mxu0 0.0
  %1777 = vmatpush1.msra.mxu0 0.0
  %1778 = vmatprep.subr.mxu0 0.0
  %1779 = vmatpush1.msra.mxu0 0.0
  %1780 = vmatprep.subr.mxu0 0.0
  %1781 = vmatpush1.msra.mxu0 0.0
  %1782 = vmatprep.subr.mxu0 0.0
  %1783 = vmatpush1.msra.mxu0 0.0
  %1784 = vmatprep.subr.mxu0 0.0
  %1785 = vmatpush1.msra.mxu0 0.0
  %1786 = vmatprep.subr.mxu0 0.0
  %1787 = vmatpush1.msra.mxu0 0.0
  %1788 = vmatprep.subr.mxu0 0.0
  %1789 = vmatpush1.msra.mxu0 0.0
  %1790 = vmatprep.subr.mxu0 0.0
  %1791 = vmatpush1.msra.mxu0 0.0
  %1792 = vmatprep.subr.mxu0 0.0
  %1793 = vmatpush1.msra.mxu0 0.0
  %1794 = vmatprep.subr.mxu0 0.0
  %1795 = vmatpush1.msra.mxu0 0.0
  %1796 = vmatprep.subr.mxu0 0.0
  %1797 = vmatpush1.msra.mxu0 0.0
  %1798 = vmatprep.subr.mxu0 0.0
  %1799 = vmatpush1.msra.mxu0 0.0
  %1800 = vmatprep.subr.mxu0 0.0
  %1801 = vmatpush1.msra.mxu0 %v1764
  %1802 = vmatprep.subr.mxu0 0.0
  %1803 = vmatpush1.msra.mxu0 %v1763
  %1804 = vmatprep.subr.mxu0 0.0
  %1805 = vmatpush1.msra.mxu0 %v1762
  %1806 = vmatprep.subr.mxu0 0.0
  %1807 = vmatpush1.msra.mxu0 %v1761
  %1808 = vmatprep.subr.mxu0 0.0
  %1809 = vmatpush2.msra.mxu0 0.0
  %1810 = vmatprep.subr.mxu0 0.0
  %1811 = vmatpush2.msra.mxu0 0.0
  %1812 = vmatprep.subr.mxu0 0.0
  %1813 = vmatpush2.msra.mxu0 0.0
  %1814 = vmatprep.subr.mxu0 0.0
  %1815 = vmatpush2.msra.mxu0 0.0
  %1816 = vmatprep.subr.mxu0 0.0
  %1817 = vmatpush2.msra.mxu0 0.0
  %1818 = vmatprep.subr.mxu0 0.0
  %1819 = vmatpush2.msra.mxu0 0.0
  %1820 = vmatprep.subr.mxu0 0.0
  %1821 = vmatpush2.msra.mxu0 0.0
  %1822 = vmatprep.subr.mxu0 0.0
  %1823 = vmatpush2.msra.mxu0 0.0
  %1824 = vmatprep.subr.mxu0 0.0
  %1825 = vmatpush2.msra.mxu0 0.0
  %1826 = vmatprep.subr.mxu0 0.0
  %1827 = vmatpush2.msra.mxu0 0.0
  %1828 = vmatprep.subr.mxu0 0.0
  %1829 = vmatpush2.msra.mxu0 0.0
  %1830 = vmatprep.subr.mxu0 0.0
  %1831 = vmatpush2.msra.mxu0 0.0
  %1832 = vmatprep.subr.mxu0 0.0
  %1833 = vmatpush2.msra.mxu0 0.0
  %1834 = vmatprep.subr.mxu0 0.0
  %1835 = vmatpush2.msra.mxu0 0.0
  %1836 = vmatprep.subr.mxu0 0.0
  %1837 = vmatpush2.msra.mxu0 0.0
  %1838 = vmatprep.subr.mxu0 0.0
  %1839 = vmatpush2.msra.mxu0 0.0
  %1840 = vmatprep.mubr.f32.mxu0 0.0
  %1841 = vmatmul.mubr.f32.gmra.mxu0 %v1771
  %v1842 = vpop.f32.mrf.mxu0
  %v1843 = vadd.f32 %v1769, %v1842
  %v1844 = vpop.f32.mrf.mxu0
  %1845 = vmatprep.mubr.f32.mxu0 0.0
  %1846 = vmatmul.mubr.f32.gmra.mxu0 %v1774
  %v1847 = vpop.f32.mrf.mxu0
  %v1848 = vadd.f32 %v1769, %v1847
  %v1849 = vpop.f32.mrf.mxu0
  %1850 = vdwg.mxu0
  %v1851 = vadd.f32 %v133, %v1843
  %v1852 = vadd.f32 %v138, %v1848
  %v1853 = vld [vmem:[%s1 + $0x68] sm:$0x1]
  %v1854 = vld [vmem:[%s1 + $0x70] sm:$0x1]
  %v1855 = vsel %vm265, %v1851, 0.0
  %1856 = vadd.xlane.f32.xlu0 %v1855
  %v1857 = vpop.xlane.xlu0 %1856
  %v1858 = vsel %vm265, %v1852, 0.0
  %1859 = vadd.xlane.f32.xlu0 %v1858
  %v1860 = vpop.xlane.xlu0 %1859
  %v1861 = vmul.f32 %v1857, %v272
  %v1862 = vmul.f32 %v1860, %v272
  %v1863 = vsub.f32 %v1851, %v1861
  %v1864 = vsub.f32 %v1852, %v1862
  %v1865 = vmul.f32 %v1863, %v1863
  %v1866 = vmul.f32 %v1864, %v1864
  %v1867 = vsel %vm265, %v1865, 0.0
  %1868 = vadd.xlane.f32.xlu0 %v1867
  %v1869 = vpop.xlane.xlu0 %1868
  %v1870 = vsel %vm265, %v1866, 0.0
  %1871 = vadd.xlane.f32.xlu0 %v1870
  %v1872 = vpop.xlane.xlu0 %1871
  %v1873 = vmul.f32 %v1869, %v272
  %v1874 = vmul.f32 %v1872, %v272
  %v1875 = vadd.f32 %v1873, 1e-05
  %v1876 = vadd.f32 %v1874, 1e-05
  %v1877 = vrsqrt.pop %v1875
  %v1878 = vrsqrt.pop %v1876
  %v1879 = vmul.f32 %v1863, %v1877
  %v1880 = vmul.f32 %v1864, %v1878
  %v1881 = vlaneseq
  %v1882 = vshrl.u32 %v1881, 7
  %v1883 = vsub.s32 0, %v1882
  %v1884 = vrot.slane %v1853, %v1883
  %v1885 = vmul.f32 %v1879, %v1884
  %v1886 = vmul.f32 %v1880, %v1884
  %v1887 = vlaneseq
  %v1888 = vshrl.u32 %v1887, 7
  %v1889 = vsub.s32 0, %v1888
  %v1890 = vrot.slane %v1854, %v1889
  %v1891 = vadd.f32 %v1885, %v1890
  %v1892 = vadd.f32 %v1886, %v1890
  %v1893 = vld [vmem:[%s2 + $0x28] sm:$0xff]
  %v1894 = vld [vmem:[%s2 + $0x30] sm:$0xff]
  %v1895 = vld [vmem:[%s2 + $0x38] sm:$0xff]
  %v1896 = vld [vmem:[%s2 + $0x40] sm:$0xff]
  %v1897 = vld [vmem:[%s2 + $0x48] sm:$0x1]
  %v1898 = vlaneseq
  %v1899 = vshrl.u32 %v1898, 7
  %v1900 = vsub.s32 0, %v1899
  %v1901 = vrot.slane %v1897, %v1900
  %v1903 = vsel %vm265, %v1891, 0
  %v1906 = vsel %vm265, %v1892, 0
  %1908 = vmatprep.subr.mxu0 0.0
  %1909 = vmatpush1.msra.mxu0 0.0
  %1910 = vmatprep.subr.mxu0 0.0
  %1911 = vmatpush1.msra.mxu0 0.0
  %1912 = vmatprep.subr.mxu0 0.0
  %1913 = vmatpush1.msra.mxu0 0.0
  %1914 = vmatprep.subr.mxu0 0.0
  %1915 = vmatpush1.msra.mxu0 0.0
  %1916 = vmatprep.subr.mxu0 0.0
  %1917 = vmatpush1.msra.mxu0 0.0
  %1918 = vmatprep.subr.mxu0 0.0
  %1919 = vmatpush1.msra.mxu0 0.0
  %1920 = vmatprep.subr.mxu0 0.0
  %1921 = vmatpush1.msra.mxu0 0.0
  %1922 = vmatprep.subr.mxu0 0.0
  %1923 = vmatpush1.msra.mxu0 0.0
  %1924 = vmatprep.subr.mxu0 0.0
  %1925 = vmatpush1.msra.mxu0 0.0
  %1926 = vmatprep.subr.mxu0 0.0
  %1927 = vmatpush1.msra.mxu0 0.0
  %1928 = vmatprep.subr.mxu0 0.0
  %1929 = vmatpush1.msra.mxu0 0.0
  %1930 = vmatprep.subr.mxu0 0.0
  %1931 = vmatpush1.msra.mxu0 0.0
  %1932 = vmatprep.subr.mxu0 0.0
  %1933 = vmatpush1.msra.mxu0 %v1896
  %1934 = vmatprep.subr.mxu0 0.0
  %1935 = vmatpush1.msra.mxu0 %v1895
  %1936 = vmatprep.subr.mxu0 0.0
  %1937 = vmatpush1.msra.mxu0 %v1894
  %1938 = vmatprep.subr.mxu0 0.0
  %1939 = vmatpush1.msra.mxu0 %v1893
  %1940 = vmatprep.subr.mxu0 0.0
  %1941 = vmatpush2.msra.mxu0 0.0
  %1942 = vmatprep.subr.mxu0 0.0
  %1943 = vmatpush2.msra.mxu0 0.0
  %1944 = vmatprep.subr.mxu0 0.0
  %1945 = vmatpush2.msra.mxu0 0.0
  %1946 = vmatprep.subr.mxu0 0.0
  %1947 = vmatpush2.msra.mxu0 0.0
  %1948 = vmatprep.subr.mxu0 0.0
  %1949 = vmatpush2.msra.mxu0 0.0
  %1950 = vmatprep.subr.mxu0 0.0
  %1951 = vmatpush2.msra.mxu0 0.0
  %1952 = vmatprep.subr.mxu0 0.0
  %1953 = vmatpush2.msra.mxu0 0.0
  %1954 = vmatprep.subr.mxu0 0.0
  %1955 = vmatpush2.msra.mxu0 0.0
  %1956 = vmatprep.subr.mxu0 0.0
  %1957 = vmatpush2.msra.mxu0 0.0
  %1958 = vmatprep.subr.mxu0 0.0
  %1959 = vmatpush2.msra.mxu0 0.0
  %1960 = vmatprep.subr.mxu0 0.0
  %1961 = vmatpush2.msra.mxu0 0.0
  %1962 = vmatprep.subr.mxu0 0.0
  %1963 = vmatpush2.msra.mxu0 0.0
  %1964 = vmatprep.subr.mxu0 0.0
  %1965 = vmatpush2.msra.mxu0 0.0
  %1966 = vmatprep.subr.mxu0 0.0
  %1967 = vmatpush2.msra.mxu0 0.0
  %1968 = vmatprep.subr.mxu0 0.0
  %1969 = vmatpush2.msra.mxu0 0.0
  %1970 = vmatprep.subr.mxu0 0.0
  %1971 = vmatpush2.msra.mxu0 0.0
  %1972 = vmatprep.mubr.f32.mxu0 0.0
  %1973 = vmatmul.mubr.f32.gmra.mxu0 %v1903
  %v1974 = vpop.f32.mrf.mxu0
  %v1975 = vadd.f32 %v1901, %v1974
  %v1976 = vpop.f32.mrf.mxu0
  %1977 = vmatprep.mubr.f32.mxu0 0.0
  %1978 = vmatmul.mubr.f32.gmra.mxu0 %v1906
  %v1979 = vpop.f32.mrf.mxu0
  %v1980 = vadd.f32 %v1901, %v1979
  %v1981 = vpop.f32.mrf.mxu0
  %1982 = vdwg.mxu0
  %v1983 = vmul.f32 %v1975, 0.5
  %v1984 = vmul.f32 %v1980, 0.5
  %v1985 = vmul.f32 %v1975, 0.70710677
  %v1986 = vmul.f32 %v1980, 0.70710677
  %v1987 = verf.f32.pop %v1985
  %v1988 = verf.f32.pop %v1986
  %v1989 = vadd.f32 %v1987, 1.0
  %v1990 = vadd.f32 %v1988, 1.0
  %v1991 = vmul.f32 %v1983, %v1989
  %v1992 = vmul.f32 %v1984, %v1990
  %v1993 = vld [vmem:[%s1 + $0x78] sm:$0xff]
  %v1994 = vld [vmem:[%s1 + $0x80] sm:$0xff]
  %v1995 = vld [vmem:[%s1 + $0x88] sm:$0xff]
  %v1996 = vld [vmem:[%s1 + $0x90] sm:$0xff]
  %v1997 = vld [vmem:[%s1 + $0x98] sm:$0xff]
  %v1998 = vld [vmem:[%s1 + $0xa0] sm:$0xff]
  %v1999 = vld [vmem:[%s1 + $0xa8] sm:$0xff]
  %v2000 = vld [vmem:[%s1 + $0xb0] sm:$0xff]
  %v2001 = vld [vmem:[%s1 + $0xb8] sm:$0xff]
  %v2002 = vld [vmem:[%s1 + $0xc0] sm:$0xff]
  %v2003 = vld [vmem:[%s1 + $0xc8] sm:$0xff]
  %v2004 = vld [vmem:[%s1 + $0xd0] sm:$0xff]
  %v2005 = vld [vmem:[%s1 + $0xd8] sm:$0xff]
  %v2006 = vld [vmem:[%s1 + $0xe0] sm:$0xff]
  %v2007 = vld [vmem:[%s1 + $0xe8] sm:$0xff]
  %v2008 = vld [vmem:[%s1 + $0xf0] sm:$0xff]
  %v2009 = vld [vmem:[%s1 + $0xf8] sm:$0x1]
  %v2010 = vlaneseq
  %v2011 = vshrl.u32 %v2010, 7
  %v2012 = vsub.s32 0, %v2011
  %v2013 = vrot.slane %v2009, %v2012
  %2014 = vmatprep.subr.mxu0 0.0
  %2015 = vmatpush1.msra.mxu0 %v2008
  %2016 = vmatprep.subr.mxu0 0.0
  %2017 = vmatpush1.msra.mxu0 %v2007
  %2018 = vmatprep.subr.mxu0 0.0
  %2019 = vmatpush1.msra.mxu0 %v2006
  %2020 = vmatprep.subr.mxu0 0.0
  %2021 = vmatpush1.msra.mxu0 %v2005
  %2022 = vmatprep.subr.mxu0 0.0
  %2023 = vmatpush1.msra.mxu0 %v2004
  %2024 = vmatprep.subr.mxu0 0.0
  %2025 = vmatpush1.msra.mxu0 %v2003
  %2026 = vmatprep.subr.mxu0 0.0
  %2027 = vmatpush1.msra.mxu0 %v2002
  %2028 = vmatprep.subr.mxu0 0.0
  %2029 = vmatpush1.msra.mxu0 %v2001
  %2030 = vmatprep.subr.mxu0 0.0
  %2031 = vmatpush1.msra.mxu0 %v2000
  %2032 = vmatprep.subr.mxu0 0.0
  %2033 = vmatpush1.msra.mxu0 %v1999
  %2034 = vmatprep.subr.mxu0 0.0
  %2035 = vmatpush1.msra.mxu0 %v1998
  %2036 = vmatprep.subr.mxu0 0.0
  %2037 = vmatpush1.msra.mxu0 %v1997
  %2038 = vmatprep.subr.mxu0 0.0
  %2039 = vmatpush1.msra.mxu0 %v1996
  %2040 = vmatprep.subr.mxu0 0.0
  %2041 = vmatpush1.msra.mxu0 %v1995
  %2042 = vmatprep.subr.mxu0 0.0
  %2043 = vmatpush1.msra.mxu0 %v1994
  %2044 = vmatprep.subr.mxu0 0.0
  %2045 = vmatpush1.msra.mxu0 %v1993
  %2046 = vmatprep.subr.mxu0 0.0
  %2047 = vmatpush2.msra.mxu0 0.0
  %2048 = vmatprep.subr.mxu0 0.0
  %2049 = vmatpush2.msra.mxu0 0.0
  %2050 = vmatprep.subr.mxu0 0.0
  %2051 = vmatpush2.msra.mxu0 0.0
  %2052 = vmatprep.subr.mxu0 0.0
  %2053 = vmatpush2.msra.mxu0 0.0
  %2054 = vmatprep.subr.mxu0 0.0
  %2055 = vmatpush2.msra.mxu0 0.0
  %2056 = vmatprep.subr.mxu0 0.0
  %2057 = vmatpush2.msra.mxu0 0.0
  %2058 = vmatprep.subr.mxu0 0.0
  %2059 = vmatpush2.msra.mxu0 0.0
  %2060 = vmatprep.subr.mxu0 0.0
  %2061 = vmatpush2.msra.mxu0 0.0
  %2062 = vmatprep.subr.mxu0 0.0
  %2063 = vmatpush2.msra.mxu0 0.0
  %2064 = vmatprep.subr.mxu0 0.0
  %2065 = vmatpush2.msra.mxu0 0.0
  %2066 = vmatprep.subr.mxu0 0.0
  %2067 = vmatpush2.msra.mxu0 0.0
  %2068 = vmatprep.subr.mxu0 0.0
  %2069 = vmatpush2.msra.mxu0 0.0
  %2070 = vmatprep.subr.mxu0 0.0
  %2071 = vmatpush2.msra.mxu0 0.0
  %2072 = vmatprep.subr.mxu0 0.0
  %2073 = vmatpush2.msra.mxu0 0.0
  %2074 = vmatprep.subr.mxu0 0.0
  %2075 = vmatpush2.msra.mxu0 0.0
  %2076 = vmatprep.subr.mxu0 0.0
  %2077 = vmatpush2.msra.mxu0 0.0
  %2078 = vmatprep.mubr.f32.mxu0 0.0
  %2079 = vmatmul.mubr.f32.gmra.mxu0 %v1991
  %v2080 = vpop.f32.mrf.mxu0
  %v2081 = vadd.f32 %v2013, %v2080
  %v2082 = vpop.f32.mrf.mxu0
  %2083 = vmatprep.mubr.f32.mxu0 0.0
  %2084 = vmatmul.mubr.f32.gmra.mxu0 %v1992
  %v2085 = vpop.f32.mrf.mxu0
  %v2086 = vadd.f32 %v2013, %v2085
  %v2087 = vpop.f32.mrf.mxu0
  %2088 = vdwg.mxu0
  %v2089 = vadd.f32 %v1851, %v2081
  %v2090 = vadd.f32 %v1852, %v2086
  %v2091 = vld [vmem:[%s1 + $0x100] sm:$0x1]
  %v2092 = vld [vmem:[%s1 + $0x108] sm:$0x1]
  %v2093 = vsel %vm265, %v2089, 0.0
  %2094 = vadd.xlane.f32.xlu0 %v2093
  %v2095 = vpop.xlane.xlu0 %2094
  %v2096 = vsel %vm265, %v2090, 0.0
  %2097 = vadd.xlane.f32.xlu0 %v2096
  %v2098 = vpop.xlane.xlu0 %2097
  %v2099 = vmul.f32 %v2095, %v272
  %v2100 = vmul.f32 %v2098, %v272
  %v2101 = vsub.f32 %v2089, %v2099
  %v2102 = vsub.f32 %v2090, %v2100
  %v2103 = vmul.f32 %v2101, %v2101
  %v2104 = vmul.f32 %v2102, %v2102
  %v2105 = vsel %vm265, %v2103, 0.0
  %2106 = vadd.xlane.f32.xlu0 %v2105
  %v2107 = vpop.xlane.xlu0 %2106
  %v2108 = vsel %vm265, %v2104, 0.0
  %2109 = vadd.xlane.f32.xlu0 %v2108
  %v2110 = vpop.xlane.xlu0 %2109
  %v2111 = vmul.f32 %v2107, %v272
  %v2112 = vmul.f32 %v2110, %v272
  %v2113 = vadd.f32 %v2111, 1e-05
  %v2114 = vadd.f32 %v2112, 1e-05
  %v2115 = vrsqrt.pop %v2113
  %v2116 = vrsqrt.pop %v2114
  %v2117 = vmul.f32 %v2101, %v2115
  %v2118 = vmul.f32 %v2102, %v2116
  %v2119 = vlaneseq
  %v2120 = vshrl.u32 %v2119, 7
  %v2121 = vsub.s32 0, %v2120
  %v2122 = vrot.slane %v2091, %v2121
  %v2123 = vmul.f32 %v2117, %v2122
  %v2124 = vmul.f32 %v2118, %v2122
  %v2125 = vlaneseq
  %v2126 = vshrl.u32 %v2125, 7
  %v2127 = vsub.s32 0, %v2126
  %v2128 = vrot.slane %v2092, %v2127
  %v2129 = vadd.f32 %v2123, %v2128
  %v2130 = vadd.f32 %v2124, %v2128
  %v2131 = vld [vmem:[%s2 + $0x50] sm:$0xff]
  %v2132 = vld [vmem:[%s2 + $0x58] sm:$0xff]
  %v2133 = vld [vmem:[%s2 + $0x60] sm:$0xff]
  %v2134 = vld [vmem:[%s2 + $0x68] sm:$0xff]
  %v2135 = vld [vmem:[%s2 + $0x70] sm:$0x1]
  %v2136 = vlaneseq
  %v2137 = vshrl.u32 %v2136, 7
  %v2138 = vsub.s32 0, %v2137
  %v2139 = vrot.slane %v2135, %v2138
  %v2141 = vsel %vm265, %v2129, 0
  %v2144 = vsel %vm265, %v2130, 0
  %2146 = vmatprep.subr.mxu0 0.0
  %2147 = vmatpush1.msra.mxu0 0.0
  %2148 = vmatprep.subr.mxu0 0.0
  %2149 = vmatpush1.msra.mxu0 0.0
  %2150 = vmatprep.subr.mxu0 0.0
  %2151 = vmatpush1.msra.mxu0 0.0
  %2152 = vmatprep.subr.mxu0 0.0
  %2153 = vmatpush1.msra.mxu0 0.0
  %2154 = vmatprep.subr.mxu0 0.0
  %2155 = vmatpush1.msra.mxu0 0.0
  %2156 = vmatprep.subr.mxu0 0.0
  %2157 = vmatpush1.msra.mxu0 0.0
  %2158 = vmatprep.subr.mxu0 0.0
  %2159 = vmatpush1.msra.mxu0 0.0
  %2160 = vmatprep.subr.mxu0 0.0
  %2161 = vmatpush1.msra.mxu0 0.0
  %2162 = vmatprep.subr.mxu0 0.0
  %2163 = vmatpush1.msra.mxu0 0.0
  %2164 = vmatprep.subr.mxu0 0.0
  %2165 = vmatpush1.msra.mxu0 0.0
  %2166 = vmatprep.subr.mxu0 0.0
  %2167 = vmatpush1.msra.mxu0 0.0
  %2168 = vmatprep.subr.mxu0 0.0
  %2169 = vmatpush1.msra.mxu0 0.0
  %2170 = vmatprep.subr.mxu0 0.0
  %2171 = vmatpush1.msra.mxu0 %v2134
  %2172 = vmatprep.subr.mxu0 0.0
  %2173 = vmatpush1.msra.mxu0 %v2133
  %2174 = vmatprep.subr.mxu0 0.0
  %2175 = vmatpush1.msra.mxu0 %v2132
  %2176 = vmatprep.subr.mxu0 0.0
  %2177 = vmatpush1.msra.mxu0 %v2131
  %2178 = vmatprep.subr.mxu0 0.0
  %2179 = vmatpush2.msra.mxu0 0.0
  %2180 = vmatprep.subr.mxu0 0.0
  %2181 = vmatpush2.msra.mxu0 0.0
  %2182 = vmatprep.subr.mxu0 0.0
  %2183 = vmatpush2.msra.mxu0 0.0
  %2184 = vmatprep.subr.mxu0 0.0
  %2185 = vmatpush2.msra.mxu0 0.0
  %2186 = vmatprep.subr.mxu0 0.0
  %2187 = vmatpush2.msra.mxu0 0.0
  %2188 = vmatprep.subr.mxu0 0.0
  %2189 = vmatpush2.msra.mxu0 0.0
  %2190 = vmatprep.subr.mxu0 0.0
  %2191 = vmatpush2.msra.mxu0 0.0
  %2192 = vmatprep.subr.mxu0 0.0
  %2193 = vmatpush2.msra.mxu0 0.0
  %2194 = vmatprep.subr.mxu0 0.0
  %2195 = vmatpush2.msra.mxu0 0.0
  %2196 = vmatprep.subr.mxu0 0.0
  %2197 = vmatpush2.msra.mxu0 0.0
  %2198 = vmatprep.subr.mxu0 0.0
  %2199 = vmatpush2.msra.mxu0 0.0
  %2200 = vmatprep.subr.mxu0 0.0
  %2201 = vmatpush2.msra.mxu0 0.0
  %2202 = vmatprep.subr.mxu0 0.0
  %2203 = vmatpush2.msra.mxu0 0.0
  %2204 = vmatprep.subr.mxu0 0.0
  %2205 = vmatpush2.msra.mxu0 0.0
  %2206 = vmatprep.subr.mxu0 0.0
  %2207 = vmatpush2.msra.mxu0 0.0
  %2208 = vmatprep.subr.mxu0 0.0
  %2209 = vmatpush2.msra.mxu0 0.0
  %2210 = vmatprep.mubr.f32.mxu0 0.0
  %2211 = vmatmul.mubr.f32.gmra.mxu0 %v2141
  %v2212 = vpop.f32.mrf.mxu0
  %v2213 = vadd.f32 %v2139, %v2212
  %v2214 = vpop.f32.mrf.mxu0
  %2215 = vmatprep.mubr.f32.mxu0 0.0
  %2216 = vmatmul.mubr.f32.gmra.mxu0 %v2144
  %v2217 = vpop.f32.mrf.mxu0
  %v2218 = vadd.f32 %v2139, %v2217
  %v2219 = vpop.f32.mrf.mxu0
  %2220 = vdwg.mxu0
  %2222 = vrot.lane.b32.xlu0 %v2213, 96
  %v2223 = vpop.permute.xlu0 %2222
  %v2224 = vsel %vm398, %v2213, 0
  %v2226 = vsel %vm398, %v2223, 0
  %2228 = vmatprep.subr.mxu0 0.0
  %2229 = vmatpush1.xpose.msra.mxu0 0.0
  %2230 = vmatprep.subr.mxu0 0.0
  %2231 = vmatpush1.xpose.msra.mxu0 0.0
  %2232 = vmatprep.subr.mxu0 0.0
  %2233 = vmatpush1.xpose.msra.mxu0 0.0
  %2234 = vmatprep.subr.mxu0 0.0
  %2235 = vmatpush1.xpose.msra.mxu0 0.0
  %2236 = vmatprep.subr.mxu0 0.0
  %2237 = vmatpush1.xpose.msra.mxu0 0.0
  %2238 = vmatprep.subr.mxu0 0.0
  %2239 = vmatpush1.xpose.msra.mxu0 0.0
  %2240 = vmatprep.subr.mxu0 0.0
  %2241 = vmatpush1.xpose.msra.mxu0 0.0
  %2242 = vmatprep.subr.mxu0 0.0
  %2243 = vmatpush1.xpose.msra.mxu0 0.0
  %2244 = vmatprep.subr.mxu0 0.0
  %2245 = vmatpush1.xpose.msra.mxu0 0.0
  %2246 = vmatprep.subr.mxu0 0.0
  %2247 = vmatpush1.xpose.msra.mxu0 0.0
  %2248 = vmatprep.subr.mxu0 0.0
  %2249 = vmatpush1.xpose.msra.mxu0 0.0
  %2250 = vmatprep.subr.mxu0 0.0
  %2251 = vmatpush1.xpose.msra.mxu0 0.0
  %2252 = vmatprep.subr.mxu0 0.0
  %2253 = vmatpush1.xpose.msra.mxu0 0.0
  %2254 = vmatprep.subr.mxu0 0.0
  %2255 = vmatpush1.xpose.msra.mxu0 0.0
  %2256 = vmatprep.subr.mxu0 0.0
  %2257 = vmatpush1.xpose.msra.mxu0 0.0
  %2258 = vmatprep.subr.mxu0 0.0
  %2259 = vmatpush1.xpose.msra.mxu0 %v2226
  %2260 = vmatprep.subr.mxu0 0.0
  %2261 = vmatpush2.xpose.msra.mxu0 0.0
  %2262 = vmatprep.subr.mxu0 0.0
  %2263 = vmatpush2.xpose.msra.mxu0 0.0
  %2264 = vmatprep.subr.mxu0 0.0
  %2265 = vmatpush2.xpose.msra.mxu0 0.0
  %2266 = vmatprep.subr.mxu0 0.0
  %2267 = vmatpush2.xpose.msra.mxu0 0.0
  %2268 = vmatprep.subr.mxu0 0.0
  %2269 = vmatpush2.xpose.msra.mxu0 0.0
  %2270 = vmatprep.subr.mxu0 0.0
  %2271 = vmatpush2.xpose.msra.mxu0 0.0
  %2272 = vmatprep.subr.mxu0 0.0
  %2273 = vmatpush2.xpose.msra.mxu0 0.0
  %2274 = vmatprep.subr.mxu0 0.0
  %2275 = vmatpush2.xpose.msra.mxu0 0.0
  %2276 = vmatprep.subr.mxu0 0.0
  %2277 = vmatpush2.xpose.msra.mxu0 0.0
  %2278 = vmatprep.subr.mxu0 0.0
  %2279 = vmatpush2.xpose.msra.mxu0 0.0
  %2280 = vmatprep.subr.mxu0 0.0
  %2281 = vmatpush2.xpose.msra.mxu0 0.0
  %2282 = vmatprep.subr.mxu0 0.0
  %2283 = vmatpush2.xpose.msra.mxu0 0.0
  %2284 = vmatprep.subr.mxu0 0.0
  %2285 = vmatpush2.xpose.msra.mxu0 0.0
  %2286 = vmatprep.subr.mxu0 0.0
  %2287 = vmatpush2.xpose.msra.mxu0 0.0
  %2288 = vmatprep.subr.mxu0 0.0
  %2289 = vmatpush2.xpose.msra.mxu0 0.0
  %2290 = vmatprep.subr.mxu0 0.0
  %2291 = vmatpush2.xpose.msra.mxu0 0.0
  %2292 = vmatprep.mubr.f32.mxu0 0.0
  %2293 = vmatmul.mubr.f32.gmra.mxu0 %v2224
  %v2294 = vpop.f32.mrf.mxu0
  %v2295 = vadd.f32 0.0, %v2294
  %v2296 = vpop.f32.mrf.mxu0
  %2297 = vdwg.mxu0
  %2299 = vrot.lane.b32.xlu0 %v2218, 96
  %v2300 = vpop.permute.xlu0 %2299
  %v2301 = vsel %vm398, %v2218, 0
  %v2303 = vsel %vm398, %v2300, 0
  %2305 = vmatprep.subr.mxu0 0.0
  %2306 = vmatpush1.xpose.msra.mxu0 0.0
  %2307 = vmatprep.subr.mxu0 0.0
  %2308 = vmatpush1.xpose.msra.mxu0 0.0
  %2309 = vmatprep.subr.mxu0 0.0
  %2310 = vmatpush1.xpose.msra.mxu0 0.0
  %2311 = vmatprep.subr.mxu0 0.0
  %2312 = vmatpush1.xpose.msra.mxu0 0.0
  %2313 = vmatprep.subr.mxu0 0.0
  %2314 = vmatpush1.xpose.msra.mxu0 0.0
  %2315 = vmatprep.subr.mxu0 0.0
  %2316 = vmatpush1.xpose.msra.mxu0 0.0
  %2317 = vmatprep.subr.mxu0 0.0
  %2318 = vmatpush1.xpose.msra.mxu0 0.0
  %2319 = vmatprep.subr.mxu0 0.0
  %2320 = vmatpush1.xpose.msra.mxu0 0.0
  %2321 = vmatprep.subr.mxu0 0.0
  %2322 = vmatpush1.xpose.msra.mxu0 0.0
  %2323 = vmatprep.subr.mxu0 0.0
  %2324 = vmatpush1.xpose.msra.mxu0 0.0
  %2325 = vmatprep.subr.mxu0 0.0
  %2326 = vmatpush1.xpose.msra.mxu0 0.0
  %2327 = vmatprep.subr.mxu0 0.0
  %2328 = vmatpush1.xpose.msra.mxu0 0.0
  %2329 = vmatprep.subr.mxu0 0.0
  %2330 = vmatpush1.xpose.msra.mxu0 0.0
  %2331 = vmatprep.subr.mxu0 0.0
  %2332 = vmatpush1.xpose.msra.mxu0 0.0
  %2333 = vmatprep.subr.mxu0 0.0
  %2334 = vmatpush1.xpose.msra.mxu0 0.0
  %2335 = vmatprep.subr.mxu0 0.0
  %2336 = vmatpush1.xpose.msra.mxu0 %v2303
  %2337 = vmatprep.subr.mxu0 0.0
  %2338 = vmatpush2.xpose.msra.mxu0 0.0
  %2339 = vmatprep.subr.mxu0 0.0
  %2340 = vmatpush2.xpose.msra.mxu0 0.0
  %2341 = vmatprep.subr.mxu0 0.0
  %2342 = vmatpush2.xpose.msra.mxu0 0.0
  %2343 = vmatprep.subr.mxu0 0.0
  %2344 = vmatpush2.xpose.msra.mxu0 0.0
  %2345 = vmatprep.subr.mxu0 0.0
  %2346 = vmatpush2.xpose.msra.mxu0 0.0
  %2347 = vmatprep.subr.mxu0 0.0
  %2348 = vmatpush2.xpose.msra.mxu0 0.0
  %2349 = vmatprep.subr.mxu0 0.0
  %2350 = vmatpush2.xpose.msra.mxu0 0.0
  %2351 = vmatprep.subr.mxu0 0.0
  %2352 = vmatpush2.xpose.msra.mxu0 0.0
  %2353 = vmatprep.subr.mxu0 0.0
  %2354 = vmatpush2.xpose.msra.mxu0 0.0
  %2355 = vmatprep.subr.mxu0 0.0
  %2356 = vmatpush2.xpose.msra.mxu0 0.0
  %2357 = vmatprep.subr.mxu0 0.0
  %2358 = vmatpush2.xpose.msra.mxu0 0.0
  %2359 = vmatprep.subr.mxu0 0.0
  %2360 = vmatpush2.xpose.msra.mxu0 0.0
  %2361 = vmatprep.subr.mxu0 0.0
  %2362 = vmatpush2.xpose.msra.mxu0 0.0
  %2363 = vmatprep.subr.mxu0 0.0
  %2364 = vmatpush2.xpose.msra.mxu0 0.0
  %2365 = vmatprep.subr.mxu0 0.0
  %2366 = vmatpush2.xpose.msra.mxu0 0.0
  %2367 = vmatprep.subr.mxu0 0.0
  %2368 = vmatpush2.xpose.msra.mxu0 0.0
  %2369 = vmatprep.mubr.f32.mxu0 0.0
  %2370 = vmatmul.mubr.f32.gmra.mxu0 %v2301
  %v2371 = vpop.f32.mrf.mxu0
  %v2372 = vadd.f32 0.0, %v2371
  %v2373 = vpop.f32.mrf.mxu0
  %2374 = vdwg.mxu0
  %v2375 = vmul.f32 %v2295, 0.35355338
  %v2376 = vmul.f32 %v2372, 0.35355338
  %v2377 = vadd.f32 %v2375, %v261
  %v2378 = vadd.f32 %v2376, %v262
  %v2379 = vsel %vm398, %v2377, -inf
  %2380 = vmax.xlane.f32.xlu0 %v2379
  %v2381 = vpop.xlane.xlu0 %2380
  %v2382 = vsel %vm398, %v2378, -inf
  %2383 = vmax.xlane.f32.xlu0 %v2382
  %v2384 = vpop.xlane.xlu0 %2383
  %v2385 = vsub.f32 %v2377, %v2381
  %v2386 = vsub.f32 %v2378, %v2384
  %v2387 = vmul.f32 %v2385, 1.442695
  %v2388 = vpow.pop %v2387
  %v2389 = vmul.f32 %v2386, 1.442695
  %v2390 = vpow.pop %v2389
  %v2391 = vsel %vm398, %v2388, 0.0
  %2392 = vadd.xlane.f32.xlu0 %v2391
  %v2393 = vpop.xlane.xlu0 %2392
  %v2394 = vsel %vm398, %v2390, 0.0
  %2395 = vadd.xlane.f32.xlu0 %v2394
  %v2396 = vpop.xlane.xlu0 %2395
  %v2397 = vrcp.pop %v2393
  %v2398 = vmul.f32 %v2388, %v2397
  %v2399 = vrcp.pop %v2396
  %v2400 = vmul.f32 %v2390, %v2399
  %2401 = vrot.lane.b32.xlu0 %v2213, 64
  %v2402 = vpop.permute.xlu0 %2401
  %v2405 = vsel %vm398, %v2398, 0
  %2407 = vmatprep.subr.mxu0 0.0
  %2408 = vmatpush1.msra.mxu0 0.0
  %2409 = vmatprep.subr.mxu0 0.0
  %2410 = vmatpush1.msra.mxu0 0.0
  %2411 = vmatprep.subr.mxu0 0.0
  %2412 = vmatpush1.msra.mxu0 0.0
  %2413 = vmatprep.subr.mxu0 0.0
  %2414 = vmatpush1.msra.mxu0 0.0
  %2415 = vmatprep.subr.mxu0 0.0
  %2416 = vmatpush1.msra.mxu0 0.0
  %2417 = vmatprep.subr.mxu0 0.0
  %2418 = vmatpush1.msra.mxu0 0.0
  %2419 = vmatprep.subr.mxu0 0.0
  %2420 = vmatpush1.msra.mxu0 0.0
  %2421 = vmatprep.subr.mxu0 0.0
  %2422 = vmatpush1.msra.mxu0 0.0
  %2423 = vmatprep.subr.mxu0 0.0
  %2424 = vmatpush1.msra.mxu0 0.0
  %2425 = vmatprep.subr.mxu0 0.0
  %2426 = vmatpush1.msra.mxu0 0.0
  %2427 = vmatprep.subr.mxu0 0.0
  %2428 = vmatpush1.msra.mxu0 0.0
  %2429 = vmatprep.subr.mxu0 0.0
  %2430 = vmatpush1.msra.mxu0 0.0
  %2431 = vmatprep.subr.mxu0 0.0
  %2432 = vmatpush1.msra.mxu0 0.0
  %2433 = vmatprep.subr.mxu0 0.0
  %2434 = vmatpush1.msra.mxu0 0.0
  %2435 = vmatprep.subr.mxu0 0.0
  %2436 = vmatpush1.msra.mxu0 0.0
  %2437 = vmatprep.subr.mxu0 0.0
  %2438 = vmatpush1.msra.mxu0 %v2402
  %2439 = vmatprep.subr.mxu0 0.0
  %2440 = vmatpush2.msra.mxu0 0.0
  %2441 = vmatprep.subr.mxu0 0.0
  %2442 = vmatpush2.msra.mxu0 0.0
  %2443 = vmatprep.subr.mxu0 0.0
  %2444 = vmatpush2.msra.mxu0 0.0
  %2445 = vmatprep.subr.mxu0 0.0
  %2446 = vmatpush2.msra.mxu0 0.0
  %2447 = vmatprep.subr.mxu0 0.0
  %2448 = vmatpush2.msra.mxu0 0.0
  %2449 = vmatprep.subr.mxu0 0.0
  %2450 = vmatpush2.msra.mxu0 0.0
  %2451 = vmatprep.subr.mxu0 0.0
  %2452 = vmatpush2.msra.mxu0 0.0
  %2453 = vmatprep.subr.mxu0 0.0
  %2454 = vmatpush2.msra.mxu0 0.0
  %2455 = vmatprep.subr.mxu0 0.0
  %2456 = vmatpush2.msra.mxu0 0.0
  %2457 = vmatprep.subr.mxu0 0.0
  %2458 = vmatpush2.msra.mxu0 0.0
  %2459 = vmatprep.subr.mxu0 0.0
  %2460 = vmatpush2.msra.mxu0 0.0
  %2461 = vmatprep.subr.mxu0 0.0
  %2462 = vmatpush2.msra.mxu0 0.0
  %2463 = vmatprep.subr.mxu0 0.0
  %2464 = vmatpush2.msra.mxu0 0.0
  %2465 = vmatprep.subr.mxu0 0.0
  %2466 = vmatpush2.msra.mxu0 0.0
  %2467 = vmatprep.subr.mxu0 0.0
  %2468 = vmatpush2.msra.mxu0 0.0
  %2469 = vmatprep.subr.mxu0 0.0
  %2470 = vmatpush2.msra.mxu0 0.0
  %2471 = vmatprep.mubr.f32.mxu0 0.0
  %2472 = vmatmul.mubr.f32.gmra.mxu0 %v2405
  %v2473 = vpop.f32.mrf.mxu0
  %v2474 = vadd.f32 0.0, %v2473
  %v2475 = vpop.f32.mrf.mxu0
  %2476 = vdwg.mxu0
  %2477 = vrot.lane.b32.xlu0 %v2218, 64
  %v2478 = vpop.permute.xlu0 %2477
  %v2481 = vsel %vm398, %v2400, 0
  %2483 = vmatprep.subr.mxu0 0.0
  %2484 = vmatpush1.msra.mxu0 0.0
  %2485 = vmatprep.subr.mxu0 0.0
  %2486 = vmatpush1.msra.mxu0 0.0
  %2487 = vmatprep.subr.mxu0 0.0
  %2488 = vmatpush1.msra.mxu0 0.0
  %2489 = vmatprep.subr.mxu0 0.0
  %2490 = vmatpush1.msra.mxu0 0.0
  %2491 = vmatprep.subr.mxu0 0.0
  %2492 = vmatpush1.msra.mxu0 0.0
  %2493 = vmatprep.subr.mxu0 0.0
  %2494 = vmatpush1.msra.mxu0 0.0
  %2495 = vmatprep.subr.mxu0 0.0
  %2496 = vmatpush1.msra.mxu0 0.0
  %2497 = vmatprep.subr.mxu0 0.0
  %2498 = vmatpush1.msra.mxu0 0.0
  %2499 = vmatprep.subr.mxu0 0.0
  %2500 = vmatpush1.msra.mxu0 0.0
  %2501 = vmatprep.subr.mxu0 0.0
  %2502 = vmatpush1.msra.mxu0 0.0
  %2503 = vmatprep.subr.mxu0 0.0
  %2504 = vmatpush1.msra.mxu0 0.0
  %2505 = vmatprep.subr.mxu0 0.0
  %2506 = vmatpush1.msra.mxu0 0.0
  %2507 = vmatprep.subr.mxu0 0.0
  %2508 = vmatpush1.msra.mxu0 0.0
  %2509 = vmatprep.subr.mxu0 0.0
  %2510 = vmatpush1.msra.mxu0 0.0
  %2511 = vmatprep.subr.mxu0 0.0
  %2512 = vmatpush1.msra.mxu0 0.0
  %2513 = vmatprep.subr.mxu0 0.0
  %2514 = vmatpush1.msra.mxu0 %v2478
  %2515 = vmatprep.subr.mxu0 0.0
  %2516 = vmatpush2.msra.mxu0 0.0
  %2517 = vmatprep.subr.mxu0 0.0
  %2518 = vmatpush2.msra.mxu0 0.0
  %2519 = vmatprep.subr.mxu0 0.0
  %2520 = vmatpush2.msra.mxu0 0.0
  %2521 = vmatprep.subr.mxu0 0.0
  %2522 = vmatpush2.msra.mxu0 0.0
  %2523 = vmatprep.subr.mxu0 0.0
  %2524 = vmatpush2.msra.mxu0 0.0
  %2525 = vmatprep.subr.mxu0 0.0
  %2526 = vmatpush2.msra.mxu0 0.0
  %2527 = vmatprep.subr.mxu0 0.0
  %2528 = vmatpush2.msra.mxu0 0.0
  %2529 = vmatprep.subr.mxu0 0.0
  %2530 = vmatpush2.msra.mxu0 0.0
  %2531 = vmatprep.subr.mxu0 0.0
  %2532 = vmatpush2.msra.mxu0 0.0
  %2533 = vmatprep.subr.mxu0 0.0
  %2534 = vmatpush2.msra.mxu0 0.0
  %2535 = vmatprep.subr.mxu0 0.0
  %2536 = vmatpush2.msra.mxu0 0.0
  %2537 = vmatprep.subr.mxu0 0.0
  %2538 = vmatpush2.msra.mxu0 0.0
  %2539 = vmatprep.subr.mxu0 0.0
  %2540 = vmatpush2.msra.mxu0 0.0
  %2541 = vmatprep.subr.mxu0 0.0
  %2542 = vmatpush2.msra.mxu0 0.0
  %2543 = vmatprep.subr.mxu0 0.0
  %2544 = vmatpush2.msra.mxu0 0.0
  %2545 = vmatprep.subr.mxu0 0.0
  %2546 = vmatpush2.msra.mxu0 0.0
  %2547 = vmatprep.mubr.f32.mxu0 0.0
  %2548 = vmatmul.mubr.f32.gmra.mxu0 %v2481
  %v2549 = vpop.f32.mrf.mxu0
  %v2550 = vadd.f32 0.0, %v2549
  %v2551 = vpop.f32.mrf.mxu0
  %2552 = vdwg.mxu0
  %2553 = vrot.lane.b32.xlu0 %v2213, 120
  %v2554 = vpop.permute.xlu0 %2553
  %2555 = vrot.lane.b32.xlu0 %v2213, 88
  %v2556 = vpop.permute.xlu0 %2555
  %v2557 = vsel %vm398, %v2554, 0
  %v2559 = vsel %vm398, %v2556, 0
  %2561 = vmatprep.subr.mxu0 0.0
  %2562 = vmatpush1.xpose.msra.mxu0 0.0
  %2563 = vmatprep.subr.mxu0 0.0
  %2564 = vmatpush1.xpose.msra.mxu0 0.0
  %2565 = vmatprep.subr.mxu0 0.0
  %2566 = vmatpush1.xpose.msra.mxu0 0.0
  %2567 = vmatprep.subr.mxu0 0.0
  %2568 = vmatpush1.xpose.msra.mxu0 0.0
  %2569 = vmatprep.subr.mxu0 0.0
  %2570 = vmatpush1.xpose.msra.mxu0 0.0
  %2571 = vmatprep.subr.mxu0 0.0
  %2572 = vmatpush1.xpose.msra.mxu0 0.0
  %2573 = vmatprep.subr.mxu0 0.0
  %2574 = vmatpush1.xpose.msra.mxu0 0.0
  %2575 = vmatprep.subr.mxu0 0.0
  %2576 = vmatpush1.xpose.msra.mxu0 0.0
  %2577 = vmatprep.subr.mxu0 0.0
  %2578 = vmatpush1.xpose.msra.mxu0 0.0
  %2579 = vmatprep.subr.mxu0 0.0
  %2580 = vmatpush1.xpose.msra.mxu0 0.0
  %2581 = vmatprep.subr.mxu0 0.0
  %2582 = vmatpush1.xpose.msra.mxu0 0.0
  %2583 = vmatprep.subr.mxu0 0.0
  %2584 = vmatpush1.xpose.msra.mxu0 0.0
  %2585 = vmatprep.subr.mxu0 0.0
  %2586 = vmatpush1.xpose.msra.mxu0 0.0
  %2587 = vmatprep.subr.mxu0 0.0
  %2588 = vmatpush1.xpose.msra.mxu0 0.0
  %2589 = vmatprep.subr.mxu0 0.0
  %2590 = vmatpush1.xpose.msra.mxu0 0.0
  %2591 = vmatprep.subr.mxu0 0.0
  %2592 = vmatpush1.xpose.msra.mxu0 %v2559
  %2593 = vmatprep.subr.mxu0 0.0
  %2594 = vmatpush2.xpose.msra.mxu0 0.0
  %2595 = vmatprep.subr.mxu0 0.0
  %2596 = vmatpush2.xpose.msra.mxu0 0.0
  %2597 = vmatprep.subr.mxu0 0.0
  %2598 = vmatpush2.xpose.msra.mxu0 0.0
  %2599 = vmatprep.subr.mxu0 0.0
  %2600 = vmatpush2.xpose.msra.mxu0 0.0
  %2601 = vmatprep.subr.mxu0 0.0
  %2602 = vmatpush2.xpose.msra.mxu0 0.0
  %2603 = vmatprep.subr.mxu0 0.0
  %2604 = vmatpush2.xpose.msra.mxu0 0.0
  %2605 = vmatprep.subr.mxu0 0.0
  %2606 = vmatpush2.xpose.msra.mxu0 0.0
  %2607 = vmatprep.subr.mxu0 0.0
  %2608 = vmatpush2.xpose.msra.mxu0 0.0
  %2609 = vmatprep.subr.mxu0 0.0
  %2610 = vmatpush2.xpose.msra.mxu0 0.0
  %2611 = vmatprep.subr.mxu0 0.0
  %2612 = vmatpush2.xpose.msra.mxu0 0.0
  %2613 = vmatprep.subr.mxu0 0.0
  %2614 = vmatpush2.xpose.msra.mxu0 0.0
  %2615 = vmatprep.subr.mxu0 0.0
  %2616 = vmatpush2.xpose.msra.mxu0 0.0
  %2617 = vmatprep.subr.mxu0 0.0
  %2618 = vmatpush2.xpose.msra.mxu0 0.0
  %2619 = vmatprep.subr.mxu0 0.0
  %2620 = vmatpush2.xpose.msra.mxu0 0.0
  %2621 = vmatprep.subr.mxu0 0.0
  %2622 = vmatpush2.xpose.msra.mxu0 0.0
  %2623 = vmatprep.subr.mxu0 0.0
  %2624 = vmatpush2.xpose.msra.mxu0 0.0
  %2625 = vmatprep.mubr.f32.mxu0 0.0
  %2626 = vmatmul.mubr.f32.gmra.mxu0 %v2557
  %v2627 = vpop.f32.mrf.mxu0
  %v2628 = vadd.f32 0.0, %v2627
  %v2629 = vpop.f32.mrf.mxu0
  %2630 = vdwg.mxu0
  %2631 = vrot.lane.b32.xlu0 %v2218, 120
  %v2632 = vpop.permute.xlu0 %2631
  %2633 = vrot.lane.b32.xlu0 %v2218, 88
  %v2634 = vpop.permute.xlu0 %2633
  %v2635 = vsel %vm398, %v2632, 0
  %v2637 = vsel %vm398, %v2634, 0
  %2639 = vmatprep.subr.mxu0 0.0
  %2640 = vmatpush1.xpose.msra.mxu0 0.0
  %2641 = vmatprep.subr.mxu0 0.0
  %2642 = vmatpush1.xpose.msra.mxu0 0.0
  %2643 = vmatprep.subr.mxu0 0.0
  %2644 = vmatpush1.xpose.msra.mxu0 0.0
  %2645 = vmatprep.subr.mxu0 0.0
  %2646 = vmatpush1.xpose.msra.mxu0 0.0
  %2647 = vmatprep.subr.mxu0 0.0
  %2648 = vmatpush1.xpose.msra.mxu0 0.0
  %2649 = vmatprep.subr.mxu0 0.0
  %2650 = vmatpush1.xpose.msra.mxu0 0.0
  %2651 = vmatprep.subr.mxu0 0.0
  %2652 = vmatpush1.xpose.msra.mxu0 0.0
  %2653 = vmatprep.subr.mxu0 0.0
  %2654 = vmatpush1.xpose.msra.mxu0 0.0
  %2655 = vmatprep.subr.mxu0 0.0
  %2656 = vmatpush1.xpose.msra.mxu0 0.0
  %2657 = vmatprep.subr.mxu0 0.0
  %2658 = vmatpush1.xpose.msra.mxu0 0.0
  %2659 = vmatprep.subr.mxu0 0.0
  %2660 = vmatpush1.xpose.msra.mxu0 0.0
  %2661 = vmatprep.subr.mxu0 0.0
  %2662 = vmatpush1.xpose.msra.mxu0 0.0
  %2663 = vmatprep.subr.mxu0 0.0
  %2664 = vmatpush1.xpose.msra.mxu0 0.0
  %2665 = vmatprep.subr.mxu0 0.0
  %2666 = vmatpush1.xpose.msra.mxu0 0.0
  %2667 = vmatprep.subr.mxu0 0.0
  %2668 = vmatpush1.xpose.msra.mxu0 0.0
  %2669 = vmatprep.subr.mxu0 0.0
  %2670 = vmatpush1.xpose.msra.mxu0 %v2637
  %2671 = vmatprep.subr.mxu0 0.0
  %2672 = vmatpush2.xpose.msra.mxu0 0.0
  %2673 = vmatprep.subr.mxu0 0.0
  %2674 = vmatpush2.xpose.msra.mxu0 0.0
  %2675 = vmatprep.subr.mxu0 0.0
  %2676 = vmatpush2.xpose.msra.mxu0 0.0
  %2677 = vmatprep.subr.mxu0 0.0
  %2678 = vmatpush2.xpose.msra.mxu0 0.0
  %2679 = vmatprep.subr.mxu0 0.0
  %2680 = vmatpush2.xpose.msra.mxu0 0.0
  %2681 = vmatprep.subr.mxu0 0.0
  %2682 = vmatpush2.xpose.msra.mxu0 0.0
  %2683 = vmatprep.subr.mxu0 0.0
  %2684 = vmatpush2.xpose.msra.mxu0 0.0
  %2685 = vmatprep.subr.mxu0 0.0
  %2686 = vmatpush2.xpose.msra.mxu0 0.0
  %2687 = vmatprep.subr.mxu0 0.0
  %2688 = vmatpush2.xpose.msra.mxu0 0.0
  %2689 = vmatprep.subr.mxu0 0.0
  %2690 = vmatpush2.xpose.msra.mxu0 0.0
  %2691 = vmatprep.subr.mxu0 0.0
  %2692 = vmatpush2.xpose.msra.mxu0 0.0
  %2693 = vmatprep.subr.mxu0 0.0
  %2694 = vmatpush2.xpose.msra.mxu0 0.0
  %2695 = vmatprep.subr.mxu0 0.0
  %2696 = vmatpush2.xpose.msra.mxu0 0.0
  %2697 = vmatprep.subr.mxu0 0.0
  %2698 = vmatpush2.xpose.msra.mxu0 0.0
  %2699 = vmatprep.subr.mxu0 0.0
  %2700 = vmatpush2.xpose.msra.mxu0 0.0
  %2701 = vmatprep.subr.mxu0 0.0
  %2702 = vmatpush2.xpose.msra.mxu0 0.0
  %2703 = vmatprep.mubr.f32.mxu0 0.0
  %2704 = vmatmul.mubr.f32.gmra.mxu0 %v2635
  %v2705 = vpop.f32.mrf.mxu0
  %v2706 = vadd.f32 0.0, %v2705
  %v2707 = vpop.f32.mrf.mxu0
  %2708 = vdwg.mxu0
  %v2709 = vmul.f32 %v2628, 0.35355338
  %v2710 = vmul.f32 %v2706, 0.35355338
  %v2711 = vadd.f32 %v2709, %v261
  %v2712 = vadd.f32 %v2710, %v262
  %v2713 = vsel %vm398, %v2711, -inf
  %2714 = vmax.xlane.f32.xlu0 %v2713
  %v2715 = vpop.xlane.xlu0 %2714
  %v2716 = vsel %vm398, %v2712, -inf
  %2717 = vmax.xlane.f32.xlu0 %v2716
  %v2718 = vpop.xlane.xlu0 %2717
  %v2719 = vsub.f32 %v2711, %v2715
  %v2720 = vsub.f32 %v2712, %v2718
  %v2721 = vmul.f32 %v2719, 1.442695
  %v2722 = vpow.pop %v2721
  %v2723 = vmul.f32 %v2720, 1.442695
  %v2724 = vpow.pop %v2723
  %v2725 = vsel %vm398, %v2722, 0.0
  %2726 = vadd.xlane.f32.xlu0 %v2725
  %v2727 = vpop.xlane.xlu0 %2726
  %v2728 = vsel %vm398, %v2724, 0.0
  %2729 = vadd.xlane.f32.xlu0 %v2728
  %v2730 = vpop.xlane.xlu0 %2729
  %v2731 = vrcp.pop %v2727
  %v2732 = vmul.f32 %v2722, %v2731
  %v2733 = vrcp.pop %v2730
  %v2734 = vmul.f32 %v2724, %v2733
  %2735 = vrot.lane.b32.xlu0 %v2213, 56
  %v2736 = vpop.permute.xlu0 %2735
  %v2739 = vsel %vm398, %v2732, 0
  %2741 = vmatprep.subr.mxu0 0.0
  %2742 = vmatpush1.msra.mxu0 0.0
  %2743 = vmatprep.subr.mxu0 0.0
  %2744 = vmatpush1.msra.mxu0 0.0
  %2745 = vmatprep.subr.mxu0 0.0
  %2746 = vmatpush1.msra.mxu0 0.0
  %2747 = vmatprep.subr.mxu0 0.0
  %2748 = vmatpush1.msra.mxu0 0.0
  %2749 = vmatprep.subr.mxu0 0.0
  %2750 = vmatpush1.msra.mxu0 0.0
  %2751 = vmatprep.subr.mxu0 0.0
  %2752 = vmatpush1.msra.mxu0 0.0
  %2753 = vmatprep.subr.mxu0 0.0
  %2754 = vmatpush1.msra.mxu0 0.0
  %2755 = vmatprep.subr.mxu0 0.0
  %2756 = vmatpush1.msra.mxu0 0.0
  %2757 = vmatprep.subr.mxu0 0.0
  %2758 = vmatpush1.msra.mxu0 0.0
  %2759 = vmatprep.subr.mxu0 0.0
  %2760 = vmatpush1.msra.mxu0 0.0
  %2761 = vmatprep.subr.mxu0 0.0
  %2762 = vmatpush1.msra.mxu0 0.0
  %2763 = vmatprep.subr.mxu0 0.0
  %2764 = vmatpush1.msra.mxu0 0.0
  %2765 = vmatprep.subr.mxu0 0.0
  %2766 = vmatpush1.msra.mxu0 0.0
  %2767 = vmatprep.subr.mxu0 0.0
  %2768 = vmatpush1.msra.mxu0 0.0
  %2769 = vmatprep.subr.mxu0 0.0
  %2770 = vmatpush1.msra.mxu0 0.0
  %2771 = vmatprep.subr.mxu0 0.0
  %2772 = vmatpush1.msra.mxu0 %v2736
  %2773 = vmatprep.subr.mxu0 0.0
  %2774 = vmatpush2.msra.mxu0 0.0
  %2775 = vmatprep.subr.mxu0 0.0
  %2776 = vmatpush2.msra.mxu0 0.0
  %2777 = vmatprep.subr.mxu0 0.0
  %2778 = vmatpush2.msra.mxu0 0.0
  %2779 = vmatprep.subr.mxu0 0.0
  %2780 = vmatpush2.msra.mxu0 0.0
  %2781 = vmatprep.subr.mxu0 0.0
  %2782 = vmatpush2.msra.mxu0 0.0
  %2783 = vmatprep.subr.mxu0 0.0
  %2784 = vmatpush2.msra.mxu0 0.0
  %2785 = vmatprep.subr.mxu0 0.0
  %2786 = vmatpush2.msra.mxu0 0.0
  %2787 = vmatprep.subr.mxu0 0.0
  %2788 = vmatpush2.msra.mxu0 0.0
  %2789 = vmatprep.subr.mxu0 0.0
  %2790 = vmatpush2.msra.mxu0 0.0
  %2791 = vmatprep.subr.mxu0 0.0
  %2792 = vmatpush2.msra.mxu0 0.0
  %2793 = vmatprep.subr.mxu0 0.0
  %2794 = vmatpush2.msra.mxu0 0.0
  %2795 = vmatprep.subr.mxu0 0.0
  %2796 = vmatpush2.msra.mxu0 0.0
  %2797 = vmatprep.subr.mxu0 0.0
  %2798 = vmatpush2.msra.mxu0 0.0
  %2799 = vmatprep.subr.mxu0 0.0
  %2800 = vmatpush2.msra.mxu0 0.0
  %2801 = vmatprep.subr.mxu0 0.0
  %2802 = vmatpush2.msra.mxu0 0.0
  %2803 = vmatprep.subr.mxu0 0.0
  %2804 = vmatpush2.msra.mxu0 0.0
  %2805 = vmatprep.mubr.f32.mxu0 0.0
  %2806 = vmatmul.mubr.f32.gmra.mxu0 %v2739
  %v2807 = vpop.f32.mrf.mxu0
  %v2808 = vadd.f32 0.0, %v2807
  %v2809 = vpop.f32.mrf.mxu0
  %2810 = vdwg.mxu0
  %2811 = vrot.lane.b32.xlu0 %v2218, 56
  %v2812 = vpop.permute.xlu0 %2811
  %v2815 = vsel %vm398, %v2734, 0
  %2817 = vmatprep.subr.mxu0 0.0
  %2818 = vmatpush1.msra.mxu0 0.0
  %2819 = vmatprep.subr.mxu0 0.0
  %2820 = vmatpush1.msra.mxu0 0.0
  %2821 = vmatprep.subr.mxu0 0.0
  %2822 = vmatpush1.msra.mxu0 0.0
  %2823 = vmatprep.subr.mxu0 0.0
  %2824 = vmatpush1.msra.mxu0 0.0
  %2825 = vmatprep.subr.mxu0 0.0
  %2826 = vmatpush1.msra.mxu0 0.0
  %2827 = vmatprep.subr.mxu0 0.0
  %2828 = vmatpush1.msra.mxu0 0.0
  %2829 = vmatprep.subr.mxu0 0.0
  %2830 = vmatpush1.msra.mxu0 0.0
  %2831 = vmatprep.subr.mxu0 0.0
  %2832 = vmatpush1.msra.mxu0 0.0
  %2833 = vmatprep.subr.mxu0 0.0
  %2834 = vmatpush1.msra.mxu0 0.0
  %2835 = vmatprep.subr.mxu0 0.0
  %2836 = vmatpush1.msra.mxu0 0.0
  %2837 = vmatprep.subr.mxu0 0.0
  %2838 = vmatpush1.msra.mxu0 0.0
  %2839 = vmatprep.subr.mxu0 0.0
  %2840 = vmatpush1.msra.mxu0 0.0
  %2841 = vmatprep.subr.mxu0 0.0
  %2842 = vmatpush1.msra.mxu0 0.0
  %2843 = vmatprep.subr.mxu0 0.0
  %2844 = vmatpush1.msra.mxu0 0.0
  %2845 = vmatprep.subr.mxu0 0.0
  %2846 = vmatpush1.msra.mxu0 0.0
  %2847 = vmatprep.subr.mxu0 0.0
  %2848 = vmatpush1.msra.mxu0 %v2812
  %2849 = vmatprep.subr.mxu0 0.0
  %2850 = vmatpush2.msra.mxu0 0.0
  %2851 = vmatprep.subr.mxu0 0.0
  %2852 = vmatpush2.msra.mxu0 0.0
  %2853 = vmatprep.subr.mxu0 0.0
  %2854 = vmatpush2.msra.mxu0 0.0
  %2855 = vmatprep.subr.mxu0 0.0
  %2856 = vmatpush2.msra.mxu0 0.0
  %2857 = vmatprep.subr.mxu0 0.0
  %2858 = vmatpush2.msra.mxu0 0.0
  %2859 = vmatprep.subr.mxu0 0.0
  %2860 = vmatpush2.msra.mxu0 0.0
  %2861 = vmatprep.subr.mxu0 0.0
  %2862 = vmatpush2.msra.mxu0 0.0
  %2863 = vmatprep.subr.mxu0 0.0
  %2864 = vmatpush2.msra.mxu0 0.0
  %2865 = vmatprep.subr.mxu0 0.0
  %2866 = vmatpush2.msra.mxu0 0.0
  %2867 = vmatprep.subr.mxu0 0.0
  %2868 = vmatpush2.msra.mxu0 0.0
  %2869 = vmatprep.subr.mxu0 0.0
  %2870 = vmatpush2.msra.mxu0 0.0
  %2871 = vmatprep.subr.mxu0 0.0
  %2872 = vmatpush2.msra.mxu0 0.0
  %2873 = vmatprep.subr.mxu0 0.0
  %2874 = vmatpush2.msra.mxu0 0.0
  %2875 = vmatprep.subr.mxu0 0.0
  %2876 = vmatpush2.msra.mxu0 0.0
  %2877 = vmatprep.subr.mxu0 0.0
  %2878 = vmatpush2.msra.mxu0 0.0
  %2879 = vmatprep.subr.mxu0 0.0
  %2880 = vmatpush2.msra.mxu0 0.0
  %2881 = vmatprep.mubr.f32.mxu0 0.0
  %2882 = vmatmul.mubr.f32.gmra.mxu0 %v2815
  %v2883 = vpop.f32.mrf.mxu0
  %v2884 = vadd.f32 0.0, %v2883
  %v2885 = vpop.f32.mrf.mxu0
  %2886 = vdwg.mxu0
  %2887 = vrot.lane.b32.xlu0 %v2213, 112
  %v2888 = vpop.permute.xlu0 %2887
  %2889 = vrot.lane.b32.xlu0 %v2213, 80
  %v2890 = vpop.permute.xlu0 %2889
  %v2891 = vsel %vm398, %v2888, 0
  %v2893 = vsel %vm398, %v2890, 0
  %2895 = vmatprep.subr.mxu0 0.0
  %2896 = vmatpush1.xpose.msra.mxu0 0.0
  %2897 = vmatprep.subr.mxu0 0.0
  %2898 = vmatpush1.xpose.msra.mxu0 0.0
  %2899 = vmatprep.subr.mxu0 0.0
  %2900 = vmatpush1.xpose.msra.mxu0 0.0
  %2901 = vmatprep.subr.mxu0 0.0
  %2902 = vmatpush1.xpose.msra.mxu0 0.0
  %2903 = vmatprep.subr.mxu0 0.0
  %2904 = vmatpush1.xpose.msra.mxu0 0.0
  %2905 = vmatprep.subr.mxu0 0.0
  %2906 = vmatpush1.xpose.msra.mxu0 0.0
  %2907 = vmatprep.subr.mxu0 0.0
  %2908 = vmatpush1.xpose.msra.mxu0 0.0
  %2909 = vmatprep.subr.mxu0 0.0
  %2910 = vmatpush1.xpose.msra.mxu0 0.0
  %2911 = vmatprep.subr.mxu0 0.0
  %2912 = vmatpush1.xpose.msra.mxu0 0.0
  %2913 = vmatprep.subr.mxu0 0.0
  %2914 = vmatpush1.xpose.msra.mxu0 0.0
  %2915 = vmatprep.subr.mxu0 0.0
  %2916 = vmatpush1.xpose.msra.mxu0 0.0
  %2917 = vmatprep.subr.mxu0 0.0
  %2918 = vmatpush1.xpose.msra.mxu0 0.0
  %2919 = vmatprep.subr.mxu0 0.0
  %2920 = vmatpush1.xpose.msra.mxu0 0.0
  %2921 = vmatprep.subr.mxu0 0.0
  %2922 = vmatpush1.xpose.msra.mxu0 0.0
  %2923 = vmatprep.subr.mxu0 0.0
  %2924 = vmatpush1.xpose.msra.mxu0 0.0
  %2925 = vmatprep.subr.mxu0 0.0
  %2926 = vmatpush1.xpose.msra.mxu0 %v2893
  %2927 = vmatprep.subr.mxu0 0.0
  %2928 = vmatpush2.xpose.msra.mxu0 0.0
  %2929 = vmatprep.subr.mxu0 0.0
  %2930 = vmatpush2.xpose.msra.mxu0 0.0
  %2931 = vmatprep.subr.mxu0 0.0
  %2932 = vmatpush2.xpose.msra.mxu0 0.0
  %2933 = vmatprep.subr.mxu0 0.0
  %2934 = vmatpush2.xpose.msra.mxu0 0.0
  %2935 = vmatprep.subr.mxu0 0.0
  %2936 = vmatpush2.xpose.msra.mxu0 0.0
  %2937 = vmatprep.subr.mxu0 0.0
  %2938 = vmatpush2.xpose.msra.mxu0 0.0
  %2939 = vmatprep.subr.mxu0 0.0
  %2940 = vmatpush2.xpose.msra.mxu0 0.0
  %2941 = vmatprep.subr.mxu0 0.0
  %2942 = vmatpush2.xpose.msra.mxu0 0.0
  %2943 = vmatprep.subr.mxu0 0.0
  %2944 = vmatpush2.xpose.msra.mxu0 0.0
  %2945 = vmatprep.subr.mxu0 0.0
  %2946 = vmatpush2.xpose.msra.mxu0 0.0
  %2947 = vmatprep.subr.mxu0 0.0
  %2948 = vmatpush2.xpose.msra.mxu0 0.0
  %2949 = vmatprep.subr.mxu0 0.0
  %2950 = vmatpush2.xpose.msra.mxu0 0.0
  %2951 = vmatprep.subr.mxu0 0.0
  %2952 = vmatpush2.xpose.msra.mxu0 0.0
  %2953 = vmatprep.subr.mxu0 0.0
  %2954 = vmatpush2.xpose.msra.mxu0 0.0
  %2955 = vmatprep.subr.mxu0 0.0
  %2956 = vmatpush2.xpose.msra.mxu0 0.0
  %2957 = vmatprep.subr.mxu0 0.0
  %2958 = vmatpush2.xpose.msra.mxu0 0.0
  %2959 = vmatprep.mubr.f32.mxu0 0.0
  %2960 = vmatmul.mubr.f32.gmra.mxu0 %v2891
  %v2961 = vpop.f32.mrf.mxu0
  %v2962 = vadd.f32 0.0, %v2961
  %v2963 = vpop.f32.mrf.mxu0
  %2964 = vdwg.mxu0
  %2965 = vrot.lane.b32.xlu0 %v2218, 112
  %v2966 = vpop.permute.xlu0 %2965
  %2967 = vrot.lane.b32.xlu0 %v2218, 80
  %v2968 = vpop.permute.xlu0 %2967
  %v2969 = vsel %vm398, %v2966, 0
  %v2971 = vsel %vm398, %v2968, 0
  %2973 = vmatprep.subr.mxu0 0.0
  %2974 = vmatpush1.xpose.msra.mxu0 0.0
  %2975 = vmatprep.subr.mxu0 0.0
  %2976 = vmatpush1.xpose.msra.mxu0 0.0
  %2977 = vmatprep.subr.mxu0 0.0
  %2978 = vmatpush1.xpose.msra.mxu0 0.0
  %2979 = vmatprep.subr.mxu0 0.0
  %2980 = vmatpush1.xpose.msra.mxu0 0.0
  %2981 = vmatprep.subr.mxu0 0.0
  %2982 = vmatpush1.xpose.msra.mxu0 0.0
  %2983 = vmatprep.subr.mxu0 0.0
  %2984 = vmatpush1.xpose.msra.mxu0 0.0
  %2985 = vmatprep.subr.mxu0 0.0
  %2986 = vmatpush1.xpose.msra.mxu0 0.0
  %2987 = vmatprep.subr.mxu0 0.0
  %2988 = vmatpush1.xpose.msra.mxu0 0.0
  %2989 = vmatprep.subr.mxu0 0.0
  %2990 = vmatpush1.xpose.msra.mxu0 0.0
  %2991 = vmatprep.subr.mxu0 0.0
  %2992 = vmatpush1.xpose.msra.mxu0 0.0
  %2993 = vmatprep.subr.mxu0 0.0
  %2994 = vmatpush1.xpose.msra.mxu0 0.0
  %2995 = vmatprep.subr.mxu0 0.0
  %2996 = vmatpush1.xpose.msra.mxu0 0.0
  %2997 = vmatprep.subr.mxu0 0.0
  %2998 = vmatpush1.xpose.msra.mxu0 0.0
  %2999 = vmatprep.subr.mxu0 0.0
  %3000 = vmatpush1.xpose.msra.mxu0 0.0
  %3001 = vmatprep.subr.mxu0 0.0
  %3002 = vmatpush1.xpose.msra.mxu0 0.0
  %3003 = vmatprep.subr.mxu0 0.0
  %3004 = vmatpush1.xpose.msra.mxu0 %v2971
  %3005 = vmatprep.subr.mxu0 0.0
  %3006 = vmatpush2.xpose.msra.mxu0 0.0
  %3007 = vmatprep.subr.mxu0 0.0
  %3008 = vmatpush2.xpose.msra.mxu0 0.0
  %3009 = vmatprep.subr.mxu0 0.0
  %3010 = vmatpush2.xpose.msra.mxu0 0.0
  %3011 = vmatprep.subr.mxu0 0.0
  %3012 = vmatpush2.xpose.msra.mxu0 0.0
  %3013 = vmatprep.subr.mxu0 0.0
  %3014 = vmatpush2.xpose.msra.mxu0 0.0
  %3015 = vmatprep.subr.mxu0 0.0
  %3016 = vmatpush2.xpose.msra.mxu0 0.0
  %3017 = vmatprep.subr.mxu0 0.0
  %3018 = vmatpush2.xpose.msra.mxu0 0.0
  %3019 = vmatprep.subr.mxu0 0.0
  %3020 = vmatpush2.xpose.msra.mxu0 0.0
  %3021 = vmatprep.subr.mxu0 0.0
  %3022 = vmatpush2.xpose.msra.mxu0 0.0
  %3023 = vmatprep.subr.mxu0 0.0
  %3024 = vmatpush2.xpose.msra.mxu0 0.0
  %3025 = vmatprep.subr.mxu0 0.0
  %3026 = vmatpush2.xpose.msra.mxu0 0.0
  %3027 = vmatprep.subr.mxu0 0.0
  %3028 = vmatpush2.xpose.msra.mxu0 0.0
  %3029 = vmatprep.subr.mxu0 0.0
  %3030 = vmatpush2.xpose.msra.mxu0 0.0
  %3031 = vmatprep.subr.mxu0 0.0
  %3032 = vmatpush2.xpose.msra.mxu0 0.0
  %3033 = vmatprep.subr.mxu0 0.0
  %3034 = vmatpush2.xpose.msra.mxu0 0.0
  %3035 = vmatprep.subr.mxu0 0.0
  %3036 = vmatpush2.xpose.msra.mxu0 0.0
  %3037 = vmatprep.mubr.f32.mxu0 0.0
  %3038 = vmatmul.mubr.f32.gmra.mxu0 %v2969
  %v3039 = vpop.f32.mrf.mxu0
  %v3040 = vadd.f32 0.0, %v3039
  %v3041 = vpop.f32.mrf.mxu0
  %3042 = vdwg.mxu0
  %v3043 = vmul.f32 %v2962, 0.35355338
  %v3044 = vmul.f32 %v3040, 0.35355338
  %v3045 = vadd.f32 %v3043, %v261
  %v3046 = vadd.f32 %v3044, %v262
  %v3047 = vsel %vm398, %v3045, -inf
  %3048 = vmax.xlane.f32.xlu0 %v3047
  %v3049 = vpop.xlane.xlu0 %3048
  %v3050 = vsel %vm398, %v3046, -inf
  %3051 = vmax.xlane.f32.xlu0 %v3050
  %v3052 = vpop.xlane.xlu0 %3051
  %v3053 = vsub.f32 %v3045, %v3049
  %v3054 = vsub.f32 %v3046, %v3052
  %v3055 = vmul.f32 %v3053, 1.442695
  %v3056 = vpow.pop %v3055
  %v3057 = vmul.f32 %v3054, 1.442695
  %v3058 = vpow.pop %v3057
  %v3059 = vsel %vm398, %v3056, 0.0
  %3060 = vadd.xlane.f32.xlu0 %v3059
  %v3061 = vpop.xlane.xlu0 %3060
  %v3062 = vsel %vm398, %v3058, 0.0
  %3063 = vadd.xlane.f32.xlu0 %v3062
  %v3064 = vpop.xlane.xlu0 %3063
  %v3065 = vrcp.pop %v3061
  %v3066 = vmul.f32 %v3056, %v3065
  %v3067 = vrcp.pop %v3064
  %v3068 = vmul.f32 %v3058, %v3067
  %3069 = vrot.lane.b32.xlu0 %v2213, 48
  %v3070 = vpop.permute.xlu0 %3069
  %v3073 = vsel %vm398, %v3066, 0
  %3075 = vmatprep.subr.mxu0 0.0
  %3076 = vmatpush1.msra.mxu0 0.0
  %3077 = vmatprep.subr.mxu0 0.0
  %3078 = vmatpush1.msra.mxu0 0.0
  %3079 = vmatprep.subr.mxu0 0.0
  %3080 = vmatpush1.msra.mxu0 0.0
  %3081 = vmatprep.subr.mxu0 0.0
  %3082 = vmatpush1.msra.mxu0 0.0
  %3083 = vmatprep.subr.mxu0 0.0
  %3084 = vmatpush1.msra.mxu0 0.0
  %3085 = vmatprep.subr.mxu0 0.0
  %3086 = vmatpush1.msra.mxu0 0.0
  %3087 = vmatprep.subr.mxu0 0.0
  %3088 = vmatpush1.msra.mxu0 0.0
  %3089 = vmatprep.subr.mxu0 0.0
  %3090 = vmatpush1.msra.mxu0 0.0
  %3091 = vmatprep.subr.mxu0 0.0
  %3092 = vmatpush1.msra.mxu0 0.0
  %3093 = vmatprep.subr.mxu0 0.0
  %3094 = vmatpush1.msra.mxu0 0.0
  %3095 = vmatprep.subr.mxu0 0.0
  %3096 = vmatpush1.msra.mxu0 0.0
  %3097 = vmatprep.subr.mxu0 0.0
  %3098 = vmatpush1.msra.mxu0 0.0
  %3099 = vmatprep.subr.mxu0 0.0
  %3100 = vmatpush1.msra.mxu0 0.0
  %3101 = vmatprep.subr.mxu0 0.0
  %3102 = vmatpush1.msra.mxu0 0.0
  %3103 = vmatprep.subr.mxu0 0.0
  %3104 = vmatpush1.msra.mxu0 0.0
  %3105 = vmatprep.subr.mxu0 0.0
  %3106 = vmatpush1.msra.mxu0 %v3070
  %3107 = vmatprep.subr.mxu0 0.0
  %3108 = vmatpush2.msra.mxu0 0.0
  %3109 = vmatprep.subr.mxu0 0.0
  %3110 = vmatpush2.msra.mxu0 0.0
  %3111 = vmatprep.subr.mxu0 0.0
  %3112 = vmatpush2.msra.mxu0 0.0
  %3113 = vmatprep.subr.mxu0 0.0
  %3114 = vmatpush2.msra.mxu0 0.0
  %3115 = vmatprep.subr.mxu0 0.0
  %3116 = vmatpush2.msra.mxu0 0.0
  %3117 = vmatprep.subr.mxu0 0.0
  %3118 = vmatpush2.msra.mxu0 0.0
  %3119 = vmatprep.subr.mxu0 0.0
  %3120 = vmatpush2.msra.mxu0 0.0
  %3121 = vmatprep.subr.mxu0 0.0
  %3122 = vmatpush2.msra.mxu0 0.0
  %3123 = vmatprep.subr.mxu0 0.0
  %3124 = vmatpush2.msra.mxu0 0.0
  %3125 = vmatprep.subr.mxu0 0.0
  %3126 = vmatpush2.msra.mxu0 0.0
  %3127 = vmatprep.subr.mxu0 0.0
  %3128 = vmatpush2.msra.mxu0 0.0
  %3129 = vmatprep.subr.mxu0 0.0
  %3130 = vmatpush2.msra.mxu0 0.0
  %3131 = vmatprep.subr.mxu0 0.0
  %3132 = vmatpush2.msra.mxu0 0.0
  %3133 = vmatprep.subr.mxu0 0.0
  %3134 = vmatpush2.msra.mxu0 0.0
  %3135 = vmatprep.subr.mxu0 0.0
  %3136 = vmatpush2.msra.mxu0 0.0
  %3137 = vmatprep.subr.mxu0 0.0
  %3138 = vmatpush2.msra.mxu0 0.0
  %3139 = vmatprep.mubr.f32.mxu0 0.0
  %3140 = vmatmul.mubr.f32.gmra.mxu0 %v3073
  %v3141 = vpop.f32.mrf.mxu0
  %v3142 = vadd.f32 0.0, %v3141
  %v3143 = vpop.f32.mrf.mxu0
  %3144 = vdwg.mxu0
  %3145 = vrot.lane.b32.xlu0 %v2218, 48
  %v3146 = vpop.permute.xlu0 %3145
  %v3149 = vsel %vm398, %v3068, 0
  %3151 = vmatprep.subr.mxu0 0.0
  %3152 = vmatpush1.msra.mxu0 0.0
  %3153 = vmatprep.subr.mxu0 0.0
  %3154 = vmatpush1.msra.mxu0 0.0
  %3155 = vmatprep.subr.mxu0 0.0
  %3156 = vmatpush1.msra.mxu0 0.0
  %3157 = vmatprep.subr.mxu0 0.0
  %3158 = vmatpush1.msra.mxu0 0.0
  %3159 = vmatprep.subr.mxu0 0.0
  %3160 = vmatpush1.msra.mxu0 0.0
  %3161 = vmatprep.subr.mxu0 0.0
  %3162 = vmatpush1.msra.mxu0 0.0
  %3163 = vmatprep.subr.mxu0 0.0
  %3164 = vmatpush1.msra.mxu0 0.0
  %3165 = vmatprep.subr.mxu0 0.0
  %3166 = vmatpush1.msra.mxu0 0.0
  %3167 = vmatprep.subr.mxu0 0.0
  %3168 = vmatpush1.msra.mxu0 0.0
  %3169 = vmatprep.subr.mxu0 0.0
  %3170 = vmatpush1.msra.mxu0 0.0
  %3171 = vmatprep.subr.mxu0 0.0
  %3172 = vmatpush1.msra.mxu0 0.0
  %3173 = vmatprep.subr.mxu0 0.0
  %3174 = vmatpush1.msra.mxu0 0.0
  %3175 = vmatprep.subr.mxu0 0.0
  %3176 = vmatpush1.msra.mxu0 0.0
  %3177 = vmatprep.subr.mxu0 0.0
  %3178 = vmatpush1.msra.mxu0 0.0
  %3179 = vmatprep.subr.mxu0 0.0
  %3180 = vmatpush1.msra.mxu0 0.0
  %3181 = vmatprep.subr.mxu0 0.0
  %3182 = vmatpush1.msra.mxu0 %v3146
  %3183 = vmatprep.subr.mxu0 0.0
  %3184 = vmatpush2.msra.mxu0 0.0
  %3185 = vmatprep.subr.mxu0 0.0
  %3186 = vmatpush2.msra.mxu0 0.0
  %3187 = vmatprep.subr.mxu0 0.0
  %3188 = vmatpush2.msra.mxu0 0.0
  %3189 = vmatprep.subr.mxu0 0.0
  %3190 = vmatpush2.msra.mxu0 0.0
  %3191 = vmatprep.subr.mxu0 0.0
  %3192 = vmatpush2.msra.mxu0 0.0
  %3193 = vmatprep.subr.mxu0 0.0
  %3194 = vmatpush2.msra.mxu0 0.0
  %3195 = vmatprep.subr.mxu0 0.0
  %3196 = vmatpush2.msra.mxu0 0.0
  %3197 = vmatprep.subr.mxu0 0.0
  %3198 = vmatpush2.msra.mxu0 0.0
  %3199 = vmatprep.subr.mxu0 0.0
  %3200 = vmatpush2.msra.mxu0 0.0
  %3201 = vmatprep.subr.mxu0 0.0
  %3202 = vmatpush2.msra.mxu0 0.0
  %3203 = vmatprep.subr.mxu0 0.0
  %3204 = vmatpush2.msra.mxu0 0.0
  %3205 = vmatprep.subr.mxu0 0.0
  %3206 = vmatpush2.msra.mxu0 0.0
  %3207 = vmatprep.subr.mxu0 0.0
  %3208 = vmatpush2.msra.mxu0 0.0
  %3209 = vmatprep.subr.mxu0 0.0
  %3210 = vmatpush2.msra.mxu0 0.0
  %3211 = vmatprep.subr.mxu0 0.0
  %3212 = vmatpush2.msra.mxu0 0.0
  %3213 = vmatprep.subr.mxu0 0.0
  %3214 = vmatpush2.msra.mxu0 0.0
  %3215 = vmatprep.mubr.f32.mxu0 0.0
  %3216 = vmatmul.mubr.f32.gmra.mxu0 %v3149
  %v3217 = vpop.f32.mrf.mxu0
  %v3218 = vadd.f32 0.0, %v3217
  %v3219 = vpop.f32.mrf.mxu0
  %3220 = vdwg.mxu0
  %3221 = vrot.lane.b32.xlu0 %v2213, 104
  %v3222 = vpop.permute.xlu0 %3221
  %3223 = vrot.lane.b32.xlu0 %v2213, 72
  %v3224 = vpop.permute.xlu0 %3223
  %v3225 = vsel %vm398, %v3222, 0
  %v3227 = vsel %vm398, %v3224, 0
  %3229 = vmatprep.subr.mxu0 0.0
  %3230 = vmatpush1.xpose.msra.mxu0 0.0
  %3231 = vmatprep.subr.mxu0 0.0
  %3232 = vmatpush1.xpose.msra.mxu0 0.0
  %3233 = vmatprep.subr.mxu0 0.0
  %3234 = vmatpush1.xpose.msra.mxu0 0.0
  %3235 = vmatprep.subr.mxu0 0.0
  %3236 = vmatpush1.xpose.msra.mxu0 0.0
  %3237 = vmatprep.subr.mxu0 0.0
  %3238 = vmatpush1.xpose.msra.mxu0 0.0
  %3239 = vmatprep.subr.mxu0 0.0
  %3240 = vmatpush1.xpose.msra.mxu0 0.0
  %3241 = vmatprep.subr.mxu0 0.0
  %3242 = vmatpush1.xpose.msra.mxu0 0.0
  %3243 = vmatprep.subr.mxu0 0.0
  %3244 = vmatpush1.xpose.msra.mxu0 0.0
  %3245 = vmatprep.subr.mxu0 0.0
  %3246 = vmatpush1.xpose.msra.mxu0 0.0
  %3247 = vmatprep.subr.mxu0 0.0
  %3248 = vmatpush1.xpose.msra.mxu0 0.0
  %3249 = vmatprep.subr.mxu0 0.0
  %3250 = vmatpush1.xpose.msra.mxu0 0.0
  %3251 = vmatprep.subr.mxu0 0.0
  %3252 = vmatpush1.xpose.msra.mxu0 0.0
  %3253 = vmatprep.subr.mxu0 0.0
  %3254 = vmatpush1.xpose.msra.mxu0 0.0
  %3255 = vmatprep.subr.mxu0 0.0
  %3256 = vmatpush1.xpose.msra.mxu0 0.0
  %3257 = vmatprep.subr.mxu0 0.0
  %3258 = vmatpush1.xpose.msra.mxu0 0.0
  %3259 = vmatprep.subr.mxu0 0.0
  %3260 = vmatpush1.xpose.msra.mxu0 %v3227
  %3261 = vmatprep.subr.mxu0 0.0
  %3262 = vmatpush2.xpose.msra.mxu0 0.0
  %3263 = vmatprep.subr.mxu0 0.0
  %3264 = vmatpush2.xpose.msra.mxu0 0.0
  %3265 = vmatprep.subr.mxu0 0.0
  %3266 = vmatpush2.xpose.msra.mxu0 0.0
  %3267 = vmatprep.subr.mxu0 0.0
  %3268 = vmatpush2.xpose.msra.mxu0 0.0
  %3269 = vmatprep.subr.mxu0 0.0
  %3270 = vmatpush2.xpose.msra.mxu0 0.0
  %3271 = vmatprep.subr.mxu0 0.0
  %3272 = vmatpush2.xpose.msra.mxu0 0.0
  %3273 = vmatprep.subr.mxu0 0.0
  %3274 = vmatpush2.xpose.msra.mxu0 0.0
  %3275 = vmatprep.subr.mxu0 0.0
  %3276 = vmatpush2.xpose.msra.mxu0 0.0
  %3277 = vmatprep.subr.mxu0 0.0
  %3278 = vmatpush2.xpose.msra.mxu0 0.0
  %3279 = vmatprep.subr.mxu0 0.0
  %3280 = vmatpush2.xpose.msra.mxu0 0.0
  %3281 = vmatprep.subr.mxu0 0.0
  %3282 = vmatpush2.xpose.msra.mxu0 0.0
  %3283 = vmatprep.subr.mxu0 0.0
  %3284 = vmatpush2.xpose.msra.mxu0 0.0
  %3285 = vmatprep.subr.mxu0 0.0
  %3286 = vmatpush2.xpose.msra.mxu0 0.0
  %3287 = vmatprep.subr.mxu0 0.0
  %3288 = vmatpush2.xpose.msra.mxu0 0.0
  %3289 = vmatprep.subr.mxu0 0.0
  %3290 = vmatpush2.xpose.msra.mxu0 0.0
  %3291 = vmatprep.subr.mxu0 0.0
  %3292 = vmatpush2.xpose.msra.mxu0 0.0
  %3293 = vmatprep.mubr.f32.mxu0 0.0
  %3294 = vmatmul.mubr.f32.gmra.mxu0 %v3225
  %v3295 = vpop.f32.mrf.mxu0
  %v3296 = vadd.f32 0.0, %v3295
  %v3297 = vpop.f32.mrf.mxu0
  %3298 = vdwg.mxu0
  %3299 = vrot.lane.b32.xlu0 %v2218, 104
  %v3300 = vpop.permute.xlu0 %3299
  %3301 = vrot.lane.b32.xlu0 %v2218, 72
  %v3302 = vpop.permute.xlu0 %3301
  %v3303 = vsel %vm398, %v3300, 0
  %v3305 = vsel %vm398, %v3302, 0
  %3307 = vmatprep.subr.mxu0 0.0
  %3308 = vmatpush1.xpose.msra.mxu0 0.0
  %3309 = vmatprep.subr.mxu0 0.0
  %3310 = vmatpush1.xpose.msra.mxu0 0.0
  %3311 = vmatprep.subr.mxu0 0.0
  %3312 = vmatpush1.xpose.msra.mxu0 0.0
  %3313 = vmatprep.subr.mxu0 0.0
  %3314 = vmatpush1.xpose.msra.mxu0 0.0
  %3315 = vmatprep.subr.mxu0 0.0
  %3316 = vmatpush1.xpose.msra.mxu0 0.0
  %3317 = vmatprep.subr.mxu0 0.0
  %3318 = vmatpush1.xpose.msra.mxu0 0.0
  %3319 = vmatprep.subr.mxu0 0.0
  %3320 = vmatpush1.xpose.msra.mxu0 0.0
  %3321 = vmatprep.subr.mxu0 0.0
  %3322 = vmatpush1.xpose.msra.mxu0 0.0
  %3323 = vmatprep.subr.mxu0 0.0
  %3324 = vmatpush1.xpose.msra.mxu0 0.0
  %3325 = vmatprep.subr.mxu0 0.0
  %3326 = vmatpush1.xpose.msra.mxu0 0.0
  %3327 = vmatprep.subr.mxu0 0.0
  %3328 = vmatpush1.xpose.msra.mxu0 0.0
  %3329 = vmatprep.subr.mxu0 0.0
  %3330 = vmatpush1.xpose.msra.mxu0 0.0
  %3331 = vmatprep.subr.mxu0 0.0
  %3332 = vmatpush1.xpose.msra.mxu0 0.0
  %3333 = vmatprep.subr.mxu0 0.0
  %3334 = vmatpush1.xpose.msra.mxu0 0.0
  %3335 = vmatprep.subr.mxu0 0.0
  %3336 = vmatpush1.xpose.msra.mxu0 0.0
  %3337 = vmatprep.subr.mxu0 0.0
  %3338 = vmatpush1.xpose.msra.mxu0 %v3305
  %3339 = vmatprep.subr.mxu0 0.0
  %3340 = vmatpush2.xpose.msra.mxu0 0.0
  %3341 = vmatprep.subr.mxu0 0.0
  %3342 = vmatpush2.xpose.msra.mxu0 0.0
  %3343 = vmatprep.subr.mxu0 0.0
  %3344 = vmatpush2.xpose.msra.mxu0 0.0
  %3345 = vmatprep.subr.mxu0 0.0
  %3346 = vmatpush2.xpose.msra.mxu0 0.0
  %3347 = vmatprep.subr.mxu0 0.0
  %3348 = vmatpush2.xpose.msra.mxu0 0.0
  %3349 = vmatprep.subr.mxu0 0.0
  %3350 = vmatpush2.xpose.msra.mxu0 0.0
  %3351 = vmatprep.subr.mxu0 0.0
  %3352 = vmatpush2.xpose.msra.mxu0 0.0
  %3353 = vmatprep.subr.mxu0 0.0
  %3354 = vmatpush2.xpose.msra.mxu0 0.0
  %3355 = vmatprep.subr.mxu0 0.0
  %3356 = vmatpush2.xpose.msra.mxu0 0.0
  %3357 = vmatprep.subr.mxu0 0.0
  %3358 = vmatpush2.xpose.msra.mxu0 0.0
  %3359 = vmatprep.subr.mxu0 0.0
  %3360 = vmatpush2.xpose.msra.mxu0 0.0
  %3361 = vmatprep.subr.mxu0 0.0
  %3362 = vmatpush2.xpose.msra.mxu0 0.0
  %3363 = vmatprep.subr.mxu0 0.0
  %3364 = vmatpush2.xpose.msra.mxu0 0.0
  %3365 = vmatprep.subr.mxu0 0.0
  %3366 = vmatpush2.xpose.msra.mxu0 0.0
  %3367 = vmatprep.subr.mxu0 0.0
  %3368 = vmatpush2.xpose.msra.mxu0 0.0
  %3369 = vmatprep.subr.mxu0 0.0
  %3370 = vmatpush2.xpose.msra.mxu0 0.0
  %3371 = vmatprep.mubr.f32.mxu0 0.0
  %3372 = vmatmul.mubr.f32.gmra.mxu0 %v3303
  %v3373 = vpop.f32.mrf.mxu0
  %v3374 = vadd.f32 0.0, %v3373
  %v3375 = vpop.f32.mrf.mxu0
  %3376 = vdwg.mxu0
  %v3377 = vmul.f32 %v3296, 0.35355338
  %v3378 = vmul.f32 %v3374, 0.35355338
  %v3379 = vadd.f32 %v3377, %v261
  %v3380 = vadd.f32 %v3378, %v262
  %v3381 = vsel %vm398, %v3379, -inf
  %3382 = vmax.xlane.f32.xlu0 %v3381
  %v3383 = vpop.xlane.xlu0 %3382
  %v3384 = vsel %vm398, %v3380, -inf
  %3385 = vmax.xlane.f32.xlu0 %v3384
  %v3386 = vpop.xlane.xlu0 %3385
  %v3387 = vsub.f32 %v3379, %v3383
  %v3388 = vsub.f32 %v3380, %v3386
  %v3389 = vmul.f32 %v3387, 1.442695
  %v3390 = vpow.pop %v3389
  %v3391 = vmul.f32 %v3388, 1.442695
  %v3392 = vpow.pop %v3391
  %v3393 = vsel %vm398, %v3390, 0.0
  %3394 = vadd.xlane.f32.xlu0 %v3393
  %v3395 = vpop.xlane.xlu0 %3394
  %v3396 = vsel %vm398, %v3392, 0.0
  %3397 = vadd.xlane.f32.xlu0 %v3396
  %v3398 = vpop.xlane.xlu0 %3397
  %v3399 = vrcp.pop %v3395
  %v3400 = vmul.f32 %v3390, %v3399
  %v3401 = vrcp.pop %v3398
  %v3402 = vmul.f32 %v3392, %v3401
  %3403 = vrot.lane.b32.xlu0 %v2213, 40
  %v3404 = vpop.permute.xlu0 %3403
  %v3407 = vsel %vm398, %v3400, 0
  %3409 = vmatprep.subr.mxu0 0.0
  %3410 = vmatpush1.msra.mxu0 0.0
  %3411 = vmatprep.subr.mxu0 0.0
  %3412 = vmatpush1.msra.mxu0 0.0
  %3413 = vmatprep.subr.mxu0 0.0
  %3414 = vmatpush1.msra.mxu0 0.0
  %3415 = vmatprep.subr.mxu0 0.0
  %3416 = vmatpush1.msra.mxu0 0.0
  %3417 = vmatprep.subr.mxu0 0.0
  %3418 = vmatpush1.msra.mxu0 0.0
  %3419 = vmatprep.subr.mxu0 0.0
  %3420 = vmatpush1.msra.mxu0 0.0
  %3421 = vmatprep.subr.mxu0 0.0
  %3422 = vmatpush1.msra.mxu0 0.0
  %3423 = vmatprep.subr.mxu0 0.0
  %3424 = vmatpush1.msra.mxu0 0.0
  %3425 = vmatprep.subr.mxu0 0.0
  %3426 = vmatpush1.msra.mxu0 0.0
  %3427 = vmatprep.subr.mxu0 0.0
  %3428 = vmatpush1.msra.mxu0 0.0
  %3429 = vmatprep.subr.mxu0 0.0
  %3430 = vmatpush1.msra.mxu0 0.0
  %3431 = vmatprep.subr.mxu0 0.0
  %3432 = vmatpush1.msra.mxu0 0.0
  %3433 = vmatprep.subr.mxu0 0.0
  %3434 = vmatpush1.msra.mxu0 0.0
  %3435 = vmatprep.subr.mxu0 0.0
  %3436 = vmatpush1.msra.mxu0 0.0
  %3437 = vmatprep.subr.mxu0 0.0
  %3438 = vmatpush1.msra.mxu0 0.0
  %3439 = vmatprep.subr.mxu0 0.0
  %3440 = vmatpush1.msra.mxu0 %v3404
  %3441 = vmatprep.subr.mxu0 0.0
  %3442 = vmatpush2.msra.mxu0 0.0
  %3443 = vmatprep.subr.mxu0 0.0
  %3444 = vmatpush2.msra.mxu0 0.0
  %3445 = vmatprep.subr.mxu0 0.0
  %3446 = vmatpush2.msra.mxu0 0.0
  %3447 = vmatprep.subr.mxu0 0.0
  %3448 = vmatpush2.msra.mxu0 0.0
  %3449 = vmatprep.subr.mxu0 0.0
  %3450 = vmatpush2.msra.mxu0 0.0
  %3451 = vmatprep.subr.mxu0 0.0
  %3452 = vmatpush2.msra.mxu0 0.0
  %3453 = vmatprep.subr.mxu0 0.0
  %3454 = vmatpush2.msra.mxu0 0.0
  %3455 = vmatprep.subr.mxu0 0.0
  %3456 = vmatpush2.msra.mxu0 0.0
  %3457 = vmatprep.subr.mxu0 0.0
  %3458 = vmatpush2.msra.mxu0 0.0
  %3459 = vmatprep.subr.mxu0 0.0
  %3460 = vmatpush2.msra.mxu0 0.0
  %3461 = vmatprep.subr.mxu0 0.0
  %3462 = vmatpush2.msra.mxu0 0.0
  %3463 = vmatprep.subr.mxu0 0.0
  %3464 = vmatpush2.msra.mxu0 0.0
  %3465 = vmatprep.subr.mxu0 0.0
  %3466 = vmatpush2.msra.mxu0 0.0
  %3467 = vmatprep.subr.mxu0 0.0
  %3468 = vmatpush2.msra.mxu0 0.0
  %3469 = vmatprep.subr.mxu0 0.0
  %3470 = vmatpush2.msra.mxu0 0.0
  %3471 = vmatprep.subr.mxu0 0.0
  %3472 = vmatpush2.msra.mxu0 0.0
  %3473 = vmatprep.mubr.f32.mxu0 0.0
  %3474 = vmatmul.mubr.f32.gmra.mxu0 %v3407
  %v3475 = vpop.f32.mrf.mxu0
  %v3476 = vadd.f32 0.0, %v3475
  %v3477 = vpop.f32.mrf.mxu0
  %3478 = vdwg.mxu0
  %3479 = vrot.lane.b32.xlu0 %v2218, 40
  %v3480 = vpop.permute.xlu0 %3479
  %v3483 = vsel %vm398, %v3402, 0
  %3485 = vmatprep.subr.mxu0 0.0
  %3486 = vmatpush1.msra.mxu0 0.0
  %3487 = vmatprep.subr.mxu0 0.0
  %3488 = vmatpush1.msra.mxu0 0.0
  %3489 = vmatprep.subr.mxu0 0.0
  %3490 = vmatpush1.msra.mxu0 0.0
  %3491 = vmatprep.subr.mxu0 0.0
  %3492 = vmatpush1.msra.mxu0 0.0
  %3493 = vmatprep.subr.mxu0 0.0
  %3494 = vmatpush1.msra.mxu0 0.0
  %3495 = vmatprep.subr.mxu0 0.0
  %3496 = vmatpush1.msra.mxu0 0.0
  %3497 = vmatprep.subr.mxu0 0.0
  %3498 = vmatpush1.msra.mxu0 0.0
  %3499 = vmatprep.subr.mxu0 0.0
  %3500 = vmatpush1.msra.mxu0 0.0
  %3501 = vmatprep.subr.mxu0 0.0
  %3502 = vmatpush1.msra.mxu0 0.0
  %3503 = vmatprep.subr.mxu0 0.0
  %3504 = vmatpush1.msra.mxu0 0.0
  %3505 = vmatprep.subr.mxu0 0.0
  %3506 = vmatpush1.msra.mxu0 0.0
  %3507 = vmatprep.subr.mxu0 0.0
  %3508 = vmatpush1.msra.mxu0 0.0
  %3509 = vmatprep.subr.mxu0 0.0
  %3510 = vmatpush1.msra.mxu0 0.0
  %3511 = vmatprep.subr.mxu0 0.0
  %3512 = vmatpush1.msra.mxu0 0.0
  %3513 = vmatprep.subr.mxu0 0.0
  %3514 = vmatpush1.msra.mxu0 0.0
  %3515 = vmatprep.subr.mxu0 0.0
  %3516 = vmatpush1.msra.mxu0 %v3480
  %3517 = vmatprep.subr.mxu0 0.0
  %3518 = vmatpush2.msra.mxu0 0.0
  %3519 = vmatprep.subr.mxu0 0.0
  %3520 = vmatpush2.msra.mxu0 0.0
  %3521 = vmatprep.subr.mxu0 0.0
  %3522 = vmatpush2.msra.mxu0 0.0
  %3523 = vmatprep.subr.mxu0 0.0
  %3524 = vmatpush2.msra.mxu0 0.0
  %3525 = vmatprep.subr.mxu0 0.0
  %3526 = vmatpush2.msra.mxu0 0.0
  %3527 = vmatprep.subr.mxu0 0.0
  %3528 = vmatpush2.msra.mxu0 0.0
  %3529 = vmatprep.subr.mxu0 0.0
  %3530 = vmatpush2.msra.mxu0 0.0
  %3531 = vmatprep.subr.mxu0 0.0
  %3532 = vmatpush2.msra.mxu0 0.0
  %3533 = vmatprep.subr.mxu0 0.0
  %3534 = vmatpush2.msra.mxu0 0.0
  %3535 = vmatprep.subr.mxu0 0.0
  %3536 = vmatpush2.msra.mxu0 0.0
  %3537 = vmatprep.subr.mxu0 0.0
  %3538 = vmatpush2.msra.mxu0 0.0
  %3539 = vmatprep.subr.mxu0 0.0
  %3540 = vmatpush2.msra.mxu0 0.0
  %3541 = vmatprep.subr.mxu0 0.0
  %3542 = vmatpush2.msra.mxu0 0.0
  %3543 = vmatprep.subr.mxu0 0.0
  %3544 = vmatpush2.msra.mxu0 0.0
  %3545 = vmatprep.subr.mxu0 0.0
  %3546 = vmatpush2.msra.mxu0 0.0
  %3547 = vmatprep.subr.mxu0 0.0
  %3548 = vmatpush2.msra.mxu0 0.0
  %3549 = vmatprep.mubr.f32.mxu0 0.0
  %3550 = vmatmul.mubr.f32.gmra.mxu0 %v3483
  %v3551 = vpop.f32.mrf.mxu0
  %v3552 = vadd.f32 0.0, %v3551
  %v3553 = vpop.f32.mrf.mxu0
  %3554 = vdwg.mxu0
  %3557 = vrot.lane.b32.xlu0 %v2808, 8
  %v3558 = vpop.permute.xlu0 %3557
  %3559 = vrot.lane.b32.xlu0 %v2884, 8
  %v3560 = vpop.permute.xlu0 %3559
  %3565 = vrot.lane.b32.xlu0 %v3142, 16
  %v3566 = vpop.permute.xlu0 %3565
  %3567 = vrot.lane.b32.xlu0 %v3218, 16
  %v3568 = vpop.permute.xlu0 %3567
  %3573 = vrot.lane.b32.xlu0 %v3476, 24
  %v3574 = vpop.permute.xlu0 %3573
  %3575 = vrot.lane.b32.xlu0 %v3552, 24
  %v3576 = vpop.permute.xlu0 %3575
  %v3579 = vsel %vm398, %v2474, %v3558
  %v3580 = vsel %vm398, %v2550, %v3560
  %v3581 = vsel %vm175, %v3579, %v3566
  %v3582 = vsel %vm175, %v3580, %v3568
  %v3583 = vsel %vm1758, %v3581, %v3574
  %v3584 = vsel %vm1758, %v3582, %v3576
  %v3585 = vld [vmem:[%s1 + $0x110] sm:$0xff]
  %v3586 = vld [vmem:[%s1 + $0x118] sm:$0xff]
  %v3587 = vld [vmem:[%s1 + $0x120] sm:$0xff]
  %v3588 = vld [vmem:[%s1 + $0x128] sm:$0xff]
  %v3589 = vld [vmem:[%s1 + $0x130] sm:$0x1]
  %v3590 = vlaneseq
  %v3591 = vshrl.u32 %v3590, 7
  %v3592 = vsub.s32 0, %v3591
  %v3593 = vrot.slane %v3589, %v3592
  %v3595 = vsel %vm265, %v3583, 0
  %v3598 = vsel %vm265, %v3584, 0
  %3600 = vmatprep.subr.mxu0 0.0
  %3601 = vmatpush1.msra.mxu0 0.0
  %3602 = vmatprep.subr.mxu0 0.0
  %3603 = vmatpush1.msra.mxu0 0.0
  %3604 = vmatprep.subr.mxu0 0.0
  %3605 = vmatpush1.msra.mxu0 0.0
  %3606 = vmatprep.subr.mxu0 0.0
  %3607 = vmatpush1.msra.mxu0 0.0
  %3608 = vmatprep.subr.mxu0 0.0
  %3609 = vmatpush1.msra.mxu0 0.0
  %3610 = vmatprep.subr.mxu0 0.0
  %3611 = vmatpush1.msra.mxu0 0.0
  %3612 = vmatprep.subr.mxu0 0.0
  %3613 = vmatpush1.msra.mxu0 0.0
  %3614 = vmatprep.subr.mxu0 0.0
  %3615 = vmatpush1.msra.mxu0 0.0
  %3616 = vmatprep.subr.mxu0 0.0
  %3617 = vmatpush1.msra.mxu0 0.0
  %3618 = vmatprep.subr.mxu0 0.0
  %3619 = vmatpush1.msra.mxu0 0.0
  %3620 = vmatprep.subr.mxu0 0.0
  %3621 = vmatpush1.msra.mxu0 0.0
  %3622 = vmatprep.subr.mxu0 0.0
  %3623 = vmatpush1.msra.mxu0 0.0
  %3624 = vmatprep.subr.mxu0 0.0
  %3625 = vmatpush1.msra.mxu0 %v3588
  %3626 = vmatprep.subr.mxu0 0.0
  %3627 = vmatpush1.msra.mxu0 %v3587
  %3628 = vmatprep.subr.mxu0 0.0
  %3629 = vmatpush1.msra.mxu0 %v3586
  %3630 = vmatprep.subr.mxu0 0.0
  %3631 = vmatpush1.msra.mxu0 %v3585
  %3632 = vmatprep.subr.mxu0 0.0
  %3633 = vmatpush2.msra.mxu0 0.0
  %3634 = vmatprep.subr.mxu0 0.0
  %3635 = vmatpush2.msra.mxu0 0.0
  %3636 = vmatprep.subr.mxu0 0.0
  %3637 = vmatpush2.msra.mxu0 0.0
  %3638 = vmatprep.subr.mxu0 0.0
  %3639 = vmatpush2.msra.mxu0 0.0
  %3640 = vmatprep.subr.mxu0 0.0
  %3641 = vmatpush2.msra.mxu0 0.0
  %3642 = vmatprep.subr.mxu0 0.0
  %3643 = vmatpush2.msra.mxu0 0.0
  %3644 = vmatprep.subr.mxu0 0.0
  %3645 = vmatpush2.msra.mxu0 0.0
  %3646 = vmatprep.subr.mxu0 0.0
  %3647 = vmatpush2.msra.mxu0 0.0
  %3648 = vmatprep.subr.mxu0 0.0
  %3649 = vmatpush2.msra.mxu0 0.0
  %3650 = vmatprep.subr.mxu0 0.0
  %3651 = vmatpush2.msra.mxu0 0.0
  %3652 = vmatprep.subr.mxu0 0.0
  %3653 = vmatpush2.msra.mxu0 0.0
  %3654 = vmatprep.subr.mxu0 0.0
  %3655 = vmatpush2.msra.mxu0 0.0
  %3656 = vmatprep.subr.mxu0 0.0
  %3657 = vmatpush2.msra.mxu0 0.0
  %3658 = vmatprep.subr.mxu0 0.0
  %3659 = vmatpush2.msra.mxu0 0.0
  %3660 = vmatprep.subr.mxu0 0.0
  %3661 = vmatpush2.msra.mxu0 0.0
  %3662 = vmatprep.subr.mxu0 0.0
  %3663 = vmatpush2.msra.mxu0 0.0
  %3664 = vmatprep.mubr.f32.mxu0 0.0
  %3665 = vmatmul.mubr.f32.gmra.mxu0 %v3595
  %v3666 = vpop.f32.mrf.mxu0
  %v3667 = vadd.f32 %v3593, %v3666
  %v3668 = vpop.f32.mrf.mxu0
  %3669 = vmatprep.mubr.f32.mxu0 0.0
  %3670 = vmatmul.mubr.f32.gmra.mxu0 %v3598
  %v3671 = vpop.f32.mrf.mxu0
  %v3672 = vadd.f32 %v3593, %v3671
  %v3673 = vpop.f32.mrf.mxu0
  %3674 = vdwg.mxu0
  %v3675 = vadd.f32 %v2089, %v3667
  %v3676 = vadd.f32 %v2090, %v3672
  %v3677 = vld [vmem:[%s1 + $0x138] sm:$0x1]
  %v3678 = vld [vmem:[%s1 + $0x140] sm:$0x1]
  %v3679 = vsel %vm265, %v3675, 0.0
  %3680 = vadd.xlane.f32.xlu0 %v3679
  %v3681 = vpop.xlane.xlu0 %3680
  %v3682 = vsel %vm265, %v3676, 0.0
  %3683 = vadd.xlane.f32.xlu0 %v3682
  %v3684 = vpop.xlane.xlu0 %3683
  %v3685 = vmul.f32 %v3681, %v272
  %v3686 = vmul.f32 %v3684, %v272
  %v3687 = vsub.f32 %v3675, %v3685
  %v3688 = vsub.f32 %v3676, %v3686
  %v3689 = vmul.f32 %v3687, %v3687
  %v3690 = vmul.f32 %v3688, %v3688
  %v3691 = vsel %vm265, %v3689, 0.0
  %3692 = vadd.xlane.f32.xlu0 %v3691
  %v3693 = vpop.xlane.xlu0 %3692
  %v3694 = vsel %vm265, %v3690, 0.0
  %3695 = vadd.xlane.f32.xlu0 %v3694
  %v3696 = vpop.xlane.xlu0 %3695
  %v3697 = vmul.f32 %v3693, %v272
  %v3698 = vmul.f32 %v3696, %v272
  %v3699 = vadd.f32 %v3697, 1e-05
  %v3700 = vadd.f32 %v3698, 1e-05
  %v3701 = vrsqrt.pop %v3699
  %v3702 = vrsqrt.pop %v3700
  %v3703 = vmul.f32 %v3687, %v3701
  %v3704 = vmul.f32 %v3688, %v3702
  %v3705 = vlaneseq
  %v3706 = vshrl.u32 %v3705, 7
  %v3707 = vsub.s32 0, %v3706
  %v3708 = vrot.slane %v3677, %v3707
  %v3709 = vmul.f32 %v3703, %v3708
  %v3710 = vmul.f32 %v3704, %v3708
  %v3711 = vlaneseq
  %v3712 = vshrl.u32 %v3711, 7
  %v3713 = vsub.s32 0, %v3712
  %v3714 = vrot.slane %v3678, %v3713
  %v3715 = vadd.f32 %v3709, %v3714
  %v3716 = vadd.f32 %v3710, %v3714
  %v3717 = vld [vmem:[%s2 + $0x78] sm:$0xff]
  %v3718 = vld [vmem:[%s2 + $0x80] sm:$0xff]
  %v3719 = vld [vmem:[%s2 + $0x88] sm:$0xff]
  %v3720 = vld [vmem:[%s2 + $0x90] sm:$0xff]
  %v3721 = vld [vmem:[%s2 + $0x98] sm:$0x1]
  %v3722 = vlaneseq
  %v3723 = vshrl.u32 %v3722, 7
  %v3724 = vsub.s32 0, %v3723
  %v3725 = vrot.slane %v3721, %v3724
  %v3727 = vsel %vm265, %v3715, 0
  %v3730 = vsel %vm265, %v3716, 0
  %3732 = vmatprep.subr.mxu0 0.0
  %3733 = vmatpush1.msra.mxu0 0.0
  %3734 = vmatprep.subr.mxu0 0.0
  %3735 = vmatpush1.msra.mxu0 0.0
  %3736 = vmatprep.subr.mxu0 0.0
  %3737 = vmatpush1.msra.mxu0 0.0
  %3738 = vmatprep.subr.mxu0 0.0
  %3739 = vmatpush1.msra.mxu0 0.0
  %3740 = vmatprep.subr.mxu0 0.0
  %3741 = vmatpush1.msra.mxu0 0.0
  %3742 = vmatprep.subr.mxu0 0.0
  %3743 = vmatpush1.msra.mxu0 0.0
  %3744 = vmatprep.subr.mxu0 0.0
  %3745 = vmatpush1.msra.mxu0 0.0
  %3746 = vmatprep.subr.mxu0 0.0
  %3747 = vmatpush1.msra.mxu0 0.0
  %3748 = vmatprep.subr.mxu0 0.0
  %3749 = vmatpush1.msra.mxu0 0.0
  %3750 = vmatprep.subr.mxu0 0.0
  %3751 = vmatpush1.msra.mxu0 0.0
  %3752 = vmatprep.subr.mxu0 0.0
  %3753 = vmatpush1.msra.mxu0 0.0
  %3754 = vmatprep.subr.mxu0 0.0
  %3755 = vmatpush1.msra.mxu0 0.0
  %3756 = vmatprep.subr.mxu0 0.0
  %3757 = vmatpush1.msra.mxu0 %v3720
  %3758 = vmatprep.subr.mxu0 0.0
  %3759 = vmatpush1.msra.mxu0 %v3719
  %3760 = vmatprep.subr.mxu0 0.0
  %3761 = vmatpush1.msra.mxu0 %v3718
  %3762 = vmatprep.subr.mxu0 0.0
  %3763 = vmatpush1.msra.mxu0 %v3717
  %3764 = vmatprep.subr.mxu0 0.0
  %3765 = vmatpush2.msra.mxu0 0.0
  %3766 = vmatprep.subr.mxu0 0.0
  %3767 = vmatpush2.msra.mxu0 0.0
  %3768 = vmatprep.subr.mxu0 0.0
  %3769 = vmatpush2.msra.mxu0 0.0
  %3770 = vmatprep.subr.mxu0 0.0
  %3771 = vmatpush2.msra.mxu0 0.0
  %3772 = vmatprep.subr.mxu0 0.0
  %3773 = vmatpush2.msra.mxu0 0.0
  %3774 = vmatprep.subr.mxu0 0.0
  %3775 = vmatpush2.msra.mxu0 0.0
  %3776 = vmatprep.subr.mxu0 0.0
  %3777 = vmatpush2.msra.mxu0 0.0
  %3778 = vmatprep.subr.mxu0 0.0
  %3779 = vmatpush2.msra.mxu0 0.0
  %3780 = vmatprep.subr.mxu0 0.0
  %3781 = vmatpush2.msra.mxu0 0.0
  %3782 = vmatprep.subr.mxu0 0.0
  %3783 = vmatpush2.msra.mxu0 0.0
  %3784 = vmatprep.subr.mxu0 0.0
  %3785 = vmatpush2.msra.mxu0 0.0
  %3786 = vmatprep.subr.mxu0 0.0
  %3787 = vmatpush2.msra.mxu0 0.0
  %3788 = vmatprep.subr.mxu0 0.0
  %3789 = vmatpush2.msra.mxu0 0.0
  %3790 = vmatprep.subr.mxu0 0.0
  %3791 = vmatpush2.msra.mxu0 0.0
  %3792 = vmatprep.subr.mxu0 0.0
  %3793 = vmatpush2.msra.mxu0 0.0
  %3794 = vmatprep.subr.mxu0 0.0
  %3795 = vmatpush2.msra.mxu0 0.0
  %3796 = vmatprep.mubr.f32.mxu0 0.0
  %3797 = vmatmul.mubr.f32.gmra.mxu0 %v3727
  %v3798 = vpop.f32.mrf.mxu0
  %v3799 = vadd.f32 %v3725, %v3798
  %v3800 = vpop.f32.mrf.mxu0
  %3801 = vmatprep.mubr.f32.mxu0 0.0
  %3802 = vmatmul.mubr.f32.gmra.mxu0 %v3730
  %v3803 = vpop.f32.mrf.mxu0
  %v3804 = vadd.f32 %v3725, %v3803
  %v3805 = vpop.f32.mrf.mxu0
  %3806 = vdwg.mxu0
  %v3807 = vmul.f32 %v3799, 0.5
  %v3808 = vmul.f32 %v3804, 0.5
  %v3809 = vmul.f32 %v3799, 0.70710677
  %v3810 = vmul.f32 %v3804, 0.70710677
  %v3811 = verf.f32.pop %v3809
  %v3812 = verf.f32.pop %v3810
  %v3813 = vadd.f32 %v3811, 1.0
  %v3814 = vadd.f32 %v3812, 1.0
  %v3815 = vmul.f32 %v3807, %v3813
  %v3816 = vmul.f32 %v3808, %v3814
  %v3817 = vld [vmem:[%s1 + $0x148] sm:$0xff]
  %v3818 = vld [vmem:[%s1 + $0x150] sm:$0xff]
  %v3819 = vld [vmem:[%s1 + $0x158] sm:$0xff]
  %v3820 = vld [vmem:[%s1 + $0x160] sm:$0xff]
  %v3821 = vld [vmem:[%s1 + $0x168] sm:$0xff]
  %v3822 = vld [vmem:[%s1 + $0x170] sm:$0xff]
  %v3823 = vld [vmem:[%s1 + $0x178] sm:$0xff]
  %v3824 = vld [vmem:[%s1 + $0x180] sm:$0xff]
  %v3825 = vld [vmem:[%s1 + $0x188] sm:$0xff]
  %v3826 = vld [vmem:[%s1 + $0x190] sm:$0xff]
  %v3827 = vld [vmem:[%s1 + $0x198] sm:$0xff]
  %v3828 = vld [vmem:[%s1 + $0x1a0] sm:$0xff]
  %v3829 = vld [vmem:[%s1 + $0x1a8] sm:$0xff]
  %v3830 = vld [vmem:[%s1 + $0x1b0] sm:$0xff]
  %v3831 = vld [vmem:[%s1 + $0x1b8] sm:$0xff]
  %v3832 = vld [vmem:[%s1 + $0x1c0] sm:$0xff]
  %v3833 = vld [vmem:[%s1 + $0x1c8] sm:$0x1]
  %v3834 = vlaneseq
  %v3835 = vshrl.u32 %v3834, 7
  %v3836 = vsub.s32 0, %v3835
  %v3837 = vrot.slane %v3833, %v3836
  %3838 = vmatprep.subr.mxu0 0.0
  %3839 = vmatpush1.msra.mxu0 %v3832
  %3840 = vmatprep.subr.mxu0 0.0
  %3841 = vmatpush1.msra.mxu0 %v3831
  %3842 = vmatprep.subr.mxu0 0.0
  %3843 = vmatpush1.msra.mxu0 %v3830
  %3844 = vmatprep.subr.mxu0 0.0
  %3845 = vmatpush1.msra.mxu0 %v3829
  %3846 = vmatprep.subr.mxu0 0.0
  %3847 = vmatpush1.msra.mxu0 %v3828
  %3848 = vmatprep.subr.mxu0 0.0
  %3849 = vmatpush1.msra.mxu0 %v3827
  %3850 = vmatprep.subr.mxu0 0.0
  %3851 = vmatpush1.msra.mxu0 %v3826
  %3852 = vmatprep.subr.mxu0 0.0
  %3853 = vmatpush1.msra.mxu0 %v3825
  %3854 = vmatprep.subr.mxu0 0.0
  %3855 = vmatpush1.msra.mxu0 %v3824
  %3856 = vmatprep.subr.mxu0 0.0
  %3857 = vmatpush1.msra.mxu0 %v3823
  %3858 = vmatprep.subr.mxu0 0.0
  %3859 = vmatpush1.msra.mxu0 %v3822
  %3860 = vmatprep.subr.mxu0 0.0
  %3861 = vmatpush1.msra.mxu0 %v3821
  %3862 = vmatprep.subr.mxu0 0.0
  %3863 = vmatpush1.msra.mxu0 %v3820
  %3864 = vmatprep.subr.mxu0 0.0
  %3865 = vmatpush1.msra.mxu0 %v3819
  %3866 = vmatprep.subr.mxu0 0.0
  %3867 = vmatpush1.msra.mxu0 %v3818
  %3868 = vmatprep.subr.mxu0 0.0
  %3869 = vmatpush1.msra.mxu0 %v3817
  %3870 = vmatprep.subr.mxu0 0.0
  %3871 = vmatpush2.msra.mxu0 0.0
  %3872 = vmatprep.subr.mxu0 0.0
  %3873 = vmatpush2.msra.mxu0 0.0
  %3874 = vmatprep.subr.mxu0 0.0
  %3875 = vmatpush2.msra.mxu0 0.0
  %3876 = vmatprep.subr.mxu0 0.0
  %3877 = vmatpush2.msra.mxu0 0.0
  %3878 = vmatprep.subr.mxu0 0.0
  %3879 = vmatpush2.msra.mxu0 0.0
  %3880 = vmatprep.subr.mxu0 0.0
  %3881 = vmatpush2.msra.mxu0 0.0
  %3882 = vmatprep.subr.mxu0 0.0
  %3883 = vmatpush2.msra.mxu0 0.0
  %3884 = vmatprep.subr.mxu0 0.0
  %3885 = vmatpush2.msra.mxu0 0.0
  %3886 = vmatprep.subr.mxu0 0.0
  %3887 = vmatpush2.msra.mxu0 0.0
  %3888 = vmatprep.subr.mxu0 0.0
  %3889 = vmatpush2.msra.mxu0 0.0
  %3890 = vmatprep.subr.mxu0 0.0
  %3891 = vmatpush2.msra.mxu0 0.0
  %3892 = vmatprep.subr.mxu0 0.0
  %3893 = vmatpush2.msra.mxu0 0.0
  %3894 = vmatprep.subr.mxu0 0.0
  %3895 = vmatpush2.msra.mxu0 0.0
  %3896 = vmatprep.subr.mxu0 0.0
  %3897 = vmatpush2.msra.mxu0 0.0
  %3898 = vmatprep.subr.mxu0 0.0
  %3899 = vmatpush2.msra.mxu0 0.0
  %3900 = vmatprep.subr.mxu0 0.0
  %3901 = vmatpush2.msra.mxu0 0.0
  %3902 = vmatprep.mubr.f32.mxu0 0.0
  %3903 = vmatmul.mubr.f32.gmra.mxu0 %v3815
  %v3904 = vpop.f32.mrf.mxu0
  %v3905 = vadd.f32 %v3837, %v3904
  %v3906 = vpop.f32.mrf.mxu0
  %3907 = vmatprep.mubr.f32.mxu0 0.0
  %3908 = vmatmul.mubr.f32.gmra.mxu0 %v3816
  %v3909 = vpop.f32.mrf.mxu0
  %v3910 = vadd.f32 %v3837, %v3909
  %v3911 = vpop.f32.mrf.mxu0
  %3912 = vdwg.mxu0
  %v3913 = vadd.f32 %v3675, %v3905
  %v3914 = vadd.f32 %v3676, %v3910
  %v3915 = vld [vmem:[%s1 + $0x1d0] sm:$0x1]
  %v3916 = vld [vmem:[%s1 + $0x1d8] sm:$0x1]
  %v3917 = vsel %vm265, %v3913, 0.0
  %3918 = vadd.xlane.f32.xlu0 %v3917
  %v3919 = vpop.xlane.xlu0 %3918
  %v3920 = vsel %vm265, %v3914, 0.0
  %3921 = vadd.xlane.f32.xlu0 %v3920
  %v3922 = vpop.xlane.xlu0 %3921
  %v3923 = vmul.f32 %v3919, %v272
  %v3924 = vmul.f32 %v3922, %v272
  %v3925 = vsub.f32 %v3913, %v3923
  %v3926 = vsub.f32 %v3914, %v3924
  %v3927 = vmul.f32 %v3925, %v3925
  %v3928 = vmul.f32 %v3926, %v3926
  %v3929 = vsel %vm265, %v3927, 0.0
  %3930 = vadd.xlane.f32.xlu0 %v3929
  %v3931 = vpop.xlane.xlu0 %3930
  %v3932 = vsel %vm265, %v3928, 0.0
  %3933 = vadd.xlane.f32.xlu0 %v3932
  %v3934 = vpop.xlane.xlu0 %3933
  %v3935 = vmul.f32 %v3931, %v272
  %v3936 = vmul.f32 %v3934, %v272
  %v3937 = vadd.f32 %v3935, 1e-05
  %v3938 = vadd.f32 %v3936, 1e-05
  %v3939 = vrsqrt.pop %v3937
  %v3940 = vrsqrt.pop %v3938
  %v3941 = vmul.f32 %v3925, %v3939
  %v3942 = vmul.f32 %v3926, %v3940
  %v3943 = vlaneseq
  %v3944 = vshrl.u32 %v3943, 7
  %v3945 = vsub.s32 0, %v3944
  %v3946 = vrot.slane %v3915, %v3945
  %v3947 = vmul.f32 %v3941, %v3946
  %v3948 = vmul.f32 %v3942, %v3946
  %v3949 = vlaneseq
  %v3950 = vshrl.u32 %v3949, 7
  %v3951 = vsub.s32 0, %v3950
  %v3952 = vrot.slane %v3916, %v3951
  %v3953 = vadd.f32 %v3947, %v3952
  %v3954 = vadd.f32 %v3948, %v3952
  %v3955 = vld [vmem:[%s1 + $0x1e0] sm:$0xff]
  %v3956 = vld [vmem:[%s1 + $0x1e8] sm:$0xff]
  %v3957 = vld [vmem:[%s1 + $0x1f0] sm:$0xff]
  %v3958 = vld [vmem:[%s1 + $0x1f8] sm:$0xff]
  %v3960 = vsel %vm265, %v3953, 0
  %v3963 = vsel %vm265, %v3954, 0
  %3965 = vmatprep.subr.mxu0 0.0
  %3966 = vmatpush1.msra.mxu0 0.0
  %3967 = vmatprep.subr.mxu0 0.0
  %3968 = vmatpush1.msra.mxu0 0.0
  %3969 = vmatprep.subr.mxu0 0.0
  %3970 = vmatpush1.msra.mxu0 0.0
  %3971 = vmatprep.subr.mxu0 0.0
  %3972 = vmatpush1.msra.mxu0 0.0
  %3973 = vmatprep.subr.mxu0 0.0
  %3974 = vmatpush1.msra.mxu0 0.0
  %3975 = vmatprep.subr.mxu0 0.0
  %3976 = vmatpush1.msra.mxu0 0.0
  %3977 = vmatprep.subr.mxu0 0.0
  %3978 = vmatpush1.msra.mxu0 0.0
  %3979 = vmatprep.subr.mxu0 0.0
  %3980 = vmatpush1.msra.mxu0 0.0
  %3981 = vmatprep.subr.mxu0 0.0
  %3982 = vmatpush1.msra.mxu0 0.0
  %3983 = vmatprep.subr.mxu0 0.0
  %3984 = vmatpush1.msra.mxu0 0.0
  %3985 = vmatprep.subr.mxu0 0.0
  %3986 = vmatpush1.msra.mxu0 0.0
  %3987 = vmatprep.subr.mxu0 0.0
  %3988 = vmatpush1.msra.mxu0 0.0
  %3989 = vmatprep.subr.mxu0 0.0
  %3990 = vmatpush1.msra.mxu0 %v3958
  %3991 = vmatprep.subr.mxu0 0.0
  %3992 = vmatpush1.msra.mxu0 %v3957
  %3993 = vmatprep.subr.mxu0 0.0
  %3994 = vmatpush1.msra.mxu0 %v3956
  %3995 = vmatprep.subr.mxu0 0.0
  %3996 = vmatpush1.msra.mxu0 %v3955
  %3997 = vmatprep.subr.mxu0 0.0
  %3998 = vmatpush2.msra.mxu0 0.0
  %3999 = vmatprep.subr.mxu0 0.0
  %4000 = vmatpush2.msra.mxu0 0.0
  %4001 = vmatprep.subr.mxu0 0.0
  %4002 = vmatpush2.msra.mxu0 0.0
  %4003 = vmatprep.subr.mxu0 0.0
  %4004 = vmatpush2.msra.mxu0 0.0
  %4005 = vmatprep.subr.mxu0 0.0
  %4006 = vmatpush2.msra.mxu0 0.0
  %4007 = vmatprep.subr.mxu0 0.0
  %4008 = vmatpush2.msra.mxu0 0.0
  %4009 = vmatprep.subr.mxu0 0.0
  %4010 = vmatpush2.msra.mxu0 0.0
  %4011 = vmatprep.subr.mxu0 0.0
  %4012 = vmatpush2.msra.mxu0 0.0
  %4013 = vmatprep.subr.mxu0 0.0
  %4014 = vmatpush2.msra.mxu0 0.0
  %4015 = vmatprep.subr.mxu0 0.0
  %4016 = vmatpush2.msra.mxu0 0.0
  %4017 = vmatprep.subr.mxu0 0.0
  %4018 = vmatpush2.msra.mxu0 0.0
  %4019 = vmatprep.subr.mxu0 0.0
  %4020 = vmatpush2.msra.mxu0 0.0
  %4021 = vmatprep.subr.mxu0 0.0
  %4022 = vmatpush2.msra.mxu0 0.0
  %4023 = vmatprep.subr.mxu0 0.0
  %4024 = vmatpush2.msra.mxu0 0.0
  %4025 = vmatprep.subr.mxu0 0.0
  %4026 = vmatpush2.msra.mxu0 0.0
  %4027 = vmatprep.subr.mxu0 0.0
  %4028 = vmatpush2.msra.mxu0 0.0
  %4029 = vmatprep.mubr.f32.mxu0 0.0
  %4030 = vmatmul.mubr.f32.gmra.mxu0 %v3960
  %v4031 = vpop.f32.mrf.mxu0
  %v4032 = vadd.f32 0.0, %v4031
  %v4033 = vpop.f32.mrf.mxu0
  %4034 = vmatprep.mubr.f32.mxu0 0.0
  %4035 = vmatmul.mubr.f32.gmra.mxu0 %v3963
  %v4036 = vpop.f32.mrf.mxu0
  %v4037 = vadd.f32 0.0, %v4036
  %v4038 = vpop.f32.mrf.mxu0
  %4039 = vdwg.mxu0
  %4040 = vrot.lane.b32.xlu0 %v2398, 32
  %v4041 = vpop.permute.xlu0 %4040
  %4042 = vrot.lane.b32.xlu0 %v2400, 32
  %v4043 = vpop.permute.xlu0 %4042
  %v4046 = vsel %vm265, %v4032, %v4041
  %v4047 = vsel %vm265, %v4037, %v4043
  %vm4048 = vcmask 326656
  %v4049 = vsel %vm4048, %v4046, 0.0
  %v4050 = vsel %vm4048, %v4047, 0.0
  %4051 = vst [vmem:[%s3] sm:$0xff] %v4049
  %4052 = vst [vmem:[%s3 + $0x8] sm:$0xff] %v4050
  // Predicated region
  $region14: #{transformer_decoder_forward.1} parent=0 // pred_check
    _
  $region15: #{transformer_decoder_forward.1} parent=0 // pred_check_branch
    %4054 = sbr.rel (0) target = $region17
  $region16: #{transformer_decoder_forward.1} parent=0 // pred_region
    _
  $region17: #{transformer_decoder_forward.1} parent=0 // pred_fallthru
    _
  // Predicated region
  $region18: #{transformer_decoder_forward.1} parent=0 // pred_check
    _
  $region19: #{transformer_decoder_forward.1} parent=0 // pred_check_branch
    %4056 = sbr.rel (0) target = $region21
  $region20: #{transformer_decoder_forward.1} parent=0 // pred_region
    _
  $region21: #{transformer_decoder_forward.1} parent=0 // pred_fallthru
    _

</llo_original>
